<compile_context>
chip_gen: v5e
topology: v5e:2x2
jax: 0.10.0
libtpu: 0.0.40
codegen_flags: <defaults>
</compile_context>

<pallas_src>
import math
import functools

import jax
import jax.numpy as jnp
import numpy as np
from jax.experimental import pallas as pl
from jax.experimental.pallas import tpu as pltpu

# ---------------- model hyper-parameters (small, consistent with the module) ----
B, S_TGT, S_SRC = 2, 8, 8
D_MODEL, N_HEADS, D_FF, N_LAYERS = 32, 4, 64, 2
D_HEAD = D_MODEL // N_HEADS
EPS = 1e-6
NEG_INF = -1e9


# =============================== fused Pallas kernel =============================
def decoder_kernel(
    # activations / masks
    x_ref, mem_ref, tadd_ref, sadd_ref,
    # self-attention (per-layer stacked)
    wqkv_self_ref, bqkv_self_ref, wo_self_ref, bo_self_ref,
    # cross-attention (per-layer stacked)
    wq_src_ref, bq_src_ref, wkv_src_ref, bkv_src_ref, wo_src_ref, bo_src_ref,
    # feed-forward (per-layer stacked)
    w1_ref, b1_ref, w2_ref, b2_ref,
    # layernorms: [L, 3, D] (sublayer 0/1/2), final norm [1, D]
    ln_a_ref, ln_b_ref, norm_a_ref, norm_b_ref,
    # output
    o_ref,
):
    x = x_ref[...]        # [B*S_TGT, D]
    mem = mem_ref[...]    # [B*S_SRC, D]
    tadd = tadd_ref[...]  # [B, S_TGT, S_TGT] additive mask (0 keep / -1e9 mask)
    sadd = sadd_ref[...]  # [B, S_TGT, S_SRC]

    n_layers = wqkv_self_ref.shape[0]
    d = x.shape[-1]
    dh = d // N_HEADS
    scale = 1.0 / math.sqrt(dh)

    def layer_norm(v, a, b_):
        # torch LayerNorm-as-written: unbiased std (N-1), a*(x-mean)/(std+eps)+b
        mean = jnp.mean(v, axis=-1, keepdims=True)
        vc = v - mean
        var = jnp.sum(vc * vc, axis=-1, keepdims=True) / (v.shape[-1] - 1)
        return a * vc / (jnp.sqrt(var) + EPS) + b_

    def mha(q2d, k2d, v2d, add_mask, wo):
        # q2d:[B*sq, D], k2d/v2d:[B*sk, D], add_mask:[B, sq, sk], wo:[D, D]
        # Per-head attention with batched (over B) einsums; output projection is
        # accumulated per head (equivalent to concat-heads @ wo, no concat/transpose).
        b_, sq, sk = add_mask.shape
        out = None
        for h in range(N_HEADS):
            lo = h * dh
            qh = q2d[:, lo:lo + dh].reshape(b_, sq, dh)
            kh = k2d[:, lo:lo + dh].reshape(b_, sk, dh)
            vh = v2d[:, lo:lo + dh].reshape(b_, sk, dh)
            s = jnp.einsum("bqd,bkd->bqk", qh, kh,
                           preferred_element_type=jnp.float32) * scale
            s = s + add_mask
            s = s - jnp.max(s, axis=-1, keepdims=True)
            p = jnp.exp(s)
            p = p * pl.reciprocal(jnp.sum(p, axis=-1, keepdims=True), approx=True)
            oh = jnp.einsum("bqk,bkd->bqd", p, vh,
                            preferred_element_type=jnp.float32).reshape(b_ * sq, dh)
            proj = jnp.dot(oh, wo[lo:lo + dh, :], preferred_element_type=jnp.float32)
            out = proj if out is None else out + proj
        return out

    # TODO(synk): dropout in the original sublayers is identity in eval mode.
    for l in range(n_layers):
        lns_a = ln_a_ref[l]   # [3, D]
        lns_b = ln_b_ref[l]   # [3, D]

        # ---- sublayer 0: x + self_attn(norm(x)) with tgt_mask -------------------
        n0 = layer_norm(x, lns_a[0:1, :], lns_b[0:1, :])
        qkv = jnp.dot(n0, wqkv_self_ref[l],
                      preferred_element_type=jnp.float32) + bqkv_self_ref[l]
        q = qkv[:, 0:d]
        k = qkv[:, d:2 * d]
        v = qkv[:, 2 * d:3 * d]
        attn = mha(q, k, v, tadd, wo_self_ref[l]) + bo_self_ref[l]
        x = x + attn

        # ---- sublayer 1: x + src_attn(norm(x), memory, memory) with src_mask ----
        n1 = layer_norm(x, lns_a[1:2, :], lns_b[1:2, :])
        q = jnp.dot(n1, wq_src_ref[l],
                    preferred_element_type=jnp.float32) + bq_src_ref[l]
        kv = jnp.dot(mem, wkv_src_ref[l],
                     preferred_element_type=jnp.float32) + bkv_src_ref[l]
        k = kv[:, 0:d]
        v = kv[:, d:2 * d]
        attn = mha(q, k, v, sadd, wo_src_ref[l]) + bo_src_ref[l]
        x = x + attn

        # ---- sublayer 2: x + ffn(norm(x)) ---------------------------------------
        n2 = layer_norm(x, lns_a[2:3, :], lns_b[2:3, :])
        h = jnp.dot(n2, w1_ref[l], preferred_element_type=jnp.float32) + b1_ref[l]
        h = jnp.maximum(h, 0.0)
        x = x + jnp.dot(h, w2_ref[l], preferred_element_type=jnp.float32) + b2_ref[l]

    # ---- final LayerNorm --------------------------------------------------------
    o_ref[...] = layer_norm(x, norm_a_ref[...], norm_b_ref[...])


# =============================== wrapper =========================================
def _additive_mask(mask, b, sq, sk):
    m = jnp.broadcast_to(mask, (b, 1, sq, sk)).reshape(b, sq, sk)
    return jnp.where(m > 0, 0.0, NEG_INF).astype(jnp.float32)


@jax.jit
def decoder_forward(x, memory, src_mask, tgt_mask, st):
    b, s_t, d = x.shape
    s_s = memory.shape[1]

    x2d = x.reshape(b * s_t, d).astype(jnp.float32)
    mem2d = memory.reshape(b * s_s, d).astype(jnp.float32)
    tadd = _additive_mask(tgt_mask, b, s_t, s_t)
    sadd = _additive_mask(src_mask, b, s_t, s_s)

    vmem_spec = pl.BlockSpec(memory_space=pltpu.MemorySpace.VMEM)
    n_inputs = 22

    out2d = pl.pallas_call(
        decoder_kernel,
        out_shape=jax.ShapeDtypeStruct((b * s_t, d), jnp.float32),
        in_specs=[vmem_spec] * n_inputs,
        out_specs=vmem_spec,
        compiler_params=pltpu.CompilerParams(vmem_limit_bytes=32 * 1024 * 1024),
    )(
        x2d, mem2d, tadd, sadd,
        st["wqkv_self"], st["bqkv_self"], st["wo_self"], st["bo_self"],
        st["wq_src"], st["bq_src"], st["wkv_src"], st["bkv_src"],
        st["wo_src"], st["bo_src"],
        st["w1"], st["b1"], st["w2"], st["b2"],
        st["ln_a"], st["ln_b"], st["norm_a"], st["norm_b"],
    )
    return out2d.reshape(b, s_t, d)


# =============================== parameter init ==================================
def init_params(key):
    def dense(k, fan_in, fan_out):
        return 0.05 * jax.random.normal(k, (fan_in, fan_out), dtype=jnp.float32)

    def attn_params(k):
        ks = jax.random.split(k, 4)
        return {
            "wq": dense(ks[0], D_MODEL, D_MODEL), "bq": jnp.zeros((D_MODEL,), jnp.float32),
            "wk": dense(ks[1], D_MODEL, D_MODEL), "bk": jnp.zeros((D_MODEL,), jnp.float32),
            "wv": dense(ks[2], D_MODEL, D_MODEL), "bv": jnp.zeros((D_MODEL,), jnp.float32),
            "wo": dense(ks[3], D_MODEL, D_MODEL), "bo": jnp.zeros((D_MODEL,), jnp.float32),
        }

    layers = []
    for lk in jax.random.split(key, N_LAYERS):
        ks = jax.random.split(lk, 4)
        layers.append({
            "self_attn": attn_params(ks[0]),
            "src_attn": attn_params(ks[1]),
            "ffn": {
                "w1": dense(ks[2], D_MODEL, D_FF), "b1": jnp.zeros((D_FF,), jnp.float32),
                "w2": dense(ks[3], D_FF, D_MODEL), "b2": jnp.zeros((D_MODEL,), jnp.float32),
            },
            "ln0_a": jnp.ones((D_MODEL,), jnp.float32), "ln0_b": jnp.zeros((D_MODEL,), jnp.float32),
            "ln1_a": jnp.ones((D_MODEL,), jnp.float32), "ln1_b": jnp.zeros((D_MODEL,), jnp.float32),
            "ln2_a": jnp.ones((D_MODEL,), jnp.float32), "ln2_b": jnp.zeros((D_MODEL,), jnp.float32),
        })
    return {
        "layers": layers,
        "norm_a": jnp.ones((D_MODEL,), jnp.float32),
        "norm_b": jnp.zeros((D_MODEL,), jnp.float32),
    }


def stack_params(params):
    """Stack per-layer params along a leading layer axis (kernel-friendly layout)."""
    layers = params["layers"]

    def stk(fn):
        return jnp.stack([fn(lp) for lp in layers], axis=0)

    return {
        "wqkv_self": stk(lambda lp: jnp.concatenate(
            [lp["self_attn"]["wq"], lp["self_attn"]["wk"], lp["self_attn"]["wv"]], axis=1)),
        "bqkv_self": stk(lambda lp: jnp.concatenate(
            [lp["self_attn"]["bq"], lp["self_attn"]["bk"], lp["self_attn"]["bv"]], axis=0)[None, :]),
        "wo_self": stk(lambda lp: lp["self_attn"]["wo"]),
        "bo_self": stk(lambda lp: lp["self_attn"]["bo"][None, :]),
        "wq_src": stk(lambda lp: lp["src_attn"]["wq"]),
        "bq_src": stk(lambda lp: lp["src_attn"]["bq"][None, :]),
        "wkv_src": stk(lambda lp: jnp.concatenate(
            [lp["src_attn"]["wk"], lp["src_attn"]["wv"]], axis=1)),
        "bkv_src": stk(lambda lp: jnp.concatenate(
            [lp["src_attn"]["bk"], lp["src_attn"]["bv"]], axis=0)[None, :]),
        "wo_src": stk(lambda lp: lp["src_attn"]["wo"]),
        "bo_src": stk(lambda lp: lp["src_attn"]["bo"][None, :]),
        "w1": stk(lambda lp: lp["ffn"]["w1"]),
        "b1": stk(lambda lp: lp["ffn"]["b1"][None, :]),
        "w2": stk(lambda lp: lp["ffn"]["w2"]),
        "b2": stk(lambda lp: lp["ffn"]["b2"][None, :]),
        "ln_a": stk(lambda lp: jnp.stack([lp["ln0_a"], lp["ln1_a"], lp["ln2_a"]], axis=0)),
        "ln_b": stk(lambda lp: jnp.stack([lp["ln0_b"], lp["ln1_b"], lp["ln2_b"]], axis=0)),
        "norm_a": params["norm_a"][None, :],
        "norm_b": params["norm_b"][None, :],
    }


# =============================== pure-JAX reference ==============================
def _ref_layernorm(x, a, b):
    mean = x.mean(-1, keepdims=True)
    std = jnp.sqrt(((x - mean) ** 2).sum(-1, keepdims=True) / (x.shape[-1] - 1))
    return a * (x - mean) / (std + EPS) + b


def _ref_mha(xq, xkv, mask, p):
    hi = jax.lax.Precision.HIGHEST
    bq, sq, _ = xq.shape
    sk = xkv.shape[1]
    q = jnp.einsum("bsd,de->bse", xq, p["wq"], precision=hi) + p["bq"]
    k = jnp.einsum("bsd,de->bse", xkv, p["wk"], precision=hi) + p["bk"]
    v = jnp.einsum("bsd,de->bse", xkv, p["wv"], precision=hi) + p["bv"]
    q = q.reshape(bq, sq, N_HEADS, D_HEAD).transpose(0, 2, 1, 3)
    k = k.reshape(bq, sk, N_HEADS, D_HEAD).transpose(0, 2, 1, 3)
    v = v.reshape(bq, sk, N_HEADS, D_HEAD).transpose(0, 2, 1, 3)
    s = jnp.einsum("bhqd,bhkd->bhqk", q, k, precision=hi) / math.sqrt(D_HEAD)
    s = jnp.where(mask > 0, s, NEG_INF)
    p_attn = jax.nn.softmax(s, axis=-1)
    o = jnp.einsum("bhqk,bhkd->bhqd", p_attn, v, precision=hi)
    o = o.transpose(0, 2, 1, 3).reshape(bq, sq, D_MODEL)
    return jnp.einsum("bsd,de->bse", o, p["wo"], precision=hi) + p["bo"]


def _ref_decoder(x, memory, src_mask, tgt_mask, params):
    hi = jax.lax.Precision.HIGHEST
    for lp in params["layers"]:
        n0 = _ref_layernorm(x, lp["ln0_a"], lp["ln0_b"])
        x = x + _ref_mha(n0, n0, tgt_mask, lp["self_attn"])
        n1 = _ref_layernorm(x, lp["ln1_a"], lp["ln1_b"])
        x = x + _ref_mha(n1, memory, src_mask, lp["src_attn"])
        n2 = _ref_layernorm(x, lp["ln2_a"], lp["ln2_b"])
        h = jnp.maximum(
            jnp.einsum("bsd,df->bsf", n2, lp["ffn"]["w1"], precision=hi) + lp["ffn"]["b1"], 0.0)
        x = x + jnp.einsum("bsf,fd->bsd", h, lp["ffn"]["w2"], precision=hi) + lp["ffn"]["b2"]
    return _ref_layernorm(x, params["norm_a"], params["norm_b"])


# =================================== main ========================================
if __name__ == "__main__":
    key = jax.random.PRNGKey(0)
    k_x, k_mem, k_params = jax.random.split(key, 3)

    x = jax.random.normal(k_x, (B, S_TGT, D_MODEL), dtype=jnp.float32)
    memory = jax.random.normal(k_mem, (B, S_SRC, D_MODEL), dtype=jnp.float32)
    params = init_params(k_params)
    stacked = stack_params(params)

    # src_mask: all source positions visible; tgt_mask: causal (subsequent mask)
    src_mask = jnp.ones((B, 1, 1, S_SRC), dtype=jnp.float32)
    tgt_mask = jnp.tril(jnp.ones((S_TGT, S_TGT), dtype=jnp.float32))[None, None, :, :]
    tgt_mask = jnp.broadcast_to(tgt_mask, (B, 1, S_TGT, S_TGT))
    src_mask_b = jnp.broadcast_to(src_mask, (B, 1, S_TGT, S_SRC))

    out = decoder_forward(x, memory, src_mask_b, tgt_mask, stacked)
    out = jax.block_until_ready(out)

    ref = _ref_decoder(x, memory, src_mask_b, tgt_mask, params)
    assert out.shape == (B, S_TGT, D_MODEL)
    assert bool(jnp.all(jnp.isfinite(out)))
    np.testing.assert_allclose(np.asarray(out), np.asarray(ref), rtol=1e-2, atol=1e-2)

    print("KERNEL_OK")
</pallas_src>

<mosaic_0001>
module attributes {stable_mosaic.version = 11 : i64} {
  func.func @decoder_kernel(%arg0: memref<16x32xf32, #tpu.memory_space<vmem>>, %arg1: memref<16x32xf32, #tpu.memory_space<vmem>>, %arg2: memref<2x8x8xf32, #tpu.memory_space<vmem>>, %arg3: memref<2x8x8xf32, #tpu.memory_space<vmem>>, %arg4: memref<2x32x96xf32, #tpu.memory_space<vmem>>, %arg5: memref<2x1x96xf32, #tpu.memory_space<vmem>>, %arg6: memref<2x32x32xf32, #tpu.memory_space<vmem>>, %arg7: memref<2x1x32xf32, #tpu.memory_space<vmem>>, %arg8: memref<2x32x32xf32, #tpu.memory_space<vmem>>, %arg9: memref<2x1x32xf32, #tpu.memory_space<vmem>>, %arg10: memref<2x32x64xf32, #tpu.memory_space<vmem>>, %arg11: memref<2x1x64xf32, #tpu.memory_space<vmem>>, %arg12: memref<2x32x32xf32, #tpu.memory_space<vmem>>, %arg13: memref<2x1x32xf32, #tpu.memory_space<vmem>>, %arg14: memref<2x32x64xf32, #tpu.memory_space<vmem>>, %arg15: memref<2x1x64xf32, #tpu.memory_space<vmem>>, %arg16: memref<2x64x32xf32, #tpu.memory_space<vmem>>, %arg17: memref<2x1x32xf32, #tpu.memory_space<vmem>>, %arg18: memref<2x3x32xf32, #tpu.memory_space<vmem>>, %arg19: memref<2x3x32xf32, #tpu.memory_space<vmem>>, %arg20: memref<1x32xf32, #tpu.memory_space<vmem>>, %arg21: memref<1x32xf32, #tpu.memory_space<vmem>>, %arg22: memref<16x32xf32, #tpu.memory_space<vmem>>) attributes {dimension_semantics = [], scalar_prefetch = 0 : i64, scratch_operands = 0 : i64, tpu.core_type = #tpu.core_type<tc>} {
    %c0 = arith.constant 0 : index
    %c0_0 = arith.constant 0 : index
    %0 = vector.load %arg0[%c0, %c0_0] : memref<16x32xf32, #tpu.memory_space<vmem>>, vector<16x32xf32>
    %c0_1 = arith.constant 0 : index
    %c0_2 = arith.constant 0 : index
    %1 = vector.load %arg1[%c0_1, %c0_2] : memref<16x32xf32, #tpu.memory_space<vmem>>, vector<16x32xf32>
    %c0_3 = arith.constant 0 : index
    %c0_4 = arith.constant 0 : index
    %c0_5 = arith.constant 0 : index
    %2 = vector.load %arg2[%c0_3, %c0_4, %c0_5] : memref<2x8x8xf32, #tpu.memory_space<vmem>>, vector<2x8x8xf32>
    %c0_6 = arith.constant 0 : index
    %c0_7 = arith.constant 0 : index
    %c0_8 = arith.constant 0 : index
    %3 = vector.load %arg3[%c0_6, %c0_7, %c0_8] : memref<2x8x8xf32, #tpu.memory_space<vmem>>, vector<2x8x8xf32>
    %c0_9 = arith.constant 0 : index
    %c0_10 = arith.constant 0 : index
    %c0_11 = arith.constant 0 : index
    %4 = vector.load %arg18[%c0_9, %c0_10, %c0_11] : memref<2x3x32xf32, #tpu.memory_space<vmem>>, vector<1x3x32xf32>
    %5 = vector.shape_cast %4 : vector<1x3x32xf32> to vector<3x32xf32>
    %c0_12 = arith.constant 0 : index
    %c0_13 = arith.constant 0 : index
    %c0_14 = arith.constant 0 : index
    %6 = vector.load %arg19[%c0_12, %c0_13, %c0_14] : memref<2x3x32xf32, #tpu.memory_space<vmem>>, vector<1x3x32xf32>
    %7 = vector.shape_cast %6 : vector<1x3x32xf32> to vector<3x32xf32>
    %8 = vector.extract_strided_slice %5 {offsets = [0, 0], sizes = [1, 32], strides = [1, 1]} : vector<3x32xf32> to vector<1x32xf32>
    %9 = vector.extract_strided_slice %7 {offsets = [0, 0], sizes = [1, 32], strides = [1, 1]} : vector<3x32xf32> to vector<1x32xf32>
    %cst = arith.constant dense<0.000000e+00> : vector<16xf32>
    %10 = vector.multi_reduction <add>, %0, %cst [1] : vector<16x32xf32> to vector<16xf32>
    %11 = vector.shape_cast %10 : vector<16xf32> to vector<16x1xf32>
    %cst_15 = arith.constant 3.200000e+01 : f32
    %12 = vector.broadcast %cst_15 : f32 to vector<16x1xf32>
    %13 = arith.divf %11, %12 : vector<16x1xf32>
    %14 = vector.broadcast %13 : vector<16x1xf32> to vector<16x32xf32>
    %15 = arith.subf %0, %14 : vector<16x32xf32>
    %16 = arith.mulf %15, %15 : vector<16x32xf32>
    %cst_16 = arith.constant dense<0.000000e+00> : vector<16xf32>
    %17 = vector.multi_reduction <add>, %16, %cst_16 [1] : vector<16x32xf32> to vector<16xf32>
    %18 = vector.shape_cast %17 : vector<16xf32> to vector<16x1xf32>
    %cst_17 = arith.constant 3.100000e+01 : f32
    %19 = vector.broadcast %cst_17 : f32 to vector<16x1xf32>
    %20 = arith.divf %18, %19 : vector<16x1xf32>
    %21 = vector.broadcast %8 : vector<1x32xf32> to vector<16x32xf32>
    %22 = arith.mulf %21, %15 : vector<16x32xf32>
    %23 = math.sqrt %20 : vector<16x1xf32>
    %cst_18 = arith.constant 9.99999997E-7 : f32
    %24 = vector.broadcast %cst_18 : f32 to vector<16x1xf32>
    %25 = arith.addf %23, %24 : vector<16x1xf32>
    %26 = vector.broadcast %25 : vector<16x1xf32> to vector<16x32xf32>
    %27 = arith.divf %22, %26 : vector<16x32xf32>
    %28 = vector.broadcast %9 : vector<1x32xf32> to vector<16x32xf32>
    %29 = arith.addf %27, %28 : vector<16x32xf32>
    %c0_19 = arith.constant 0 : index
    %c0_20 = arith.constant 0 : index
    %c0_21 = arith.constant 0 : index
    %30 = vector.load %arg4[%c0_19, %c0_20, %c0_21] : memref<2x32x96xf32, #tpu.memory_space<vmem>>, vector<1x32x96xf32>
    %31 = vector.shape_cast %30 : vector<1x32x96xf32> to vector<32x96xf32>
    %cst_22 = arith.constant dense<0.000000e+00> : vector<16x96xf32>
    %32 = tpu.matmul %29, %31, %cst_22 {dimension_numbers = #tpu.dot_dimension_numbers<[1], [0], [0], [1], [0, 0, 1, 1], [], []>} : vector<16x32xf32>, vector<32x96xf32>, vector<16x96xf32> -> vector<16x96xf32>
    %c0_23 = arith.constant 0 : index
    %c0_24 = arith.constant 0 : index
    %c0_25 = arith.constant 0 : index
    %33 = vector.load %arg5[%c0_23, %c0_24, %c0_25] : memref<2x1x96xf32, #tpu.memory_space<vmem>>, vector<1x1x96xf32>
    %34 = vector.shape_cast %33 : vector<1x1x96xf32> to vector<1x96xf32>
    %35 = vector.broadcast %34 : vector<1x96xf32> to vector<16x96xf32>
    %36 = arith.addf %32, %35 : vector<16x96xf32>
    %37 = vector.extract_strided_slice %36 {offsets = [0, 0], sizes = [16, 32], strides = [1, 1]} : vector<16x96xf32> to vector<16x32xf32>
    %38 = vector.extract_strided_slice %36 {offsets = [0, 32], sizes = [16, 32], strides = [1, 1]} : vector<16x96xf32> to vector<16x32xf32>
    %39 = vector.extract_strided_slice %36 {offsets = [0, 64], sizes = [16, 32], strides = [1, 1]} : vector<16x96xf32> to vector<16x32xf32>
    %c0_26 = arith.constant 0 : index
    %c0_27 = arith.constant 0 : index
    %c0_28 = arith.constant 0 : index
    %40 = vector.load %arg6[%c0_26, %c0_27, %c0_28] : memref<2x32x32xf32, #tpu.memory_space<vmem>>, vector<1x32x32xf32>
    %41 = vector.shape_cast %40 : vector<1x32x32xf32> to vector<32x32xf32>
    %42 = vector.extract_strided_slice %37 {offsets = [0, 0], sizes = [16, 8], strides = [1, 1]} : vector<16x32xf32> to vector<16x8xf32>
    %43 = vector.shape_cast %42 : vector<16x8xf32> to vector<2x8x8xf32>
    %44 = vector.extract_strided_slice %38 {offsets = [0, 0], sizes = [16, 8], strides = [1, 1]} : vector<16x32xf32> to vector<16x8xf32>
    %45 = vector.shape_cast %44 : vector<16x8xf32> to vector<2x8x8xf32>
    %46 = vector.extract_strided_slice %39 {offsets = [0, 0], sizes = [16, 8], strides = [1, 1]} : vector<16x32xf32> to vector<16x8xf32>
    %47 = vector.shape_cast %46 : vector<16x8xf32> to vector<2x8x8xf32>
    "tpu.trace_start"() <{level = 10 : i32, message = "bqd,bkd->bqk"}> : () -> ()
    %cst_29 = arith.constant dense<0.000000e+00> : vector<2x8x8xf32>
    %48 = tpu.matmul %43, %45, %cst_29 {dimension_numbers = #tpu.dot_dimension_numbers<[2], [2], [1], [1], [0, 0, 0, 1, 1, 1], [0], [0]>} : vector<2x8x8xf32>, vector<2x8x8xf32>, vector<2x8x8xf32> -> vector<2x8x8xf32>
    "tpu.trace_stop"() : () -> ()
    %cst_30 = arith.constant 0.353553385 : f32
    %49 = vector.broadcast %cst_30 : f32 to vector<2x8x8xf32>
    %50 = arith.mulf %48, %49 : vector<2x8x8xf32>
    %51 = arith.addf %50, %2 : vector<2x8x8xf32>
    %cst_31 = arith.constant dense<0xFF800000> : vector<2x8xf32>
    %52 = vector.multi_reduction <maximumf>, %51, %cst_31 [2] : vector<2x8x8xf32> to vector<2x8xf32>
    %53 = vector.shape_cast %52 : vector<2x8xf32> to vector<2x8x1xf32>
    %54 = vector.broadcast %53 : vector<2x8x1xf32> to vector<2x8x8xf32>
    %55 = arith.subf %51, %54 : vector<2x8x8xf32>
    %56 = math.exp %55 : vector<2x8x8xf32>
    %cst_32 = arith.constant dense<0.000000e+00> : vector<2x8xf32>
    %57 = vector.multi_reduction <add>, %56, %cst_32 [2] : vector<2x8x8xf32> to vector<2x8xf32>
    %58 = vector.shape_cast %57 : vector<2x8xf32> to vector<2x8x1xf32>
    %59 = tpu.reciprocal %58 {approx = true} : vector<2x8x1xf32> -> vector<2x8x1xf32>
    %60 = vector.broadcast %59 : vector<2x8x1xf32> to vector<2x8x8xf32>
    %61 = arith.mulf %56, %60 : vector<2x8x8xf32>
    "tpu.trace_start"() <{level = 10 : i32, message = "bqk,bkd->bqd"}> : () -> ()
    %cst_33 = arith.constant dense<0.000000e+00> : vector<2x8x8xf32>
    %62 = tpu.matmul %61, %47, %cst_33 {dimension_numbers = #tpu.dot_dimension_numbers<[2], [1], [1], [2], [0, 0, 0, 1, 1, 2], [0], [0]>} : vector<2x8x8xf32>, vector<2x8x8xf32>, vector<2x8x8xf32> -> vector<2x8x8xf32>
    "tpu.trace_stop"() : () -> ()
    %63 = vector.shape_cast %62 : vector<2x8x8xf32> to vector<16x8xf32>
    %64 = vector.extract_strided_slice %41 {offsets = [0, 0], sizes = [8, 32], strides = [1, 1]} : vector<32x32xf32> to vector<8x32xf32>
    %cst_34 = arith.constant dense<0.000000e+00> : vector<16x32xf32>
    %65 = tpu.matmul %63, %64, %cst_34 {dimension_numbers = #tpu.dot_dimension_numbers<[1], [0], [0], [1], [0, 0, 1, 1], [], []>} : vector<16x8xf32>, vector<8x32xf32>, vector<16x32xf32> -> vector<16x32xf32>
    %66 = vector.extract_strided_slice %37 {offsets = [0, 8], sizes = [16, 8], strides = [1, 1]} : vector<16x32xf32> to vector<16x8xf32>
    %67 = vector.shape_cast %66 : vector<16x8xf32> to vector<2x8x8xf32>
    %68 = vector.extract_strided_slice %38 {offsets = [0, 8], sizes = [16, 8], strides = [1, 1]} : vector<16x32xf32> to vector<16x8xf32>
    %69 = vector.shape_cast %68 : vector<16x8xf32> to vector<2x8x8xf32>
    %70 = vector.extract_strided_slice %39 {offsets = [0, 8], sizes = [16, 8], strides = [1, 1]} : vector<16x32xf32> to vector<16x8xf32>
    %71 = vector.shape_cast %70 : vector<16x8xf32> to vector<2x8x8xf32>
    "tpu.trace_start"() <{level = 10 : i32, message = "bqd,bkd->bqk"}> : () -> ()
    %cst_35 = arith.constant dense<0.000000e+00> : vector<2x8x8xf32>
    %72 = tpu.matmul %67, %69, %cst_35 {dimension_numbers = #tpu.dot_dimension_numbers<[2], [2], [1], [1], [0, 0, 0, 1, 1, 1], [0], [0]>} : vector<2x8x8xf32>, vector<2x8x8xf32>, vector<2x8x8xf32> -> vector<2x8x8xf32>
    "tpu.trace_stop"() : () -> ()
    %cst_36 = arith.constant 0.353553385 : f32
    %73 = vector.broadcast %cst_36 : f32 to vector<2x8x8xf32>
    %74 = arith.mulf %72, %73 : vector<2x8x8xf32>
    %75 = arith.addf %74, %2 : vector<2x8x8xf32>
    %cst_37 = arith.constant dense<0xFF800000> : vector<2x8xf32>
    %76 = vector.multi_reduction <maximumf>, %75, %cst_37 [2] : vector<2x8x8xf32> to vector<2x8xf32>
    %77 = vector.shape_cast %76 : vector<2x8xf32> to vector<2x8x1xf32>
    %78 = vector.broadcast %77 : vector<2x8x1xf32> to vector<2x8x8xf32>
    %79 = arith.subf %75, %78 : vector<2x8x8xf32>
    %80 = math.exp %79 : vector<2x8x8xf32>
    %cst_38 = arith.constant dense<0.000000e+00> : vector<2x8xf32>
    %81 = vector.multi_reduction <add>, %80, %cst_38 [2] : vector<2x8x8xf32> to vector<2x8xf32>
    %82 = vector.shape_cast %81 : vector<2x8xf32> to vector<2x8x1xf32>
    %83 = tpu.reciprocal %82 {approx = true} : vector<2x8x1xf32> -> vector<2x8x1xf32>
    %84 = vector.broadcast %83 : vector<2x8x1xf32> to vector<2x8x8xf32>
    %85 = arith.mulf %80, %84 : vector<2x8x8xf32>
    "tpu.trace_start"() <{level = 10 : i32, message = "bqk,bkd->bqd"}> : () -> ()
    %cst_39 = arith.constant dense<0.000000e+00> : vector<2x8x8xf32>
    %86 = tpu.matmul %85, %71, %cst_39 {dimension_numbers = #tpu.dot_dimension_numbers<[2], [1], [1], [2], [0, 0, 0, 1, 1, 2], [0], [0]>} : vector<2x8x8xf32>, vector<2x8x8xf32>, vector<2x8x8xf32> -> vector<2x8x8xf32>
    "tpu.trace_stop"() : () -> ()
    %87 = vector.shape_cast %86 : vector<2x8x8xf32> to vector<16x8xf32>
    %88 = vector.extract_strided_slice %41 {offsets = [8, 0], sizes = [8, 32], strides = [1, 1]} : vector<32x32xf32> to vector<8x32xf32>
    %cst_40 = arith.constant dense<0.000000e+00> : vector<16x32xf32>
    %89 = tpu.matmul %87, %88, %cst_40 {dimension_numbers = #tpu.dot_dimension_numbers<[1], [0], [0], [1], [0, 0, 1, 1], [], []>} : vector<16x8xf32>, vector<8x32xf32>, vector<16x32xf32> -> vector<16x32xf32>
    %90 = arith.addf %65, %89 : vector<16x32xf32>
    %91 = vector.extract_strided_slice %37 {offsets = [0, 16], sizes = [16, 8], strides = [1, 1]} : vector<16x32xf32> to vector<16x8xf32>
    %92 = vector.shape_cast %91 : vector<16x8xf32> to vector<2x8x8xf32>
    %93 = vector.extract_strided_slice %38 {offsets = [0, 16], sizes = [16, 8], strides = [1, 1]} : vector<16x32xf32> to vector<16x8xf32>
    %94 = vector.shape_cast %93 : vector<16x8xf32> to vector<2x8x8xf32>
    %95 = vector.extract_strided_slice %39 {offsets = [0, 16], sizes = [16, 8], strides = [1, 1]} : vector<16x32xf32> to vector<16x8xf32>
    %96 = vector.shape_cast %95 : vector<16x8xf32> to vector<2x8x8xf32>
    "tpu.trace_start"() <{level = 10 : i32, message = "bqd,bkd->bqk"}> : () -> ()
    %cst_41 = arith.constant dense<0.000000e+00> : vector<2x8x8xf32>
    %97 = tpu.matmul %92, %94, %cst_41 {dimension_numbers = #tpu.dot_dimension_numbers<[2], [2], [1], [1], [0, 0, 0, 1, 1, 1], [0], [0]>} : vector<2x8x8xf32>, vector<2x8x8xf32>, vector<2x8x8xf32> -> vector<2x8x8xf32>
    "tpu.trace_stop"() : () -> ()
    %cst_42 = arith.constant 0.353553385 : f32
    %98 = vector.broadcast %cst_42 : f32 to vector<2x8x8xf32>
    %99 = arith.mulf %97, %98 : vector<2x8x8xf32>
    %100 = arith.addf %99, %2 : vector<2x8x8xf32>
    %cst_43 = arith.constant dense<0xFF800000> : vector<2x8xf32>
    %101 = vector.multi_reduction <maximumf>, %100, %cst_43 [2] : vector<2x8x8xf32> to vector<2x8xf32>
    %102 = vector.shape_cast %101 : vector<2x8xf32> to vector<2x8x1xf32>
    %103 = vector.broadcast %102 : vector<2x8x1xf32> to vector<2x8x8xf32>
    %104 = arith.subf %100, %103 : vector<2x8x8xf32>
    %105 = math.exp %104 : vector<2x8x8xf32>
    %cst_44 = arith.constant dense<0.000000e+00> : vector<2x8xf32>
    %106 = vector.multi_reduction <add>, %105, %cst_44 [2] : vector<2x8x8xf32> to vector<2x8xf32>
    %107 = vector.shape_cast %106 : vector<2x8xf32> to vector<2x8x1xf32>
    %108 = tpu.reciprocal %107 {approx = true} : vector<2x8x1xf32> -> vector<2x8x1xf32>
    %109 = vector.broadcast %108 : vector<2x8x1xf32> to vector<2x8x8xf32>
    %110 = arith.mulf %105, %109 : vector<2x8x8xf32>
    "tpu.trace_start"() <{level = 10 : i32, message = "bqk,bkd->bqd"}> : () -> ()
    %cst_45 = arith.constant dense<0.000000e+00> : vector<2x8x8xf32>
    %111 = tpu.matmul %110, %96, %cst_45 {dimension_numbers = #tpu.dot_dimension_numbers<[2], [1], [1], [2], [0, 0, 0, 1, 1, 2], [0], [0]>} : vector<2x8x8xf32>, vector<2x8x8xf32>, vector<2x8x8xf32> -> vector<2x8x8xf32>
    "tpu.trace_stop"() : () -> ()
    %112 = vector.shape_cast %111 : vector<2x8x8xf32> to vector<16x8xf32>
    %113 = vector.extract_strided_slice %41 {offsets = [16, 0], sizes = [8, 32], strides = [1, 1]} : vector<32x32xf32> to vector<8x32xf32>
    %cst_46 = arith.constant dense<0.000000e+00> : vector<16x32xf32>
    %114 = tpu.matmul %112, %113, %cst_46 {dimension_numbers = #tpu.dot_dimension_numbers<[1], [0], [0], [1], [0, 0, 1, 1], [], []>} : vector<16x8xf32>, vector<8x32xf32>, vector<16x32xf32> -> vector<16x32xf32>
    %115 = arith.addf %90, %114 : vector<16x32xf32>
    %116 = vector.extract_strided_slice %37 {offsets = [0, 24], sizes = [16, 8], strides = [1, 1]} : vector<16x32xf32> to vector<16x8xf32>
    %117 = vector.shape_cast %116 : vector<16x8xf32> to vector<2x8x8xf32>
    %118 = vector.extract_strided_slice %38 {offsets = [0, 24], sizes = [16, 8], strides = [1, 1]} : vector<16x32xf32> to vector<16x8xf32>
    %119 = vector.shape_cast %118 : vector<16x8xf32> to vector<2x8x8xf32>
    %120 = vector.extract_strided_slice %39 {offsets = [0, 24], sizes = [16, 8], strides = [1, 1]} : vector<16x32xf32> to vector<16x8xf32>
    %121 = vector.shape_cast %120 : vector<16x8xf32> to vector<2x8x8xf32>
    "tpu.trace_start"() <{level = 10 : i32, message = "bqd,bkd->bqk"}> : () -> ()
    %cst_47 = arith.constant dense<0.000000e+00> : vector<2x8x8xf32>
    %122 = tpu.matmul %117, %119, %cst_47 {dimension_numbers = #tpu.dot_dimension_numbers<[2], [2], [1], [1], [0, 0, 0, 1, 1, 1], [0], [0]>} : vector<2x8x8xf32>, vector<2x8x8xf32>, vector<2x8x8xf32> -> vector<2x8x8xf32>
    "tpu.trace_stop"() : () -> ()
    %cst_48 = arith.constant 0.353553385 : f32
    %123 = vector.broadcast %cst_48 : f32 to vector<2x8x8xf32>
    %124 = arith.mulf %122, %123 : vector<2x8x8xf32>
    %125 = arith.addf %124, %2 : vector<2x8x8xf32>
    %cst_49 = arith.constant dense<0xFF800000> : vector<2x8xf32>
    %126 = vector.multi_reduction <maximumf>, %125, %cst_49 [2] : vector<2x8x8xf32> to vector<2x8xf32>
    %127 = vector.shape_cast %126 : vector<2x8xf32> to vector<2x8x1xf32>
    %128 = vector.broadcast %127 : vector<2x8x1xf32> to vector<2x8x8xf32>
    %129 = arith.subf %125, %128 : vector<2x8x8xf32>
    %130 = math.exp %129 : vector<2x8x8xf32>
    %cst_50 = arith.constant dense<0.000000e+00> : vector<2x8xf32>
    %131 = vector.multi_reduction <add>, %130, %cst_50 [2] : vector<2x8x8xf32> to vector<2x8xf32>
    %132 = vector.shape_cast %131 : vector<2x8xf32> to vector<2x8x1xf32>
    %133 = tpu.reciprocal %132 {approx = true} : vector<2x8x1xf32> -> vector<2x8x1xf32>
    %134 = vector.broadcast %133 : vector<2x8x1xf32> to vector<2x8x8xf32>
    %135 = arith.mulf %130, %134 : vector<2x8x8xf32>
    "tpu.trace_start"() <{level = 10 : i32, message = "bqk,bkd->bqd"}> : () -> ()
    %cst_51 = arith.constant dense<0.000000e+00> : vector<2x8x8xf32>
    %136 = tpu.matmul %135, %121, %cst_51 {dimension_numbers = #tpu.dot_dimension_numbers<[2], [1], [1], [2], [0, 0, 0, 1, 1, 2], [0], [0]>} : vector<2x8x8xf32>, vector<2x8x8xf32>, vector<2x8x8xf32> -> vector<2x8x8xf32>
    "tpu.trace_stop"() : () -> ()
    %137 = vector.shape_cast %136 : vector<2x8x8xf32> to vector<16x8xf32>
    %138 = vector.extract_strided_slice %41 {offsets = [24, 0], sizes = [8, 32], strides = [1, 1]} : vector<32x32xf32> to vector<8x32xf32>
    %cst_52 = arith.constant dense<0.000000e+00> : vector<16x32xf32>
    %139 = tpu.matmul %137, %138, %cst_52 {dimension_numbers = #tpu.dot_dimension_numbers<[1], [0], [0], [1], [0, 0, 1, 1], [], []>} : vector<16x8xf32>, vector<8x32xf32>, vector<16x32xf32> -> vector<16x32xf32>
    %140 = arith.addf %115, %139 : vector<16x32xf32>
    %c0_53 = arith.constant 0 : index
    %c0_54 = arith.constant 0 : index
    %c0_55 = arith.constant 0 : index
    %141 = vector.load %arg7[%c0_53, %c0_54, %c0_55] : memref<2x1x32xf32, #tpu.memory_space<vmem>>, vector<1x1x32xf32>
    %142 = vector.shape_cast %141 : vector<1x1x32xf32> to vector<1x32xf32>
    %143 = vector.broadcast %142 : vector<1x32xf32> to vector<16x32xf32>
    %144 = arith.addf %140, %143 : vector<16x32xf32>
    %145 = arith.addf %0, %144 : vector<16x32xf32>
    %146 = vector.extract_strided_slice %5 {offsets = [1, 0], sizes = [1, 32], strides = [1, 1]} : vector<3x32xf32> to vector<1x32xf32>
    %147 = vector.extract_strided_slice %7 {offsets = [1, 0], sizes = [1, 32], strides = [1, 1]} : vector<3x32xf32> to vector<1x32xf32>
    %cst_56 = arith.constant dense<0.000000e+00> : vector<16xf32>
    %148 = vector.multi_reduction <add>, %145, %cst_56 [1] : vector<16x32xf32> to vector<16xf32>
    %149 = vector.shape_cast %148 : vector<16xf32> to vector<16x1xf32>
    %cst_57 = arith.constant 3.200000e+01 : f32
    %150 = vector.broadcast %cst_57 : f32 to vector<16x1xf32>
    %151 = arith.divf %149, %150 : vector<16x1xf32>
    %152 = vector.broadcast %151 : vector<16x1xf32> to vector<16x32xf32>
    %153 = arith.subf %145, %152 : vector<16x32xf32>
    %154 = arith.mulf %153, %153 : vector<16x32xf32>
    %cst_58 = arith.constant dense<0.000000e+00> : vector<16xf32>
    %155 = vector.multi_reduction <add>, %154, %cst_58 [1] : vector<16x32xf32> to vector<16xf32>
    %156 = vector.shape_cast %155 : vector<16xf32> to vector<16x1xf32>
    %cst_59 = arith.constant 3.100000e+01 : f32
    %157 = vector.broadcast %cst_59 : f32 to vector<16x1xf32>
    %158 = arith.divf %156, %157 : vector<16x1xf32>
    %159 = vector.broadcast %146 : vector<1x32xf32> to vector<16x32xf32>
    %160 = arith.mulf %159, %153 : vector<16x32xf32>
    %161 = math.sqrt %158 : vector<16x1xf32>
    %cst_60 = arith.constant 9.99999997E-7 : f32
    %162 = vector.broadcast %cst_60 : f32 to vector<16x1xf32>
    %163 = arith.addf %161, %162 : vector<16x1xf32>
    %164 = vector.broadcast %163 : vector<16x1xf32> to vector<16x32xf32>
    %165 = arith.divf %160, %164 : vector<16x32xf32>
    %166 = vector.broadcast %147 : vector<1x32xf32> to vector<16x32xf32>
    %167 = arith.addf %165, %166 : vector<16x32xf32>
    %c0_61 = arith.constant 0 : index
    %c0_62 = arith.constant 0 : index
    %c0_63 = arith.constant 0 : index
    %168 = vector.load %arg8[%c0_61, %c0_62, %c0_63] : memref<2x32x32xf32, #tpu.memory_space<vmem>>, vector<1x32x32xf32>
    %169 = vector.shape_cast %168 : vector<1x32x32xf32> to vector<32x32xf32>
    %cst_64 = arith.constant dense<0.000000e+00> : vector<16x32xf32>
    %170 = tpu.matmul %167, %169, %cst_64 {dimension_numbers = #tpu.dot_dimension_numbers<[1], [0], [0], [1], [0, 0, 1, 1], [], []>} : vector<16x32xf32>, vector<32x32xf32>, vector<16x32xf32> -> vector<16x32xf32>
    %c0_65 = arith.constant 0 : index
    %c0_66 = arith.constant 0 : index
    %c0_67 = arith.constant 0 : index
    %171 = vector.load %arg9[%c0_65, %c0_66, %c0_67] : memref<2x1x32xf32, #tpu.memory_space<vmem>>, vector<1x1x32xf32>
    %172 = vector.shape_cast %171 : vector<1x1x32xf32> to vector<1x32xf32>
    %173 = vector.broadcast %172 : vector<1x32xf32> to vector<16x32xf32>
    %174 = arith.addf %170, %173 : vector<16x32xf32>
    %c0_68 = arith.constant 0 : index
    %c0_69 = arith.constant 0 : index
    %c0_70 = arith.constant 0 : index
    %175 = vector.load %arg10[%c0_68, %c0_69, %c0_70] : memref<2x32x64xf32, #tpu.memory_space<vmem>>, vector<1x32x64xf32>
    %176 = vector.shape_cast %175 : vector<1x32x64xf32> to vector<32x64xf32>
    %cst_71 = arith.constant dense<0.000000e+00> : vector<16x64xf32>
    %177 = tpu.matmul %1, %176, %cst_71 {dimension_numbers = #tpu.dot_dimension_numbers<[1], [0], [0], [1], [0, 0, 1, 1], [], []>} : vector<16x32xf32>, vector<32x64xf32>, vector<16x64xf32> -> vector<16x64xf32>
    %c0_72 = arith.constant 0 : index
    %c0_73 = arith.constant 0 : index
    %c0_74 = arith.constant 0 : index
    %178 = vector.load %arg11[%c0_72, %c0_73, %c0_74] : memref<2x1x64xf32, #tpu.memory_space<vmem>>, vector<1x1x64xf32>
    %179 = vector.shape_cast %178 : vector<1x1x64xf32> to vector<1x64xf32>
    %180 = vector.broadcast %179 : vector<1x64xf32> to vector<16x64xf32>
    %181 = arith.addf %177, %180 : vector<16x64xf32>
    %182 = vector.extract_strided_slice %181 {offsets = [0, 0], sizes = [16, 32], strides = [1, 1]} : vector<16x64xf32> to vector<16x32xf32>
    %183 = vector.extract_strided_slice %181 {offsets = [0, 32], sizes = [16, 32], strides = [1, 1]} : vector<16x64xf32> to vector<16x32xf32>
    %c0_75 = arith.constant 0 : index
    %c0_76 = arith.constant 0 : index
    %c0_77 = arith.constant 0 : index
    %184 = vector.load %arg12[%c0_75, %c0_76, %c0_77] : memref<2x32x32xf32, #tpu.memory_space<vmem>>, vector<1x32x32xf32>
    %185 = vector.shape_cast %184 : vector<1x32x32xf32> to vector<32x32xf32>
    %186 = vector.extract_strided_slice %174 {offsets = [0, 0], sizes = [16, 8], strides = [1, 1]} : vector<16x32xf32> to vector<16x8xf32>
    %187 = vector.shape_cast %186 : vector<16x8xf32> to vector<2x8x8xf32>
    %188 = vector.extract_strided_slice %182 {offsets = [0, 0], sizes = [16, 8], strides = [1, 1]} : vector<16x32xf32> to vector<16x8xf32>
    %189 = vector.shape_cast %188 : vector<16x8xf32> to vector<2x8x8xf32>
    %190 = vector.extract_strided_slice %183 {offsets = [0, 0], sizes = [16, 8], strides = [1, 1]} : vector<16x32xf32> to vector<16x8xf32>
    %191 = vector.shape_cast %190 : vector<16x8xf32> to vector<2x8x8xf32>
    "tpu.trace_start"() <{level = 10 : i32, message = "bqd,bkd->bqk"}> : () -> ()
    %cst_78 = arith.constant dense<0.000000e+00> : vector<2x8x8xf32>
    %192 = tpu.matmul %187, %189, %cst_78 {dimension_numbers = #tpu.dot_dimension_numbers<[2], [2], [1], [1], [0, 0, 0, 1, 1, 1], [0], [0]>} : vector<2x8x8xf32>, vector<2x8x8xf32>, vector<2x8x8xf32> -> vector<2x8x8xf32>
    "tpu.trace_stop"() : () -> ()
    %cst_79 = arith.constant 0.353553385 : f32
    %193 = vector.broadcast %cst_79 : f32 to vector<2x8x8xf32>
    %194 = arith.mulf %192, %193 : vector<2x8x8xf32>
    %195 = arith.addf %194, %3 : vector<2x8x8xf32>
    %cst_80 = arith.constant dense<0xFF800000> : vector<2x8xf32>
    %196 = vector.multi_reduction <maximumf>, %195, %cst_80 [2] : vector<2x8x8xf32> to vector<2x8xf32>
    %197 = vector.shape_cast %196 : vector<2x8xf32> to vector<2x8x1xf32>
    %198 = vector.broadcast %197 : vector<2x8x1xf32> to vector<2x8x8xf32>
    %199 = arith.subf %195, %198 : vector<2x8x8xf32>
    %200 = math.exp %199 : vector<2x8x8xf32>
    %cst_81 = arith.constant dense<0.000000e+00> : vector<2x8xf32>
    %201 = vector.multi_reduction <add>, %200, %cst_81 [2] : vector<2x8x8xf32> to vector<2x8xf32>
    %202 = vector.shape_cast %201 : vector<2x8xf32> to vector<2x8x1xf32>
    %203 = tpu.reciprocal %202 {approx = true} : vector<2x8x1xf32> -> vector<2x8x1xf32>
    %204 = vector.broadcast %203 : vector<2x8x1xf32> to vector<2x8x8xf32>
    %205 = arith.mulf %200, %204 : vector<2x8x8xf32>
    "tpu.trace_start"() <{level = 10 : i32, message = "bqk,bkd->bqd"}> : () -> ()
    %cst_82 = arith.constant dense<0.000000e+00> : vector<2x8x8xf32>
    %206 = tpu.matmul %205, %191, %cst_82 {dimension_numbers = #tpu.dot_dimension_numbers<[2], [1], [1], [2], [0, 0, 0, 1, 1, 2], [0], [0]>} : vector<2x8x8xf32>, vector<2x8x8xf32>, vector<2x8x8xf32> -> vector<2x8x8xf32>
    "tpu.trace_stop"() : () -> ()
    %207 = vector.shape_cast %206 : vector<2x8x8xf32> to vector<16x8xf32>
    %208 = vector.extract_strided_slice %185 {offsets = [0, 0], sizes = [8, 32], strides = [1, 1]} : vector<32x32xf32> to vector<8x32xf32>
    %cst_83 = arith.constant dense<0.000000e+00> : vector<16x32xf32>
    %209 = tpu.matmul %207, %208, %cst_83 {dimension_numbers = #tpu.dot_dimension_numbers<[1], [0], [0], [1], [0, 0, 1, 1], [], []>} : vector<16x8xf32>, vector<8x32xf32>, vector<16x32xf32> -> vector<16x32xf32>
    %210 = vector.extract_strided_slice %174 {offsets = [0, 8], sizes = [16, 8], strides = [1, 1]} : vector<16x32xf32> to vector<16x8xf32>
    %211 = vector.shape_cast %210 : vector<16x8xf32> to vector<2x8x8xf32>
    %212 = vector.extract_strided_slice %182 {offsets = [0, 8], sizes = [16, 8], strides = [1, 1]} : vector<16x32xf32> to vector<16x8xf32>
    %213 = vector.shape_cast %212 : vector<16x8xf32> to vector<2x8x8xf32>
    %214 = vector.extract_strided_slice %183 {offsets = [0, 8], sizes = [16, 8], strides = [1, 1]} : vector<16x32xf32> to vector<16x8xf32>
    %215 = vector.shape_cast %214 : vector<16x8xf32> to vector<2x8x8xf32>
    "tpu.trace_start"() <{level = 10 : i32, message = "bqd,bkd->bqk"}> : () -> ()
    %cst_84 = arith.constant dense<0.000000e+00> : vector<2x8x8xf32>
    %216 = tpu.matmul %211, %213, %cst_84 {dimension_numbers = #tpu.dot_dimension_numbers<[2], [2], [1], [1], [0, 0, 0, 1, 1, 1], [0], [0]>} : vector<2x8x8xf32>, vector<2x8x8xf32>, vector<2x8x8xf32> -> vector<2x8x8xf32>
    "tpu.trace_stop"() : () -> ()
    %cst_85 = arith.constant 0.353553385 : f32
    %217 = vector.broadcast %cst_85 : f32 to vector<2x8x8xf32>
    %218 = arith.mulf %216, %217 : vector<2x8x8xf32>
    %219 = arith.addf %218, %3 : vector<2x8x8xf32>
    %cst_86 = arith.constant dense<0xFF800000> : vector<2x8xf32>
    %220 = vector.multi_reduction <maximumf>, %219, %cst_86 [2] : vector<2x8x8xf32> to vector<2x8xf32>
    %221 = vector.shape_cast %220 : vector<2x8xf32> to vector<2x8x1xf32>
    %222 = vector.broadcast %221 : vector<2x8x1xf32> to vector<2x8x8xf32>
    %223 = arith.subf %219, %222 : vector<2x8x8xf32>
    %224 = math.exp %223 : vector<2x8x8xf32>
    %cst_87 = arith.constant dense<0.000000e+00> : vector<2x8xf32>
    %225 = vector.multi_reduction <add>, %224, %cst_87 [2] : vector<2x8x8xf32> to vector<2x8xf32>
    %226 = vector.shape_cast %225 : vector<2x8xf32> to vector<2x8x1xf32>
    %227 = tpu.reciprocal %226 {approx = true} : vector<2x8x1xf32> -> vector<2x8x1xf32>
    %228 = vector.broadcast %227 : vector<2x8x1xf32> to vector<2x8x8xf32>
    %229 = arith.mulf %224, %228 : vector<2x8x8xf32>
    "tpu.trace_start"() <{level = 10 : i32, message = "bqk,bkd->bqd"}> : () -> ()
    %cst_88 = arith.constant dense<0.000000e+00> : vector<2x8x8xf32>
    %230 = tpu.matmul %229, %215, %cst_88 {dimension_numbers = #tpu.dot_dimension_numbers<[2], [1], [1], [2], [0, 0, 0, 1, 1, 2], [0], [0]>} : vector<2x8x8xf32>, vector<2x8x8xf32>, vector<2x8x8xf32> -> vector<2x8x8xf32>
    "tpu.trace_stop"() : () -> ()
    %231 = vector.shape_cast %230 : vector<2x8x8xf32> to vector<16x8xf32>
    %232 = vector.extract_strided_slice %185 {offsets = [8, 0], sizes = [8, 32], strides = [1, 1]} : vector<32x32xf32> to vector<8x32xf32>
    %cst_89 = arith.constant dense<0.000000e+00> : vector<16x32xf32>
    %233 = tpu.matmul %231, %232, %cst_89 {dimension_numbers = #tpu.dot_dimension_numbers<[1], [0], [0], [1], [0, 0, 1, 1], [], []>} : vector<16x8xf32>, vector<8x32xf32>, vector<16x32xf32> -> vector<16x32xf32>
    %234 = arith.addf %209, %233 : vector<16x32xf32>
    %235 = vector.extract_strided_slice %174 {offsets = [0, 16], sizes = [16, 8], strides = [1, 1]} : vector<16x32xf32> to vector<16x8xf32>
    %236 = vector.shape_cast %235 : vector<16x8xf32> to vector<2x8x8xf32>
    %237 = vector.extract_strided_slice %182 {offsets = [0, 16], sizes = [16, 8], strides = [1, 1]} : vector<16x32xf32> to vector<16x8xf32>
    %238 = vector.shape_cast %237 : vector<16x8xf32> to vector<2x8x8xf32>
    %239 = vector.extract_strided_slice %183 {offsets = [0, 16], sizes = [16, 8], strides = [1, 1]} : vector<16x32xf32> to vector<16x8xf32>
    %240 = vector.shape_cast %239 : vector<16x8xf32> to vector<2x8x8xf32>
    "tpu.trace_start"() <{level = 10 : i32, message = "bqd,bkd->bqk"}> : () -> ()
    %cst_90 = arith.constant dense<0.000000e+00> : vector<2x8x8xf32>
    %241 = tpu.matmul %236, %238, %cst_90 {dimension_numbers = #tpu.dot_dimension_numbers<[2], [2], [1], [1], [0, 0, 0, 1, 1, 1], [0], [0]>} : vector<2x8x8xf32>, vector<2x8x8xf32>, vector<2x8x8xf32> -> vector<2x8x8xf32>
    "tpu.trace_stop"() : () -> ()
    %cst_91 = arith.constant 0.353553385 : f32
    %242 = vector.broadcast %cst_91 : f32 to vector<2x8x8xf32>
    %243 = arith.mulf %241, %242 : vector<2x8x8xf32>
    %244 = arith.addf %243, %3 : vector<2x8x8xf32>
    %cst_92 = arith.constant dense<0xFF800000> : vector<2x8xf32>
    %245 = vector.multi_reduction <maximumf>, %244, %cst_92 [2] : vector<2x8x8xf32> to vector<2x8xf32>
    %246 = vector.shape_cast %245 : vector<2x8xf32> to vector<2x8x1xf32>
    %247 = vector.broadcast %246 : vector<2x8x1xf32> to vector<2x8x8xf32>
    %248 = arith.subf %244, %247 : vector<2x8x8xf32>
    %249 = math.exp %248 : vector<2x8x8xf32>
    %cst_93 = arith.constant dense<0.000000e+00> : vector<2x8xf32>
    %250 = vector.multi_reduction <add>, %249, %cst_93 [2] : vector<2x8x8xf32> to vector<2x8xf32>
    %251 = vector.shape_cast %250 : vector<2x8xf32> to vector<2x8x1xf32>
    %252 = tpu.reciprocal %251 {approx = true} : vector<2x8x1xf32> -> vector<2x8x1xf32>
    %253 = vector.broadcast %252 : vector<2x8x1xf32> to vector<2x8x8xf32>
    %254 = arith.mulf %249, %253 : vector<2x8x8xf32>
    "tpu.trace_start"() <{level = 10 : i32, message = "bqk,bkd->bqd"}> : () -> ()
    %cst_94 = arith.constant dense<0.000000e+00> : vector<2x8x8xf32>
    %255 = tpu.matmul %254, %240, %cst_94 {dimension_numbers = #tpu.dot_dimension_numbers<[2], [1], [1], [2], [0, 0, 0, 1, 1, 2], [0], [0]>} : vector<2x8x8xf32>, vector<2x8x8xf32>, vector<2x8x8xf32> -> vector<2x8x8xf32>
    "tpu.trace_stop"() : () -> ()
    %256 = vector.shape_cast %255 : vector<2x8x8xf32> to vector<16x8xf32>
    %257 = vector.extract_strided_slice %185 {offsets = [16, 0], sizes = [8, 32], strides = [1, 1]} : vector<32x32xf32> to vector<8x32xf32>
    %cst_95 = arith.constant dense<0.000000e+00> : vector<16x32xf32>
    %258 = tpu.matmul %256, %257, %cst_95 {dimension_numbers = #tpu.dot_dimension_numbers<[1], [0], [0], [1], [0, 0, 1, 1], [], []>} : vector<16x8xf32>, vector<8x32xf32>, vector<16x32xf32> -> vector<16x32xf32>
    %259 = arith.addf %234, %258 : vector<16x32xf32>
    %260 = vector.extract_strided_slice %174 {offsets = [0, 24], sizes = [16, 8], strides = [1, 1]} : vector<16x32xf32> to vector<16x8xf32>
    %261 = vector.shape_cast %260 : vector<16x8xf32> to vector<2x8x8xf32>
    %262 = vector.extract_strided_slice %182 {offsets = [0, 24], sizes = [16, 8], strides = [1, 1]} : vector<16x32xf32> to vector<16x8xf32>
    %263 = vector.shape_cast %262 : vector<16x8xf32> to vector<2x8x8xf32>
    %264 = vector.extract_strided_slice %183 {offsets = [0, 24], sizes = [16, 8], strides = [1, 1]} : vector<16x32xf32> to vector<16x8xf32>
    %265 = vector.shape_cast %264 : vector<16x8xf32> to vector<2x8x8xf32>
    "tpu.trace_start"() <{level = 10 : i32, message = "bqd,bkd->bqk"}> : () -> ()
    %cst_96 = arith.constant dense<0.000000e+00> : vector<2x8x8xf32>
    %266 = tpu.matmul %261, %263, %cst_96 {dimension_numbers = #tpu.dot_dimension_numbers<[2], [2], [1], [1], [0, 0, 0, 1, 1, 1], [0], [0]>} : vector<2x8x8xf32>, vector<2x8x8xf32>, vector<2x8x8xf32> -> vector<2x8x8xf32>
    "tpu.trace_stop"() : () -> ()
    %cst_97 = arith.constant 0.353553385 : f32
    %267 = vector.broadcast %cst_97 : f32 to vector<2x8x8xf32>
    %268 = arith.mulf %266, %267 : vector<2x8x8xf32>
    %269 = arith.addf %268, %3 : vector<2x8x8xf32>
    %cst_98 = arith.constant dense<0xFF800000> : vector<2x8xf32>
    %270 = vector.multi_reduction <maximumf>, %269, %cst_98 [2] : vector<2x8x8xf32> to vector<2x8xf32>
    %271 = vector.shape_cast %270 : vector<2x8xf32> to vector<2x8x1xf32>
    %272 = vector.broadcast %271 : vector<2x8x1xf32> to vector<2x8x8xf32>
    %273 = arith.subf %269, %272 : vector<2x8x8xf32>
    %274 = math.exp %273 : vector<2x8x8xf32>
    %cst_99 = arith.constant dense<0.000000e+00> : vector<2x8xf32>
    %275 = vector.multi_reduction <add>, %274, %cst_99 [2] : vector<2x8x8xf32> to vector<2x8xf32>
    %276 = vector.shape_cast %275 : vector<2x8xf32> to vector<2x8x1xf32>
    %277 = tpu.reciprocal %276 {approx = true} : vector<2x8x1xf32> -> vector<2x8x1xf32>
    %278 = vector.broadcast %277 : vector<2x8x1xf32> to vector<2x8x8xf32>
    %279 = arith.mulf %274, %278 : vector<2x8x8xf32>
    "tpu.trace_start"() <{level = 10 : i32, message = "bqk,bkd->bqd"}> : () -> ()
    %cst_100 = arith.constant dense<0.000000e+00> : vector<2x8x8xf32>
    %280 = tpu.matmul %279, %265, %cst_100 {dimension_numbers = #tpu.dot_dimension_numbers<[2], [1], [1], [2], [0, 0, 0, 1, 1, 2], [0], [0]>} : vector<2x8x8xf32>, vector<2x8x8xf32>, vector<2x8x8xf32> -> vector<2x8x8xf32>
    "tpu.trace_stop"() : () -> ()
    %281 = vector.shape_cast %280 : vector<2x8x8xf32> to vector<16x8xf32>
    %282 = vector.extract_strided_slice %185 {offsets = [24, 0], sizes = [8, 32], strides = [1, 1]} : vector<32x32xf32> to vector<8x32xf32>
    %cst_101 = arith.constant dense<0.000000e+00> : vector<16x32xf32>
    %283 = tpu.matmul %281, %282, %cst_101 {dimension_numbers = #tpu.dot_dimension_numbers<[1], [0], [0], [1], [0, 0, 1, 1], [], []>} : vector<16x8xf32>, vector<8x32xf32>, vector<16x32xf32> -> vector<16x32xf32>
    %284 = arith.addf %259, %283 : vector<16x32xf32>
    %c0_102 = arith.constant 0 : index
    %c0_103 = arith.constant 0 : index
    %c0_104 = arith.constant 0 : index
    %285 = vector.load %arg13[%c0_102, %c0_103, %c0_104] : memref<2x1x32xf32, #tpu.memory_space<vmem>>, vector<1x1x32xf32>
    %286 = vector.shape_cast %285 : vector<1x1x32xf32> to vector<1x32xf32>
    %287 = vector.broadcast %286 : vector<1x32xf32> to vector<16x32xf32>
    %288 = arith.addf %284, %287 : vector<16x32xf32>
    %289 = arith.addf %145, %288 : vector<16x32xf32>
    %290 = vector.extract_strided_slice %5 {offsets = [2, 0], sizes = [1, 32], strides = [1, 1]} : vector<3x32xf32> to vector<1x32xf32>
    %291 = vector.extract_strided_slice %7 {offsets = [2, 0], sizes = [1, 32], strides = [1, 1]} : vector<3x32xf32> to vector<1x32xf32>
    %cst_105 = arith.constant dense<0.000000e+00> : vector<16xf32>
    %292 = vector.multi_reduction <add>, %289, %cst_105 [1] : vector<16x32xf32> to vector<16xf32>
    %293 = vector.shape_cast %292 : vector<16xf32> to vector<16x1xf32>
    %cst_106 = arith.constant 3.200000e+01 : f32
    %294 = vector.broadcast %cst_106 : f32 to vector<16x1xf32>
    %295 = arith.divf %293, %294 : vector<16x1xf32>
    %296 = vector.broadcast %295 : vector<16x1xf32> to vector<16x32xf32>
    %297 = arith.subf %289, %296 : vector<16x32xf32>
    %298 = arith.mulf %297, %297 : vector<16x32xf32>
    %cst_107 = arith.constant dense<0.000000e+00> : vector<16xf32>
    %299 = vector.multi_reduction <add>, %298, %cst_107 [1] : vector<16x32xf32> to vector<16xf32>
    %300 = vector.shape_cast %299 : vector<16xf32> to vector<16x1xf32>
    %cst_108 = arith.constant 3.100000e+01 : f32
    %301 = vector.broadcast %cst_108 : f32 to vector<16x1xf32>
    %302 = arith.divf %300, %301 : vector<16x1xf32>
    %303 = vector.broadcast %290 : vector<1x32xf32> to vector<16x32xf32>
    %304 = arith.mulf %303, %297 : vector<16x32xf32>
    %305 = math.sqrt %302 : vector<16x1xf32>
    %cst_109 = arith.constant 9.99999997E-7 : f32
    %306 = vector.broadcast %cst_109 : f32 to vector<16x1xf32>
    %307 = arith.addf %305, %306 : vector<16x1xf32>
    %308 = vector.broadcast %307 : vector<16x1xf32> to vector<16x32xf32>
    %309 = arith.divf %304, %308 : vector<16x32xf32>
    %310 = vector.broadcast %291 : vector<1x32xf32> to vector<16x32xf32>
    %311 = arith.addf %309, %310 : vector<16x32xf32>
    %c0_110 = arith.constant 0 : index
    %c0_111 = arith.constant 0 : index
    %c0_112 = arith.constant 0 : index
    %312 = vector.load %arg14[%c0_110, %c0_111, %c0_112] : memref<2x32x64xf32, #tpu.memory_space<vmem>>, vector<1x32x64xf32>
    %313 = vector.shape_cast %312 : vector<1x32x64xf32> to vector<32x64xf32>
    %cst_113 = arith.constant dense<0.000000e+00> : vector<16x64xf32>
    %314 = tpu.matmul %311, %313, %cst_113 {dimension_numbers = #tpu.dot_dimension_numbers<[1], [0], [0], [1], [0, 0, 1, 1], [], []>} : vector<16x32xf32>, vector<32x64xf32>, vector<16x64xf32> -> vector<16x64xf32>
    %c0_114 = arith.constant 0 : index
    %c0_115 = arith.constant 0 : index
    %c0_116 = arith.constant 0 : index
    %315 = vector.load %arg15[%c0_114, %c0_115, %c0_116] : memref<2x1x64xf32, #tpu.memory_space<vmem>>, vector<1x1x64xf32>
    %316 = vector.shape_cast %315 : vector<1x1x64xf32> to vector<1x64xf32>
    %317 = vector.broadcast %316 : vector<1x64xf32> to vector<16x64xf32>
    %318 = arith.addf %314, %317 : vector<16x64xf32>
    %cst_117 = arith.constant 0.000000e+00 : f32
    %319 = vector.broadcast %cst_117 : f32 to vector<16x64xf32>
    %320 = arith.maximumf %318, %319 : vector<16x64xf32>
    %c0_118 = arith.constant 0 : index
    %c0_119 = arith.constant 0 : index
    %c0_120 = arith.constant 0 : index
    %321 = vector.load %arg16[%c0_118, %c0_119, %c0_120] : memref<2x64x32xf32, #tpu.memory_space<vmem>>, vector<1x64x32xf32>
    %322 = vector.shape_cast %321 : vector<1x64x32xf32> to vector<64x32xf32>
    %cst_121 = arith.constant dense<0.000000e+00> : vector<16x32xf32>
    %323 = tpu.matmul %320, %322, %cst_121 {dimension_numbers = #tpu.dot_dimension_numbers<[1], [0], [0], [1], [0, 0, 1, 1], [], []>} : vector<16x64xf32>, vector<64x32xf32>, vector<16x32xf32> -> vector<16x32xf32>
    %324 = arith.addf %289, %323 : vector<16x32xf32>
    %c0_122 = arith.constant 0 : index
    %c0_123 = arith.constant 0 : index
    %c0_124 = arith.constant 0 : index
    %325 = vector.load %arg17[%c0_122, %c0_123, %c0_124] : memref<2x1x32xf32, #tpu.memory_space<vmem>>, vector<1x1x32xf32>
    %326 = vector.shape_cast %325 : vector<1x1x32xf32> to vector<1x32xf32>
    %327 = vector.broadcast %326 : vector<1x32xf32> to vector<16x32xf32>
    %328 = arith.addf %324, %327 : vector<16x32xf32>
    %c1 = arith.constant 1 : index
    %c0_125 = arith.constant 0 : index
    %c0_126 = arith.constant 0 : index
    %329 = vector.load %arg18[%c1, %c0_125, %c0_126] : memref<2x3x32xf32, #tpu.memory_space<vmem>>, vector<1x3x32xf32>
    %330 = vector.shape_cast %329 : vector<1x3x32xf32> to vector<3x32xf32>
    %c1_127 = arith.constant 1 : index
    %c0_128 = arith.constant 0 : index
    %c0_129 = arith.constant 0 : index
    %331 = vector.load %arg19[%c1_127, %c0_128, %c0_129] : memref<2x3x32xf32, #tpu.memory_space<vmem>>, vector<1x3x32xf32>
    %332 = vector.shape_cast %331 : vector<1x3x32xf32> to vector<3x32xf32>
    %333 = vector.extract_strided_slice %330 {offsets = [0, 0], sizes = [1, 32], strides = [1, 1]} : vector<3x32xf32> to vector<1x32xf32>
    %334 = vector.extract_strided_slice %332 {offsets = [0, 0], sizes = [1, 32], strides = [1, 1]} : vector<3x32xf32> to vector<1x32xf32>
    %cst_130 = arith.constant dense<0.000000e+00> : vector<16xf32>
    %335 = vector.multi_reduction <add>, %328, %cst_130 [1] : vector<16x32xf32> to vector<16xf32>
    %336 = vector.shape_cast %335 : vector<16xf32> to vector<16x1xf32>
    %cst_131 = arith.constant 3.200000e+01 : f32
    %337 = vector.broadcast %cst_131 : f32 to vector<16x1xf32>
    %338 = arith.divf %336, %337 : vector<16x1xf32>
    %339 = vector.broadcast %338 : vector<16x1xf32> to vector<16x32xf32>
    %340 = arith.subf %328, %339 : vector<16x32xf32>
    %341 = arith.mulf %340, %340 : vector<16x32xf32>
    %cst_132 = arith.constant dense<0.000000e+00> : vector<16xf32>
    %342 = vector.multi_reduction <add>, %341, %cst_132 [1] : vector<16x32xf32> to vector<16xf32>
    %343 = vector.shape_cast %342 : vector<16xf32> to vector<16x1xf32>
    %cst_133 = arith.constant 3.100000e+01 : f32
    %344 = vector.broadcast %cst_133 : f32 to vector<16x1xf32>
    %345 = arith.divf %343, %344 : vector<16x1xf32>
    %346 = vector.broadcast %333 : vector<1x32xf32> to vector<16x32xf32>
    %347 = arith.mulf %346, %340 : vector<16x32xf32>
    %348 = math.sqrt %345 : vector<16x1xf32>
    %cst_134 = arith.constant 9.99999997E-7 : f32
    %349 = vector.broadcast %cst_134 : f32 to vector<16x1xf32>
    %350 = arith.addf %348, %349 : vector<16x1xf32>
    %351 = vector.broadcast %350 : vector<16x1xf32> to vector<16x32xf32>
    %352 = arith.divf %347, %351 : vector<16x32xf32>
    %353 = vector.broadcast %334 : vector<1x32xf32> to vector<16x32xf32>
    %354 = arith.addf %352, %353 : vector<16x32xf32>
    %c1_135 = arith.constant 1 : index
    %c0_136 = arith.constant 0 : index
    %c0_137 = arith.constant 0 : index
    %355 = vector.load %arg4[%c1_135, %c0_136, %c0_137] : memref<2x32x96xf32, #tpu.memory_space<vmem>>, vector<1x32x96xf32>
    %356 = vector.shape_cast %355 : vector<1x32x96xf32> to vector<32x96xf32>
    %cst_138 = arith.constant dense<0.000000e+00> : vector<16x96xf32>
    %357 = tpu.matmul %354, %356, %cst_138 {dimension_numbers = #tpu.dot_dimension_numbers<[1], [0], [0], [1], [0, 0, 1, 1], [], []>} : vector<16x32xf32>, vector<32x96xf32>, vector<16x96xf32> -> vector<16x96xf32>
    %c1_139 = arith.constant 1 : index
    %c0_140 = arith.constant 0 : index
    %c0_141 = arith.constant 0 : index
    %358 = vector.load %arg5[%c1_139, %c0_140, %c0_141] : memref<2x1x96xf32, #tpu.memory_space<vmem>>, vector<1x1x96xf32>
    %359 = vector.shape_cast %358 : vector<1x1x96xf32> to vector<1x96xf32>
    %360 = vector.broadcast %359 : vector<1x96xf32> to vector<16x96xf32>
    %361 = arith.addf %357, %360 : vector<16x96xf32>
    %362 = vector.extract_strided_slice %361 {offsets = [0, 0], sizes = [16, 32], strides = [1, 1]} : vector<16x96xf32> to vector<16x32xf32>
    %363 = vector.extract_strided_slice %361 {offsets = [0, 32], sizes = [16, 32], strides = [1, 1]} : vector<16x96xf32> to vector<16x32xf32>
    %364 = vector.extract_strided_slice %361 {offsets = [0, 64], sizes = [16, 32], strides = [1, 1]} : vector<16x96xf32> to vector<16x32xf32>
    %c1_142 = arith.constant 1 : index
    %c0_143 = arith.constant 0 : index
    %c0_144 = arith.constant 0 : index
    %365 = vector.load %arg6[%c1_142, %c0_143, %c0_144] : memref<2x32x32xf32, #tpu.memory_space<vmem>>, vector<1x32x32xf32>
    %366 = vector.shape_cast %365 : vector<1x32x32xf32> to vector<32x32xf32>
    %367 = vector.extract_strided_slice %362 {offsets = [0, 0], sizes = [16, 8], strides = [1, 1]} : vector<16x32xf32> to vector<16x8xf32>
    %368 = vector.shape_cast %367 : vector<16x8xf32> to vector<2x8x8xf32>
    %369 = vector.extract_strided_slice %363 {offsets = [0, 0], sizes = [16, 8], strides = [1, 1]} : vector<16x32xf32> to vector<16x8xf32>
    %370 = vector.shape_cast %369 : vector<16x8xf32> to vector<2x8x8xf32>
    %371 = vector.extract_strided_slice %364 {offsets = [0, 0], sizes = [16, 8], strides = [1, 1]} : vector<16x32xf32> to vector<16x8xf32>
    %372 = vector.shape_cast %371 : vector<16x8xf32> to vector<2x8x8xf32>
    "tpu.trace_start"() <{level = 10 : i32, message = "bqd,bkd->bqk"}> : () -> ()
    %cst_145 = arith.constant dense<0.000000e+00> : vector<2x8x8xf32>
    %373 = tpu.matmul %368, %370, %cst_145 {dimension_numbers = #tpu.dot_dimension_numbers<[2], [2], [1], [1], [0, 0, 0, 1, 1, 1], [0], [0]>} : vector<2x8x8xf32>, vector<2x8x8xf32>, vector<2x8x8xf32> -> vector<2x8x8xf32>
    "tpu.trace_stop"() : () -> ()
    %cst_146 = arith.constant 0.353553385 : f32
    %374 = vector.broadcast %cst_146 : f32 to vector<2x8x8xf32>
    %375 = arith.mulf %373, %374 : vector<2x8x8xf32>
    %376 = arith.addf %375, %2 : vector<2x8x8xf32>
    %cst_147 = arith.constant dense<0xFF800000> : vector<2x8xf32>
    %377 = vector.multi_reduction <maximumf>, %376, %cst_147 [2] : vector<2x8x8xf32> to vector<2x8xf32>
    %378 = vector.shape_cast %377 : vector<2x8xf32> to vector<2x8x1xf32>
    %379 = vector.broadcast %378 : vector<2x8x1xf32> to vector<2x8x8xf32>
    %380 = arith.subf %376, %379 : vector<2x8x8xf32>
    %381 = math.exp %380 : vector<2x8x8xf32>
    %cst_148 = arith.constant dense<0.000000e+00> : vector<2x8xf32>
    %382 = vector.multi_reduction <add>, %381, %cst_148 [2] : vector<2x8x8xf32> to vector<2x8xf32>
    %383 = vector.shape_cast %382 : vector<2x8xf32> to vector<2x8x1xf32>
    %384 = tpu.reciprocal %383 {approx = true} : vector<2x8x1xf32> -> vector<2x8x1xf32>
    %385 = vector.broadcast %384 : vector<2x8x1xf32> to vector<2x8x8xf32>
    %386 = arith.mulf %381, %385 : vector<2x8x8xf32>
    "tpu.trace_start"() <{level = 10 : i32, message = "bqk,bkd->bqd"}> : () -> ()
    %cst_149 = arith.constant dense<0.000000e+00> : vector<2x8x8xf32>
    %387 = tpu.matmul %386, %372, %cst_149 {dimension_numbers = #tpu.dot_dimension_numbers<[2], [1], [1], [2], [0, 0, 0, 1, 1, 2], [0], [0]>} : vector<2x8x8xf32>, vector<2x8x8xf32>, vector<2x8x8xf32> -> vector<2x8x8xf32>
    "tpu.trace_stop"() : () -> ()
    %388 = vector.shape_cast %387 : vector<2x8x8xf32> to vector<16x8xf32>
    %389 = vector.extract_strided_slice %366 {offsets = [0, 0], sizes = [8, 32], strides = [1, 1]} : vector<32x32xf32> to vector<8x32xf32>
    %cst_150 = arith.constant dense<0.000000e+00> : vector<16x32xf32>
    %390 = tpu.matmul %388, %389, %cst_150 {dimension_numbers = #tpu.dot_dimension_numbers<[1], [0], [0], [1], [0, 0, 1, 1], [], []>} : vector<16x8xf32>, vector<8x32xf32>, vector<16x32xf32> -> vector<16x32xf32>
    %391 = vector.extract_strided_slice %362 {offsets = [0, 8], sizes = [16, 8], strides = [1, 1]} : vector<16x32xf32> to vector<16x8xf32>
    %392 = vector.shape_cast %391 : vector<16x8xf32> to vector<2x8x8xf32>
    %393 = vector.extract_strided_slice %363 {offsets = [0, 8], sizes = [16, 8], strides = [1, 1]} : vector<16x32xf32> to vector<16x8xf32>
    %394 = vector.shape_cast %393 : vector<16x8xf32> to vector<2x8x8xf32>
    %395 = vector.extract_strided_slice %364 {offsets = [0, 8], sizes = [16, 8], strides = [1, 1]} : vector<16x32xf32> to vector<16x8xf32>
    %396 = vector.shape_cast %395 : vector<16x8xf32> to vector<2x8x8xf32>
    "tpu.trace_start"() <{level = 10 : i32, message = "bqd,bkd->bqk"}> : () -> ()
    %cst_151 = arith.constant dense<0.000000e+00> : vector<2x8x8xf32>
    %397 = tpu.matmul %392, %394, %cst_151 {dimension_numbers = #tpu.dot_dimension_numbers<[2], [2], [1], [1], [0, 0, 0, 1, 1, 1], [0], [0]>} : vector<2x8x8xf32>, vector<2x8x8xf32>, vector<2x8x8xf32> -> vector<2x8x8xf32>
    "tpu.trace_stop"() : () -> ()
    %cst_152 = arith.constant 0.353553385 : f32
    %398 = vector.broadcast %cst_152 : f32 to vector<2x8x8xf32>
    %399 = arith.mulf %397, %398 : vector<2x8x8xf32>
    %400 = arith.addf %399, %2 : vector<2x8x8xf32>
    %cst_153 = arith.constant dense<0xFF800000> : vector<2x8xf32>
    %401 = vector.multi_reduction <maximumf>, %400, %cst_153 [2] : vector<2x8x8xf32> to vector<2x8xf32>
    %402 = vector.shape_cast %401 : vector<2x8xf32> to vector<2x8x1xf32>
    %403 = vector.broadcast %402 : vector<2x8x1xf32> to vector<2x8x8xf32>
    %404 = arith.subf %400, %403 : vector<2x8x8xf32>
    %405 = math.exp %404 : vector<2x8x8xf32>
    %cst_154 = arith.constant dense<0.000000e+00> : vector<2x8xf32>
    %406 = vector.multi_reduction <add>, %405, %cst_154 [2] : vector<2x8x8xf32> to vector<2x8xf32>
    %407 = vector.shape_cast %406 : vector<2x8xf32> to vector<2x8x1xf32>
    %408 = tpu.reciprocal %407 {approx = true} : vector<2x8x1xf32> -> vector<2x8x1xf32>
    %409 = vector.broadcast %408 : vector<2x8x1xf32> to vector<2x8x8xf32>
    %410 = arith.mulf %405, %409 : vector<2x8x8xf32>
    "tpu.trace_start"() <{level = 10 : i32, message = "bqk,bkd->bqd"}> : () -> ()
    %cst_155 = arith.constant dense<0.000000e+00> : vector<2x8x8xf32>
    %411 = tpu.matmul %410, %396, %cst_155 {dimension_numbers = #tpu.dot_dimension_numbers<[2], [1], [1], [2], [0, 0, 0, 1, 1, 2], [0], [0]>} : vector<2x8x8xf32>, vector<2x8x8xf32>, vector<2x8x8xf32> -> vector<2x8x8xf32>
    "tpu.trace_stop"() : () -> ()
    %412 = vector.shape_cast %411 : vector<2x8x8xf32> to vector<16x8xf32>
    %413 = vector.extract_strided_slice %366 {offsets = [8, 0], sizes = [8, 32], strides = [1, 1]} : vector<32x32xf32> to vector<8x32xf32>
    %cst_156 = arith.constant dense<0.000000e+00> : vector<16x32xf32>
    %414 = tpu.matmul %412, %413, %cst_156 {dimension_numbers = #tpu.dot_dimension_numbers<[1], [0], [0], [1], [0, 0, 1, 1], [], []>} : vector<16x8xf32>, vector<8x32xf32>, vector<16x32xf32> -> vector<16x32xf32>
    %415 = arith.addf %390, %414 : vector<16x32xf32>
    %416 = vector.extract_strided_slice %362 {offsets = [0, 16], sizes = [16, 8], strides = [1, 1]} : vector<16x32xf32> to vector<16x8xf32>
    %417 = vector.shape_cast %416 : vector<16x8xf32> to vector<2x8x8xf32>
    %418 = vector.extract_strided_slice %363 {offsets = [0, 16], sizes = [16, 8], strides = [1, 1]} : vector<16x32xf32> to vector<16x8xf32>
    %419 = vector.shape_cast %418 : vector<16x8xf32> to vector<2x8x8xf32>
    %420 = vector.extract_strided_slice %364 {offsets = [0, 16], sizes = [16, 8], strides = [1, 1]} : vector<16x32xf32> to vector<16x8xf32>
    %421 = vector.shape_cast %420 : vector<16x8xf32> to vector<2x8x8xf32>
    "tpu.trace_start"() <{level = 10 : i32, message = "bqd,bkd->bqk"}> : () -> ()
    %cst_157 = arith.constant dense<0.000000e+00> : vector<2x8x8xf32>
    %422 = tpu.matmul %417, %419, %cst_157 {dimension_numbers = #tpu.dot_dimension_numbers<[2], [2], [1], [1], [0, 0, 0, 1, 1, 1], [0], [0]>} : vector<2x8x8xf32>, vector<2x8x8xf32>, vector<2x8x8xf32> -> vector<2x8x8xf32>
    "tpu.trace_stop"() : () -> ()
    %cst_158 = arith.constant 0.353553385 : f32
    %423 = vector.broadcast %cst_158 : f32 to vector<2x8x8xf32>
    %424 = arith.mulf %422, %423 : vector<2x8x8xf32>
    %425 = arith.addf %424, %2 : vector<2x8x8xf32>
    %cst_159 = arith.constant dense<0xFF800000> : vector<2x8xf32>
    %426 = vector.multi_reduction <maximumf>, %425, %cst_159 [2] : vector<2x8x8xf32> to vector<2x8xf32>
    %427 = vector.shape_cast %426 : vector<2x8xf32> to vector<2x8x1xf32>
    %428 = vector.broadcast %427 : vector<2x8x1xf32> to vector<2x8x8xf32>
    %429 = arith.subf %425, %428 : vector<2x8x8xf32>
    %430 = math.exp %429 : vector<2x8x8xf32>
    %cst_160 = arith.constant dense<0.000000e+00> : vector<2x8xf32>
    %431 = vector.multi_reduction <add>, %430, %cst_160 [2] : vector<2x8x8xf32> to vector<2x8xf32>
    %432 = vector.shape_cast %431 : vector<2x8xf32> to vector<2x8x1xf32>
    %433 = tpu.reciprocal %432 {approx = true} : vector<2x8x1xf32> -> vector<2x8x1xf32>
    %434 = vector.broadcast %433 : vector<2x8x1xf32> to vector<2x8x8xf32>
    %435 = arith.mulf %430, %434 : vector<2x8x8xf32>
    "tpu.trace_start"() <{level = 10 : i32, message = "bqk,bkd->bqd"}> : () -> ()
    %cst_161 = arith.constant dense<0.000000e+00> : vector<2x8x8xf32>
    %436 = tpu.matmul %435, %421, %cst_161 {dimension_numbers = #tpu.dot_dimension_numbers<[2], [1], [1], [2], [0, 0, 0, 1, 1, 2], [0], [0]>} : vector<2x8x8xf32>, vector<2x8x8xf32>, vector<2x8x8xf32> -> vector<2x8x8xf32>
    "tpu.trace_stop"() : () -> ()
    %437 = vector.shape_cast %436 : vector<2x8x8xf32> to vector<16x8xf32>
    %438 = vector.extract_strided_slice %366 {offsets = [16, 0], sizes = [8, 32], strides = [1, 1]} : vector<32x32xf32> to vector<8x32xf32>
    %cst_162 = arith.constant dense<0.000000e+00> : vector<16x32xf32>
    %439 = tpu.matmul %437, %438, %cst_162 {dimension_numbers = #tpu.dot_dimension_numbers<[1], [0], [0], [1], [0, 0, 1, 1], [], []>} : vector<16x8xf32>, vector<8x32xf32>, vector<16x32xf32> -> vector<16x32xf32>
    %440 = arith.addf %415, %439 : vector<16x32xf32>
    %441 = vector.extract_strided_slice %362 {offsets = [0, 24], sizes = [16, 8], strides = [1, 1]} : vector<16x32xf32> to vector<16x8xf32>
    %442 = vector.shape_cast %441 : vector<16x8xf32> to vector<2x8x8xf32>
    %443 = vector.extract_strided_slice %363 {offsets = [0, 24], sizes = [16, 8], strides = [1, 1]} : vector<16x32xf32> to vector<16x8xf32>
    %444 = vector.shape_cast %443 : vector<16x8xf32> to vector<2x8x8xf32>
    %445 = vector.extract_strided_slice %364 {offsets = [0, 24], sizes = [16, 8], strides = [1, 1]} : vector<16x32xf32> to vector<16x8xf32>
    %446 = vector.shape_cast %445 : vector<16x8xf32> to vector<2x8x8xf32>
    "tpu.trace_start"() <{level = 10 : i32, message = "bqd,bkd->bqk"}> : () -> ()
    %cst_163 = arith.constant dense<0.000000e+00> : vector<2x8x8xf32>
    %447 = tpu.matmul %442, %444, %cst_163 {dimension_numbers = #tpu.dot_dimension_numbers<[2], [2], [1], [1], [0, 0, 0, 1, 1, 1], [0], [0]>} : vector<2x8x8xf32>, vector<2x8x8xf32>, vector<2x8x8xf32> -> vector<2x8x8xf32>
    "tpu.trace_stop"() : () -> ()
    %cst_164 = arith.constant 0.353553385 : f32
    %448 = vector.broadcast %cst_164 : f32 to vector<2x8x8xf32>
    %449 = arith.mulf %447, %448 : vector<2x8x8xf32>
    %450 = arith.addf %449, %2 : vector<2x8x8xf32>
    %cst_165 = arith.constant dense<0xFF800000> : vector<2x8xf32>
    %451 = vector.multi_reduction <maximumf>, %450, %cst_165 [2] : vector<2x8x8xf32> to vector<2x8xf32>
    %452 = vector.shape_cast %451 : vector<2x8xf32> to vector<2x8x1xf32>
    %453 = vector.broadcast %452 : vector<2x8x1xf32> to vector<2x8x8xf32>
    %454 = arith.subf %450, %453 : vector<2x8x8xf32>
    %455 = math.exp %454 : vector<2x8x8xf32>
    %cst_166 = arith.constant dense<0.000000e+00> : vector<2x8xf32>
    %456 = vector.multi_reduction <add>, %455, %cst_166 [2] : vector<2x8x8xf32> to vector<2x8xf32>
    %457 = vector.shape_cast %456 : vector<2x8xf32> to vector<2x8x1xf32>
    %458 = tpu.reciprocal %457 {approx = true} : vector<2x8x1xf32> -> vector<2x8x1xf32>
    %459 = vector.broadcast %458 : vector<2x8x1xf32> to vector<2x8x8xf32>
    %460 = arith.mulf %455, %459 : vector<2x8x8xf32>
    "tpu.trace_start"() <{level = 10 : i32, message = "bqk,bkd->bqd"}> : () -> ()
    %cst_167 = arith.constant dense<0.000000e+00> : vector<2x8x8xf32>
    %461 = tpu.matmul %460, %446, %cst_167 {dimension_numbers = #tpu.dot_dimension_numbers<[2], [1], [1], [2], [0, 0, 0, 1, 1, 2], [0], [0]>} : vector<2x8x8xf32>, vector<2x8x8xf32>, vector<2x8x8xf32> -> vector<2x8x8xf32>
    "tpu.trace_stop"() : () -> ()
    %462 = vector.shape_cast %461 : vector<2x8x8xf32> to vector<16x8xf32>
    %463 = vector.extract_strided_slice %366 {offsets = [24, 0], sizes = [8, 32], strides = [1, 1]} : vector<32x32xf32> to vector<8x32xf32>
    %cst_168 = arith.constant dense<0.000000e+00> : vector<16x32xf32>
    %464 = tpu.matmul %462, %463, %cst_168 {dimension_numbers = #tpu.dot_dimension_numbers<[1], [0], [0], [1], [0, 0, 1, 1], [], []>} : vector<16x8xf32>, vector<8x32xf32>, vector<16x32xf32> -> vector<16x32xf32>
    %465 = arith.addf %440, %464 : vector<16x32xf32>
    %c1_169 = arith.constant 1 : index
    %c0_170 = arith.constant 0 : index
    %c0_171 = arith.constant 0 : index
    %466 = vector.load %arg7[%c1_169, %c0_170, %c0_171] : memref<2x1x32xf32, #tpu.memory_space<vmem>>, vector<1x1x32xf32>
    %467 = vector.shape_cast %466 : vector<1x1x32xf32> to vector<1x32xf32>
    %468 = vector.broadcast %467 : vector<1x32xf32> to vector<16x32xf32>
    %469 = arith.addf %465, %468 : vector<16x32xf32>
    %470 = arith.addf %328, %469 : vector<16x32xf32>
    %471 = vector.extract_strided_slice %330 {offsets = [1, 0], sizes = [1, 32], strides = [1, 1]} : vector<3x32xf32> to vector<1x32xf32>
    %472 = vector.extract_strided_slice %332 {offsets = [1, 0], sizes = [1, 32], strides = [1, 1]} : vector<3x32xf32> to vector<1x32xf32>
    %cst_172 = arith.constant dense<0.000000e+00> : vector<16xf32>
    %473 = vector.multi_reduction <add>, %470, %cst_172 [1] : vector<16x32xf32> to vector<16xf32>
    %474 = vector.shape_cast %473 : vector<16xf32> to vector<16x1xf32>
    %cst_173 = arith.constant 3.200000e+01 : f32
    %475 = vector.broadcast %cst_173 : f32 to vector<16x1xf32>
    %476 = arith.divf %474, %475 : vector<16x1xf32>
    %477 = vector.broadcast %476 : vector<16x1xf32> to vector<16x32xf32>
    %478 = arith.subf %470, %477 : vector<16x32xf32>
    %479 = arith.mulf %478, %478 : vector<16x32xf32>
    %cst_174 = arith.constant dense<0.000000e+00> : vector<16xf32>
    %480 = vector.multi_reduction <add>, %479, %cst_174 [1] : vector<16x32xf32> to vector<16xf32>
    %481 = vector.shape_cast %480 : vector<16xf32> to vector<16x1xf32>
    %cst_175 = arith.constant 3.100000e+01 : f32
    %482 = vector.broadcast %cst_175 : f32 to vector<16x1xf32>
    %483 = arith.divf %481, %482 : vector<16x1xf32>
    %484 = vector.broadcast %471 : vector<1x32xf32> to vector<16x32xf32>
    %485 = arith.mulf %484, %478 : vector<16x32xf32>
    %486 = math.sqrt %483 : vector<16x1xf32>
    %cst_176 = arith.constant 9.99999997E-7 : f32
    %487 = vector.broadcast %cst_176 : f32 to vector<16x1xf32>
    %488 = arith.addf %486, %487 : vector<16x1xf32>
    %489 = vector.broadcast %488 : vector<16x1xf32> to vector<16x32xf32>
    %490 = arith.divf %485, %489 : vector<16x32xf32>
    %491 = vector.broadcast %472 : vector<1x32xf32> to vector<16x32xf32>
    %492 = arith.addf %490, %491 : vector<16x32xf32>
    %c1_177 = arith.constant 1 : index
    %c0_178 = arith.constant 0 : index
    %c0_179 = arith.constant 0 : index
    %493 = vector.load %arg8[%c1_177, %c0_178, %c0_179] : memref<2x32x32xf32, #tpu.memory_space<vmem>>, vector<1x32x32xf32>
    %494 = vector.shape_cast %493 : vector<1x32x32xf32> to vector<32x32xf32>
    %cst_180 = arith.constant dense<0.000000e+00> : vector<16x32xf32>
    %495 = tpu.matmul %492, %494, %cst_180 {dimension_numbers = #tpu.dot_dimension_numbers<[1], [0], [0], [1], [0, 0, 1, 1], [], []>} : vector<16x32xf32>, vector<32x32xf32>, vector<16x32xf32> -> vector<16x32xf32>
    %c1_181 = arith.constant 1 : index
    %c0_182 = arith.constant 0 : index
    %c0_183 = arith.constant 0 : index
    %496 = vector.load %arg9[%c1_181, %c0_182, %c0_183] : memref<2x1x32xf32, #tpu.memory_space<vmem>>, vector<1x1x32xf32>
    %497 = vector.shape_cast %496 : vector<1x1x32xf32> to vector<1x32xf32>
    %498 = vector.broadcast %497 : vector<1x32xf32> to vector<16x32xf32>
    %499 = arith.addf %495, %498 : vector<16x32xf32>
    %c1_184 = arith.constant 1 : index
    %c0_185 = arith.constant 0 : index
    %c0_186 = arith.constant 0 : index
    %500 = vector.load %arg10[%c1_184, %c0_185, %c0_186] : memref<2x32x64xf32, #tpu.memory_space<vmem>>, vector<1x32x64xf32>
    %501 = vector.shape_cast %500 : vector<1x32x64xf32> to vector<32x64xf32>
    %cst_187 = arith.constant dense<0.000000e+00> : vector<16x64xf32>
    %502 = tpu.matmul %1, %501, %cst_187 {dimension_numbers = #tpu.dot_dimension_numbers<[1], [0], [0], [1], [0, 0, 1, 1], [], []>} : vector<16x32xf32>, vector<32x64xf32>, vector<16x64xf32> -> vector<16x64xf32>
    %c1_188 = arith.constant 1 : index
    %c0_189 = arith.constant 0 : index
    %c0_190 = arith.constant 0 : index
    %503 = vector.load %arg11[%c1_188, %c0_189, %c0_190] : memref<2x1x64xf32, #tpu.memory_space<vmem>>, vector<1x1x64xf32>
    %504 = vector.shape_cast %503 : vector<1x1x64xf32> to vector<1x64xf32>
    %505 = vector.broadcast %504 : vector<1x64xf32> to vector<16x64xf32>
    %506 = arith.addf %502, %505 : vector<16x64xf32>
    %507 = vector.extract_strided_slice %506 {offsets = [0, 0], sizes = [16, 32], strides = [1, 1]} : vector<16x64xf32> to vector<16x32xf32>
    %508 = vector.extract_strided_slice %506 {offsets = [0, 32], sizes = [16, 32], strides = [1, 1]} : vector<16x64xf32> to vector<16x32xf32>
    %c1_191 = arith.constant 1 : index
    %c0_192 = arith.constant 0 : index
    %c0_193 = arith.constant 0 : index
    %509 = vector.load %arg12[%c1_191, %c0_192, %c0_193] : memref<2x32x32xf32, #tpu.memory_space<vmem>>, vector<1x32x32xf32>
    %510 = vector.shape_cast %509 : vector<1x32x32xf32> to vector<32x32xf32>
    %511 = vector.extract_strided_slice %499 {offsets = [0, 0], sizes = [16, 8], strides = [1, 1]} : vector<16x32xf32> to vector<16x8xf32>
    %512 = vector.shape_cast %511 : vector<16x8xf32> to vector<2x8x8xf32>
    %513 = vector.extract_strided_slice %507 {offsets = [0, 0], sizes = [16, 8], strides = [1, 1]} : vector<16x32xf32> to vector<16x8xf32>
    %514 = vector.shape_cast %513 : vector<16x8xf32> to vector<2x8x8xf32>
    %515 = vector.extract_strided_slice %508 {offsets = [0, 0], sizes = [16, 8], strides = [1, 1]} : vector<16x32xf32> to vector<16x8xf32>
    %516 = vector.shape_cast %515 : vector<16x8xf32> to vector<2x8x8xf32>
    "tpu.trace_start"() <{level = 10 : i32, message = "bqd,bkd->bqk"}> : () -> ()
    %cst_194 = arith.constant dense<0.000000e+00> : vector<2x8x8xf32>
    %517 = tpu.matmul %512, %514, %cst_194 {dimension_numbers = #tpu.dot_dimension_numbers<[2], [2], [1], [1], [0, 0, 0, 1, 1, 1], [0], [0]>} : vector<2x8x8xf32>, vector<2x8x8xf32>, vector<2x8x8xf32> -> vector<2x8x8xf32>
    "tpu.trace_stop"() : () -> ()
    %cst_195 = arith.constant 0.353553385 : f32
    %518 = vector.broadcast %cst_195 : f32 to vector<2x8x8xf32>
    %519 = arith.mulf %517, %518 : vector<2x8x8xf32>
    %520 = arith.addf %519, %3 : vector<2x8x8xf32>
    %cst_196 = arith.constant dense<0xFF800000> : vector<2x8xf32>
    %521 = vector.multi_reduction <maximumf>, %520, %cst_196 [2] : vector<2x8x8xf32> to vector<2x8xf32>
    %522 = vector.shape_cast %521 : vector<2x8xf32> to vector<2x8x1xf32>
    %523 = vector.broadcast %522 : vector<2x8x1xf32> to vector<2x8x8xf32>
    %524 = arith.subf %520, %523 : vector<2x8x8xf32>
    %525 = math.exp %524 : vector<2x8x8xf32>
    %cst_197 = arith.constant dense<0.000000e+00> : vector<2x8xf32>
    %526 = vector.multi_reduction <add>, %525, %cst_197 [2] : vector<2x8x8xf32> to vector<2x8xf32>
    %527 = vector.shape_cast %526 : vector<2x8xf32> to vector<2x8x1xf32>
    %528 = tpu.reciprocal %527 {approx = true} : vector<2x8x1xf32> -> vector<2x8x1xf32>
    %529 = vector.broadcast %528 : vector<2x8x1xf32> to vector<2x8x8xf32>
    %530 = arith.mulf %525, %529 : vector<2x8x8xf32>
    "tpu.trace_start"() <{level = 10 : i32, message = "bqk,bkd->bqd"}> : () -> ()
    %cst_198 = arith.constant dense<0.000000e+00> : vector<2x8x8xf32>
    %531 = tpu.matmul %530, %516, %cst_198 {dimension_numbers = #tpu.dot_dimension_numbers<[2], [1], [1], [2], [0, 0, 0, 1, 1, 2], [0], [0]>} : vector<2x8x8xf32>, vector<2x8x8xf32>, vector<2x8x8xf32> -> vector<2x8x8xf32>
    "tpu.trace_stop"() : () -> ()
    %532 = vector.shape_cast %531 : vector<2x8x8xf32> to vector<16x8xf32>
    %533 = vector.extract_strided_slice %510 {offsets = [0, 0], sizes = [8, 32], strides = [1, 1]} : vector<32x32xf32> to vector<8x32xf32>
    %cst_199 = arith.constant dense<0.000000e+00> : vector<16x32xf32>
    %534 = tpu.matmul %532, %533, %cst_199 {dimension_numbers = #tpu.dot_dimension_numbers<[1], [0], [0], [1], [0, 0, 1, 1], [], []>} : vector<16x8xf32>, vector<8x32xf32>, vector<16x32xf32> -> vector<16x32xf32>
    %535 = vector.extract_strided_slice %499 {offsets = [0, 8], sizes = [16, 8], strides = [1, 1]} : vector<16x32xf32> to vector<16x8xf32>
    %536 = vector.shape_cast %535 : vector<16x8xf32> to vector<2x8x8xf32>
    %537 = vector.extract_strided_slice %507 {offsets = [0, 8], sizes = [16, 8], strides = [1, 1]} : vector<16x32xf32> to vector<16x8xf32>
    %538 = vector.shape_cast %537 : vector<16x8xf32> to vector<2x8x8xf32>
    %539 = vector.extract_strided_slice %508 {offsets = [0, 8], sizes = [16, 8], strides = [1, 1]} : vector<16x32xf32> to vector<16x8xf32>
    %540 = vector.shape_cast %539 : vector<16x8xf32> to vector<2x8x8xf32>
    "tpu.trace_start"() <{level = 10 : i32, message = "bqd,bkd->bqk"}> : () -> ()
    %cst_200 = arith.constant dense<0.000000e+00> : vector<2x8x8xf32>
    %541 = tpu.matmul %536, %538, %cst_200 {dimension_numbers = #tpu.dot_dimension_numbers<[2], [2], [1], [1], [0, 0, 0, 1, 1, 1], [0], [0]>} : vector<2x8x8xf32>, vector<2x8x8xf32>, vector<2x8x8xf32> -> vector<2x8x8xf32>
    "tpu.trace_stop"() : () -> ()
    %cst_201 = arith.constant 0.353553385 : f32
    %542 = vector.broadcast %cst_201 : f32 to vector<2x8x8xf32>
    %543 = arith.mulf %541, %542 : vector<2x8x8xf32>
    %544 = arith.addf %543, %3 : vector<2x8x8xf32>
    %cst_202 = arith.constant dense<0xFF800000> : vector<2x8xf32>
    %545 = vector.multi_reduction <maximumf>, %544, %cst_202 [2] : vector<2x8x8xf32> to vector<2x8xf32>
    %546 = vector.shape_cast %545 : vector<2x8xf32> to vector<2x8x1xf32>
    %547 = vector.broadcast %546 : vector<2x8x1xf32> to vector<2x8x8xf32>
    %548 = arith.subf %544, %547 : vector<2x8x8xf32>
    %549 = math.exp %548 : vector<2x8x8xf32>
    %cst_203 = arith.constant dense<0.000000e+00> : vector<2x8xf32>
    %550 = vector.multi_reduction <add>, %549, %cst_203 [2] : vector<2x8x8xf32> to vector<2x8xf32>
    %551 = vector.shape_cast %550 : vector<2x8xf32> to vector<2x8x1xf32>
    %552 = tpu.reciprocal %551 {approx = true} : vector<2x8x1xf32> -> vector<2x8x1xf32>
    %553 = vector.broadcast %552 : vector<2x8x1xf32> to vector<2x8x8xf32>
    %554 = arith.mulf %549, %553 : vector<2x8x8xf32>
    "tpu.trace_start"() <{level = 10 : i32, message = "bqk,bkd->bqd"}> : () -> ()
    %cst_204 = arith.constant dense<0.000000e+00> : vector<2x8x8xf32>
    %555 = tpu.matmul %554, %540, %cst_204 {dimension_numbers = #tpu.dot_dimension_numbers<[2], [1], [1], [2], [0, 0, 0, 1, 1, 2], [0], [0]>} : vector<2x8x8xf32>, vector<2x8x8xf32>, vector<2x8x8xf32> -> vector<2x8x8xf32>
    "tpu.trace_stop"() : () -> ()
    %556 = vector.shape_cast %555 : vector<2x8x8xf32> to vector<16x8xf32>
    %557 = vector.extract_strided_slice %510 {offsets = [8, 0], sizes = [8, 32], strides = [1, 1]} : vector<32x32xf32> to vector<8x32xf32>
    %cst_205 = arith.constant dense<0.000000e+00> : vector<16x32xf32>
    %558 = tpu.matmul %556, %557, %cst_205 {dimension_numbers = #tpu.dot_dimension_numbers<[1], [0], [0], [1], [0, 0, 1, 1], [], []>} : vector<16x8xf32>, vector<8x32xf32>, vector<16x32xf32> -> vector<16x32xf32>
    %559 = arith.addf %534, %558 : vector<16x32xf32>
    %560 = vector.extract_strided_slice %499 {offsets = [0, 16], sizes = [16, 8], strides = [1, 1]} : vector<16x32xf32> to vector<16x8xf32>
    %561 = vector.shape_cast %560 : vector<16x8xf32> to vector<2x8x8xf32>
    %562 = vector.extract_strided_slice %507 {offsets = [0, 16], sizes = [16, 8], strides = [1, 1]} : vector<16x32xf32> to vector<16x8xf32>
    %563 = vector.shape_cast %562 : vector<16x8xf32> to vector<2x8x8xf32>
    %564 = vector.extract_strided_slice %508 {offsets = [0, 16], sizes = [16, 8], strides = [1, 1]} : vector<16x32xf32> to vector<16x8xf32>
    %565 = vector.shape_cast %564 : vector<16x8xf32> to vector<2x8x8xf32>
    "tpu.trace_start"() <{level = 10 : i32, message = "bqd,bkd->bqk"}> : () -> ()
    %cst_206 = arith.constant dense<0.000000e+00> : vector<2x8x8xf32>
    %566 = tpu.matmul %561, %563, %cst_206 {dimension_numbers = #tpu.dot_dimension_numbers<[2], [2], [1], [1], [0, 0, 0, 1, 1, 1], [0], [0]>} : vector<2x8x8xf32>, vector<2x8x8xf32>, vector<2x8x8xf32> -> vector<2x8x8xf32>
    "tpu.trace_stop"() : () -> ()
    %cst_207 = arith.constant 0.353553385 : f32
    %567 = vector.broadcast %cst_207 : f32 to vector<2x8x8xf32>
    %568 = arith.mulf %566, %567 : vector<2x8x8xf32>
    %569 = arith.addf %568, %3 : vector<2x8x8xf32>
    %cst_208 = arith.constant dense<0xFF800000> : vector<2x8xf32>
    %570 = vector.multi_reduction <maximumf>, %569, %cst_208 [2] : vector<2x8x8xf32> to vector<2x8xf32>
    %571 = vector.shape_cast %570 : vector<2x8xf32> to vector<2x8x1xf32>
    %572 = vector.broadcast %571 : vector<2x8x1xf32> to vector<2x8x8xf32>
    %573 = arith.subf %569, %572 : vector<2x8x8xf32>
    %574 = math.exp %573 : vector<2x8x8xf32>
    %cst_209 = arith.constant dense<0.000000e+00> : vector<2x8xf32>
    %575 = vector.multi_reduction <add>, %574, %cst_209 [2] : vector<2x8x8xf32> to vector<2x8xf32>
    %576 = vector.shape_cast %575 : vector<2x8xf32> to vector<2x8x1xf32>
    %577 = tpu.reciprocal %576 {approx = true} : vector<2x8x1xf32> -> vector<2x8x1xf32>
    %578 = vector.broadcast %577 : vector<2x8x1xf32> to vector<2x8x8xf32>
    %579 = arith.mulf %574, %578 : vector<2x8x8xf32>
    "tpu.trace_start"() <{level = 10 : i32, message = "bqk,bkd->bqd"}> : () -> ()
    %cst_210 = arith.constant dense<0.000000e+00> : vector<2x8x8xf32>
    %580 = tpu.matmul %579, %565, %cst_210 {dimension_numbers = #tpu.dot_dimension_numbers<[2], [1], [1], [2], [0, 0, 0, 1, 1, 2], [0], [0]>} : vector<2x8x8xf32>, vector<2x8x8xf32>, vector<2x8x8xf32> -> vector<2x8x8xf32>
    "tpu.trace_stop"() : () -> ()
    %581 = vector.shape_cast %580 : vector<2x8x8xf32> to vector<16x8xf32>
    %582 = vector.extract_strided_slice %510 {offsets = [16, 0], sizes = [8, 32], strides = [1, 1]} : vector<32x32xf32> to vector<8x32xf32>
    %cst_211 = arith.constant dense<0.000000e+00> : vector<16x32xf32>
    %583 = tpu.matmul %581, %582, %cst_211 {dimension_numbers = #tpu.dot_dimension_numbers<[1], [0], [0], [1], [0, 0, 1, 1], [], []>} : vector<16x8xf32>, vector<8x32xf32>, vector<16x32xf32> -> vector<16x32xf32>
    %584 = arith.addf %559, %583 : vector<16x32xf32>
    %585 = vector.extract_strided_slice %499 {offsets = [0, 24], sizes = [16, 8], strides = [1, 1]} : vector<16x32xf32> to vector<16x8xf32>
    %586 = vector.shape_cast %585 : vector<16x8xf32> to vector<2x8x8xf32>
    %587 = vector.extract_strided_slice %507 {offsets = [0, 24], sizes = [16, 8], strides = [1, 1]} : vector<16x32xf32> to vector<16x8xf32>
    %588 = vector.shape_cast %587 : vector<16x8xf32> to vector<2x8x8xf32>
    %589 = vector.extract_strided_slice %508 {offsets = [0, 24], sizes = [16, 8], strides = [1, 1]} : vector<16x32xf32> to vector<16x8xf32>
    %590 = vector.shape_cast %589 : vector<16x8xf32> to vector<2x8x8xf32>
    "tpu.trace_start"() <{level = 10 : i32, message = "bqd,bkd->bqk"}> : () -> ()
    %cst_212 = arith.constant dense<0.000000e+00> : vector<2x8x8xf32>
    %591 = tpu.matmul %586, %588, %cst_212 {dimension_numbers = #tpu.dot_dimension_numbers<[2], [2], [1], [1], [0, 0, 0, 1, 1, 1], [0], [0]>} : vector<2x8x8xf32>, vector<2x8x8xf32>, vector<2x8x8xf32> -> vector<2x8x8xf32>
    "tpu.trace_stop"() : () -> ()
    %cst_213 = arith.constant 0.353553385 : f32
    %592 = vector.broadcast %cst_213 : f32 to vector<2x8x8xf32>
    %593 = arith.mulf %591, %592 : vector<2x8x8xf32>
    %594 = arith.addf %593, %3 : vector<2x8x8xf32>
    %cst_214 = arith.constant dense<0xFF800000> : vector<2x8xf32>
    %595 = vector.multi_reduction <maximumf>, %594, %cst_214 [2] : vector<2x8x8xf32> to vector<2x8xf32>
    %596 = vector.shape_cast %595 : vector<2x8xf32> to vector<2x8x1xf32>
    %597 = vector.broadcast %596 : vector<2x8x1xf32> to vector<2x8x8xf32>
    %598 = arith.subf %594, %597 : vector<2x8x8xf32>
    %599 = math.exp %598 : vector<2x8x8xf32>
    %cst_215 = arith.constant dense<0.000000e+00> : vector<2x8xf32>
    %600 = vector.multi_reduction <add>, %599, %cst_215 [2] : vector<2x8x8xf32> to vector<2x8xf32>
    %601 = vector.shape_cast %600 : vector<2x8xf32> to vector<2x8x1xf32>
    %602 = tpu.reciprocal %601 {approx = true} : vector<2x8x1xf32> -> vector<2x8x1xf32>
    %603 = vector.broadcast %602 : vector<2x8x1xf32> to vector<2x8x8xf32>
    %604 = arith.mulf %599, %603 : vector<2x8x8xf32>
    "tpu.trace_start"() <{level = 10 : i32, message = "bqk,bkd->bqd"}> : () -> ()
    %cst_216 = arith.constant dense<0.000000e+00> : vector<2x8x8xf32>
    %605 = tpu.matmul %604, %590, %cst_216 {dimension_numbers = #tpu.dot_dimension_numbers<[2], [1], [1], [2], [0, 0, 0, 1, 1, 2], [0], [0]>} : vector<2x8x8xf32>, vector<2x8x8xf32>, vector<2x8x8xf32> -> vector<2x8x8xf32>
    "tpu.trace_stop"() : () -> ()
    %606 = vector.shape_cast %605 : vector<2x8x8xf32> to vector<16x8xf32>
    %607 = vector.extract_strided_slice %510 {offsets = [24, 0], sizes = [8, 32], strides = [1, 1]} : vector<32x32xf32> to vector<8x32xf32>
    %cst_217 = arith.constant dense<0.000000e+00> : vector<16x32xf32>
    %608 = tpu.matmul %606, %607, %cst_217 {dimension_numbers = #tpu.dot_dimension_numbers<[1], [0], [0], [1], [0, 0, 1, 1], [], []>} : vector<16x8xf32>, vector<8x32xf32>, vector<16x32xf32> -> vector<16x32xf32>
    %609 = arith.addf %584, %608 : vector<16x32xf32>
    %c1_218 = arith.constant 1 : index
    %c0_219 = arith.constant 0 : index
    %c0_220 = arith.constant 0 : index
    %610 = vector.load %arg13[%c1_218, %c0_219, %c0_220] : memref<2x1x32xf32, #tpu.memory_space<vmem>>, vector<1x1x32xf32>
    %611 = vector.shape_cast %610 : vector<1x1x32xf32> to vector<1x32xf32>
    %612 = vector.broadcast %611 : vector<1x32xf32> to vector<16x32xf32>
    %613 = arith.addf %609, %612 : vector<16x32xf32>
    %614 = arith.addf %470, %613 : vector<16x32xf32>
    %615 = vector.extract_strided_slice %330 {offsets = [2, 0], sizes = [1, 32], strides = [1, 1]} : vector<3x32xf32> to vector<1x32xf32>
    %616 = vector.extract_strided_slice %332 {offsets = [2, 0], sizes = [1, 32], strides = [1, 1]} : vector<3x32xf32> to vector<1x32xf32>
    %cst_221 = arith.constant dense<0.000000e+00> : vector<16xf32>
    %617 = vector.multi_reduction <add>, %614, %cst_221 [1] : vector<16x32xf32> to vector<16xf32>
    %618 = vector.shape_cast %617 : vector<16xf32> to vector<16x1xf32>
    %cst_222 = arith.constant 3.200000e+01 : f32
    %619 = vector.broadcast %cst_222 : f32 to vector<16x1xf32>
    %620 = arith.divf %618, %619 : vector<16x1xf32>
    %621 = vector.broadcast %620 : vector<16x1xf32> to vector<16x32xf32>
    %622 = arith.subf %614, %621 : vector<16x32xf32>
    %623 = arith.mulf %622, %622 : vector<16x32xf32>
    %cst_223 = arith.constant dense<0.000000e+00> : vector<16xf32>
    %624 = vector.multi_reduction <add>, %623, %cst_223 [1] : vector<16x32xf32> to vector<16xf32>
    %625 = vector.shape_cast %624 : vector<16xf32> to vector<16x1xf32>
    %cst_224 = arith.constant 3.100000e+01 : f32
    %626 = vector.broadcast %cst_224 : f32 to vector<16x1xf32>
    %627 = arith.divf %625, %626 : vector<16x1xf32>
    %628 = vector.broadcast %615 : vector<1x32xf32> to vector<16x32xf32>
    %629 = arith.mulf %628, %622 : vector<16x32xf32>
    %630 = math.sqrt %627 : vector<16x1xf32>
    %cst_225 = arith.constant 9.99999997E-7 : f32
    %631 = vector.broadcast %cst_225 : f32 to vector<16x1xf32>
    %632 = arith.addf %630, %631 : vector<16x1xf32>
    %633 = vector.broadcast %632 : vector<16x1xf32> to vector<16x32xf32>
    %634 = arith.divf %629, %633 : vector<16x32xf32>
    %635 = vector.broadcast %616 : vector<1x32xf32> to vector<16x32xf32>
    %636 = arith.addf %634, %635 : vector<16x32xf32>
    %c1_226 = arith.constant 1 : index
    %c0_227 = arith.constant 0 : index
    %c0_228 = arith.constant 0 : index
    %637 = vector.load %arg14[%c1_226, %c0_227, %c0_228] : memref<2x32x64xf32, #tpu.memory_space<vmem>>, vector<1x32x64xf32>
    %638 = vector.shape_cast %637 : vector<1x32x64xf32> to vector<32x64xf32>
    %cst_229 = arith.constant dense<0.000000e+00> : vector<16x64xf32>
    %639 = tpu.matmul %636, %638, %cst_229 {dimension_numbers = #tpu.dot_dimension_numbers<[1], [0], [0], [1], [0, 0, 1, 1], [], []>} : vector<16x32xf32>, vector<32x64xf32>, vector<16x64xf32> -> vector<16x64xf32>
    %c1_230 = arith.constant 1 : index
    %c0_231 = arith.constant 0 : index
    %c0_232 = arith.constant 0 : index
    %640 = vector.load %arg15[%c1_230, %c0_231, %c0_232] : memref<2x1x64xf32, #tpu.memory_space<vmem>>, vector<1x1x64xf32>
    %641 = vector.shape_cast %640 : vector<1x1x64xf32> to vector<1x64xf32>
    %642 = vector.broadcast %641 : vector<1x64xf32> to vector<16x64xf32>
    %643 = arith.addf %639, %642 : vector<16x64xf32>
    %cst_233 = arith.constant 0.000000e+00 : f32
    %644 = vector.broadcast %cst_233 : f32 to vector<16x64xf32>
    %645 = arith.maximumf %643, %644 : vector<16x64xf32>
    %c1_234 = arith.constant 1 : index
    %c0_235 = arith.constant 0 : index
    %c0_236 = arith.constant 0 : index
    %646 = vector.load %arg16[%c1_234, %c0_235, %c0_236] : memref<2x64x32xf32, #tpu.memory_space<vmem>>, vector<1x64x32xf32>
    %647 = vector.shape_cast %646 : vector<1x64x32xf32> to vector<64x32xf32>
    %cst_237 = arith.constant dense<0.000000e+00> : vector<16x32xf32>
    %648 = tpu.matmul %645, %647, %cst_237 {dimension_numbers = #tpu.dot_dimension_numbers<[1], [0], [0], [1], [0, 0, 1, 1], [], []>} : vector<16x64xf32>, vector<64x32xf32>, vector<16x32xf32> -> vector<16x32xf32>
    %649 = arith.addf %614, %648 : vector<16x32xf32>
    %c1_238 = arith.constant 1 : index
    %c0_239 = arith.constant 0 : index
    %c0_240 = arith.constant 0 : index
    %650 = vector.load %arg17[%c1_238, %c0_239, %c0_240] : memref<2x1x32xf32, #tpu.memory_space<vmem>>, vector<1x1x32xf32>
    %651 = vector.shape_cast %650 : vector<1x1x32xf32> to vector<1x32xf32>
    %652 = vector.broadcast %651 : vector<1x32xf32> to vector<16x32xf32>
    %653 = arith.addf %649, %652 : vector<16x32xf32>
    %c0_241 = arith.constant 0 : index
    %c0_242 = arith.constant 0 : index
    %654 = vector.load %arg20[%c0_241, %c0_242] : memref<1x32xf32, #tpu.memory_space<vmem>>, vector<1x32xf32>
    %c0_243 = arith.constant 0 : index
    %c0_244 = arith.constant 0 : index
    %655 = vector.load %arg21[%c0_243, %c0_244] : memref<1x32xf32, #tpu.memory_space<vmem>>, vector<1x32xf32>
    %cst_245 = arith.constant dense<0.000000e+00> : vector<16xf32>
    %656 = vector.multi_reduction <add>, %653, %cst_245 [1] : vector<16x32xf32> to vector<16xf32>
    %657 = vector.shape_cast %656 : vector<16xf32> to vector<16x1xf32>
    %cst_246 = arith.constant 3.200000e+01 : f32
    %658 = vector.broadcast %cst_246 : f32 to vector<16x1xf32>
    %659 = arith.divf %657, %658 : vector<16x1xf32>
    %660 = vector.broadcast %659 : vector<16x1xf32> to vector<16x32xf32>
    %661 = arith.subf %653, %660 : vector<16x32xf32>
    %662 = arith.mulf %661, %661 : vector<16x32xf32>
    %cst_247 = arith.constant dense<0.000000e+00> : vector<16xf32>
    %663 = vector.multi_reduction <add>, %662, %cst_247 [1] : vector<16x32xf32> to vector<16xf32>
    %664 = vector.shape_cast %663 : vector<16xf32> to vector<16x1xf32>
    %cst_248 = arith.constant 3.100000e+01 : f32
    %665 = vector.broadcast %cst_248 : f32 to vector<16x1xf32>
    %666 = arith.divf %664, %665 : vector<16x1xf32>
    %667 = vector.broadcast %654 : vector<1x32xf32> to vector<16x32xf32>
    %668 = arith.mulf %667, %661 : vector<16x32xf32>
    %669 = math.sqrt %666 : vector<16x1xf32>
    %cst_249 = arith.constant 9.99999997E-7 : f32
    %670 = vector.broadcast %cst_249 : f32 to vector<16x1xf32>
    %671 = arith.addf %669, %670 : vector<16x1xf32>
    %672 = vector.broadcast %671 : vector<16x1xf32> to vector<16x32xf32>
    %673 = arith.divf %668, %672 : vector<16x32xf32>
    %674 = vector.broadcast %655 : vector<1x32xf32> to vector<16x32xf32>
    %675 = arith.addf %673, %674 : vector<16x32xf32>
    %c0_250 = arith.constant 0 : index
    %c0_251 = arith.constant 0 : index
    %676 = vector.load %arg22[%c0_250, %c0_251] : memref<16x32xf32, #tpu.memory_space<vmem>>, vector<16x32xf32>
    tpu.vector_store %arg22[%c0_250, %c0_251], %675 {strides = array<i32>} : memref<16x32xf32, #tpu.memory_space<vmem>>, vector<16x32xf32>,
    return
  }
}

</mosaic_0001>

<llo_original>
// kernel: decoder_forward.1
$region0: #{decoder_forward.1}
  #allocation0 [shape = 'u32[]', space=smem, size = 0x4, offset = 0x4, fixed_abs, tag = 'smem constant byte address 0x4 - core index']
  #allocation1 [shape = 'u32[72,128]{1,0:T(1,128)}', space=vmem, size = 0x9000, scoped, tag = 'internal scratch']
  %s0 = inlined_call_operand.vmem [shape: f32[16,32], index: 0, kind: input, shape index: {}]
  %s1 = inlined_call_operand.vmem [shape: f32[16,32], index: 1, kind: input, shape index: {}]
  %s2 = inlined_call_operand.vmem [shape: f32[2,8,8], index: 2, kind: input, shape index: {}]
  %s3 = inlined_call_operand.vmem [shape: f32[2,8,8], index: 3, kind: input, shape index: {}]
  %s4 = inlined_call_operand.vmem [shape: f32[2,32,96], index: 4, kind: input, shape index: {}]
  %s5 = inlined_call_operand.vmem [shape: f32[2,1,96], index: 5, kind: input, shape index: {}]
  %s6 = inlined_call_operand.vmem [shape: f32[2,32,32], index: 6, kind: input, shape index: {}]
  %s7 = inlined_call_operand.vmem [shape: f32[2,1,32], index: 7, kind: input, shape index: {}]
  %s8 = inlined_call_operand.vmem [shape: f32[2,32,32], index: 8, kind: input, shape index: {}]
  %s9 = inlined_call_operand.vmem [shape: f32[2,1,32], index: 9, kind: input, shape index: {}]
  %s10 = inlined_call_operand.hbm [shape: f32[2,32,64], index: 10, kind: input, shape index: {}]
  %s11 = inlined_call_operand.vmem [shape: f32[2,1,64], index: 11, kind: input, shape index: {}]
  %s12 = inlined_call_operand.hbm [shape: f32[2,32,32], index: 12, kind: input, shape index: {}]
  %s13 = inlined_call_operand.vmem [shape: f32[2,1,32], index: 13, kind: input, shape index: {}]
  %s14 = inlined_call_operand.hbm [shape: f32[2,32,64], index: 14, kind: input, shape index: {}]
  %s15 = inlined_call_operand.vmem [shape: f32[2,1,64], index: 15, kind: input, shape index: {}]
  %s16 = inlined_call_operand.vmem [shape: f32[2,64,32], index: 16, kind: input, shape index: {}]
  %s17 = inlined_call_operand.hbm [shape: f32[2,1,32], index: 17, kind: input, shape index: {}]
  %s18 = inlined_call_operand.vmem [shape: f32[2,3,32], index: 18, kind: input, shape index: {}]
  %s19 = inlined_call_operand.vmem [shape: f32[2,3,32], index: 19, kind: input, shape index: {}]
  %s20 = inlined_call_operand.vmem [shape: f32[1,32], index: 20, kind: input, shape index: {}]
  %s21 = inlined_call_operand.hbm [shape: f32[1,32], index: 21, kind: input, shape index: {}]
  %s22 = inlined_call_operand.hbm [shape: f32[16,32], index: 22, kind: output, shape index: {}]
  %s23 = sld [smem:[#allocation0]]
  $region118: #{decoder_forward.1} parent=0
    _
  %s25 = ssub.s32 1, %s23
  %s26 = scalar_select 0, %s25, %s23
  $region1: #{decoder_forward.1} parent=0
    #allocation2 [shape = 'u8[32768]{0}', space=vmem, size = 0x8000, scoped, tag = 'input window, operand 10, single buffered']
    #allocation3 [shape = 's32[1]{0}', space=sflag, size = 0x4, scoped, tag = 'scoped memory for decoder_forward.1']
    #allocation4 [shape = 's32[1]{0}', space=sflag, size = 0x4, scoped, tag = 'scoped memory for decoder_forward.1']
    #allocation5 [shape = 'u8[32768]{0}', space=vmem, size = 0x8000, scoped, tag = 'input window, operand 12, single buffered']
    #allocation6 [shape = 's32[1]{0}', space=sflag, size = 0x4, scoped, tag = 'scoped memory for decoder_forward.1']
    #allocation7 [shape = 'u8[32768]{0}', space=vmem, size = 0x8000, scoped, tag = 'input window, operand 14, single buffered']
    #allocation8 [shape = 'u8[1024]{0}', space=vmem, size = 0x400, scoped, tag = 'input window, operand 17, single buffered']
    #allocation9 [shape = 's32[1]{0}', space=sflag, size = 0x4, scoped, tag = 'scoped memory for decoder_forward.1']
    #allocation10 [shape = 'u8[512]{0}', space=vmem, size = 0x400, scoped, tag = 'input window, operand 21, single buffered']
    #allocation11 [shape = 'u8[8192]{0}', space=vmem, size = 0x2000, scoped, tag = 'output window, operand 0, single buffered']
    %27 = vsyncpa [#allocation3], 0
    %28 = vsyncpa [#allocation6], 0
    %29 = vsyncpa [#allocation9], 0
    %30 = vsyncpa [#allocation4], 0
    // Predicated region
    $region2: #{decoder_forward.1} parent=1 // pred_check
      _
    $region3: #{decoder_forward.1} parent=1 // pred_check_branch
      %32 = sbr.rel (0) target = $region5
    $region4: #{decoder_forward.1} parent=1 // pred_region
      _
    $region5: #{decoder_forward.1} parent=1 // pred_fallthru
      _
    // Predicated region
    $region6: #{decoder_forward.1} parent=1 // pred_check
      _
    $region7: #{decoder_forward.1} parent=1 // pred_check_branch
      %34 = sbr.rel (0) target = $region9
    $region8: #{decoder_forward.1} parent=1 // pred_region
      _
    $region9: #{decoder_forward.1} parent=1 // pred_fallthru
      _
    // Predicated region
    $region10: #{decoder_forward.1} parent=1 // pred_check
      _
    $region11: #{decoder_forward.1} parent=1 // pred_check_branch
      %36 = sbr.rel (0) target = $region13
    $region12: #{decoder_forward.1} parent=1 // pred_region
      _
    $region13: #{decoder_forward.1} parent=1 // pred_fallthru
      _
    // Predicated region
    $region14: #{decoder_forward.1} parent=1 // pred_check
      _
    $region15: #{decoder_forward.1} parent=1 // pred_check_branch
      %38 = sbr.rel (0) target = $region17
    $region16: #{decoder_forward.1} parent=1 // pred_region
      _
    $region17: #{decoder_forward.1} parent=1 // pred_fallthru
      _
    // Predicated region
    $region18: #{decoder_forward.1} parent=1 // pred_check
      _
    $region19: #{decoder_forward.1} parent=1 // pred_check_branch
      %40 = sbr.rel (0) target = $region21
    $region20: #{decoder_forward.1} parent=1 // pred_region
      _
    $region21: #{decoder_forward.1} parent=1 // pred_fallthru
      _
    // Predicated region
    $region22: #{decoder_forward.1} parent=1 // pred_check
      _
    $region23: #{decoder_forward.1} parent=1 // pred_check_branch
      %42 = sbr.rel (0) target = $region25
    $region24: #{decoder_forward.1} parent=1 // pred_region
      _
    $region25: #{decoder_forward.1} parent=1 // pred_fallthru
      _
    // Predicated region
    $region26: #{decoder_forward.1} parent=1 // pred_check
      _
    $region27: #{decoder_forward.1} parent=1 // pred_check_branch
      %44 = sbr.rel (0) target = $region29
    $region28: #{decoder_forward.1} parent=1 // pred_region
      _
    $region29: #{decoder_forward.1} parent=1 // pred_fallthru
      _
    // Predicated region
    $region30: #{decoder_forward.1} parent=1 // pred_check
      _
    $region31: #{decoder_forward.1} parent=1 // pred_check_branch
      %46 = sbr.rel (0) target = $region33
    $region32: #{decoder_forward.1} parent=1 // pred_region
      _
    $region33: #{decoder_forward.1} parent=1 // pred_fallthru
      _
    // Predicated region
    $region34: #{decoder_forward.1} parent=1 // pred_check
      _
    $region35: #{decoder_forward.1} parent=1 // pred_check_branch
      %48 = sbr.rel (0) target = $region37
    $region36: #{decoder_forward.1} parent=1 // pred_region
      _
    $region37: #{decoder_forward.1} parent=1 // pred_fallthru
      _
    // Predicated region
    $region38: #{decoder_forward.1} parent=1 // pred_check
      _
    $region39: #{decoder_forward.1} parent=1 // pred_check_branch
      %50 = sbr.rel (0) target = $region41
    $region40: #{decoder_forward.1} parent=1 // pred_region
      _
    $region41: #{decoder_forward.1} parent=1 // pred_fallthru
      _
    // Predicated region
    $region42: #{decoder_forward.1} parent=1 // pred_check
      _
    $region43: #{decoder_forward.1} parent=1 // pred_check_branch
      %52 = sbr.rel (0) target = $region45
    $region44: #{decoder_forward.1} parent=1 // pred_region
      %54 = vsyncadd [#allocation3], 0
      %s55 = sshll.u32 %s10, 4
      %s56 = int_to_ptr.hbm [resolvable:$true] %s55
      %s57 = sshll.u32 [#allocation2], 4
      %s58 = int_to_ptr.vmem [resolvable:$true] %s57
      %63 = dma.hbm_to_vmem [thread:$0]  %s56, 1024, %s58, [#allocation3], 128, 128, 8
    $region45: #{decoder_forward.1} parent=1 // pred_fallthru
      _
    // Predicated region
    $region46: #{decoder_forward.1} parent=1 // pred_check
      _
    $region47: #{decoder_forward.1} parent=1 // pred_check_branch
      %65 = sbr.rel (0) target = $region49
    $region48: #{decoder_forward.1} parent=1 // pred_region
      _
    $region49: #{decoder_forward.1} parent=1 // pred_fallthru
      _
    // Predicated region
    $region50: #{decoder_forward.1} parent=1 // pred_check
      _
    $region51: #{decoder_forward.1} parent=1 // pred_check_branch
      %67 = sbr.rel (0) target = $region53
    $region52: #{decoder_forward.1} parent=1 // pred_region
      %69 = vsyncadd [#allocation6], 0
      %s70 = sshll.u32 %s12, 4
      %s71 = int_to_ptr.hbm [resolvable:$true] %s70
      %s72 = sshll.u32 [#allocation5], 4
      %s73 = int_to_ptr.vmem [resolvable:$true] %s72
      %78 = dma.hbm_to_vmem [thread:$0]  %s71, 1024, %s73, [#allocation6], 128, 128, 8
    $region53: #{decoder_forward.1} parent=1 // pred_fallthru
      _
    // Predicated region
    $region54: #{decoder_forward.1} parent=1 // pred_check
      _
    $region55: #{decoder_forward.1} parent=1 // pred_check_branch
      %80 = sbr.rel (0) target = $region57
    $region56: #{decoder_forward.1} parent=1 // pred_region
      _
    $region57: #{decoder_forward.1} parent=1 // pred_fallthru
      _
    // Predicated region
    $region58: #{decoder_forward.1} parent=1 // pred_check
      _
    $region59: #{decoder_forward.1} parent=1 // pred_check_branch
      %82 = sbr.rel (0) target = $region61
    $region60: #{decoder_forward.1} parent=1 // pred_region
      %84 = vsyncadd [#allocation6], 0
      %s85 = sshll.u32 %s14, 4
      %s86 = int_to_ptr.hbm [resolvable:$true] %s85
      %s87 = sshll.u32 [#allocation7], 4
      %s88 = int_to_ptr.vmem [resolvable:$true] %s87
      %93 = dma.hbm_to_vmem [thread:$0]  %s86, 1024, %s88, [#allocation6], 128, 128, 8
    $region61: #{decoder_forward.1} parent=1 // pred_fallthru
      _
    // Predicated region
    $region62: #{decoder_forward.1} parent=1 // pred_check
      _
    $region63: #{decoder_forward.1} parent=1 // pred_check_branch
      %95 = sbr.rel (0) target = $region65
    $region64: #{decoder_forward.1} parent=1 // pred_region
      _
    $region65: #{decoder_forward.1} parent=1 // pred_fallthru
      _
    // Predicated region
    $region66: #{decoder_forward.1} parent=1 // pred_check
      _
    $region67: #{decoder_forward.1} parent=1 // pred_check_branch
      %97 = sbr.rel (0) target = $region69
    $region68: #{decoder_forward.1} parent=1 // pred_region
      _
    $region69: #{decoder_forward.1} parent=1 // pred_fallthru
      _
    // Predicated region
    $region70: #{decoder_forward.1} parent=1 // pred_check
      _
    $region71: #{decoder_forward.1} parent=1 // pred_check_branch
      %99 = sbr.rel (0) target = $region73
    $region72: #{decoder_forward.1} parent=1 // pred_region
      %101 = vsyncadd [#allocation9], 0
      %s102 = sshll.u32 %s17, 4
      %s103 = int_to_ptr.hbm [resolvable:$true] %s102
      %s104 = sshll.u32 [#allocation8], 4
      %s105 = int_to_ptr.vmem [resolvable:$true] %s104
      %110 = dma.hbm_to_vmem [thread:$0]  %s103, 32, %s105, [#allocation9], 16, 16, 1
    $region73: #{decoder_forward.1} parent=1 // pred_fallthru
      _
    // Predicated region
    $region74: #{decoder_forward.1} parent=1 // pred_check
      _
    $region75: #{decoder_forward.1} parent=1 // pred_check_branch
      %112 = sbr.rel (0) target = $region77
    $region76: #{decoder_forward.1} parent=1 // pred_region
      _
    $region77: #{decoder_forward.1} parent=1 // pred_fallthru
      _
    // Predicated region
    $region78: #{decoder_forward.1} parent=1 // pred_check
      _
    $region79: #{decoder_forward.1} parent=1 // pred_check_branch
      %114 = sbr.rel (0) target = $region81
    $region80: #{decoder_forward.1} parent=1 // pred_region
      _
    $region81: #{decoder_forward.1} parent=1 // pred_fallthru
      _
    // Predicated region
    $region82: #{decoder_forward.1} parent=1 // pred_check
      _
    $region83: #{decoder_forward.1} parent=1 // pred_check_branch
      %116 = sbr.rel (0) target = $region85
    $region84: #{decoder_forward.1} parent=1 // pred_region
      _
    $region85: #{decoder_forward.1} parent=1 // pred_fallthru
      _
    // Predicated region
    $region86: #{decoder_forward.1} parent=1 // pred_check
      _
    $region87: #{decoder_forward.1} parent=1 // pred_check_branch
      %118 = sbr.rel (0) target = $region89
    $region88: #{decoder_forward.1} parent=1 // pred_region
      %120 = vsyncadd [#allocation9], 0
      %s122 = sshll.u32 %s21, 4
      %s123 = int_to_ptr.hbm [resolvable:$true] %s122
      %s124 = sshll.u32 [#allocation10], 4
      %s125 = int_to_ptr.vmem [resolvable:$true] %s124
      %127 = dma.hbm_to_vmem [thread:$0]  %s123, 16, %s125, [#allocation9]
    $region89: #{decoder_forward.1} parent=1 // pred_fallthru
      _
    // Predicated region
    $region90: #{decoder_forward.1} parent=1 // pred_check
      _
    $region91: #{decoder_forward.1} parent=1 // pred_check_branch
      %129 = sbr.rel (0) target = $region93
    $region92: #{decoder_forward.1} parent=1 // pred_region
      %131 = dma.done [#allocation3], 1024
    $region93: #{decoder_forward.1} parent=1 // pred_fallthru
      _
    // Predicated region
    $region94: #{decoder_forward.1} parent=1 // pred_check
      _
    $region95: #{decoder_forward.1} parent=1 // pred_check_branch
      %133 = sbr.rel (0) target = $region97
    $region96: #{decoder_forward.1} parent=1 // pred_region
      %135 = dma.done [#allocation6], 1024
    $region97: #{decoder_forward.1} parent=1 // pred_fallthru
      _
    // Predicated region
    $region98: #{decoder_forward.1} parent=1 // pred_check
      _
    $region99: #{decoder_forward.1} parent=1 // pred_check_branch
      %137 = sbr.rel (0) target = $region101
    $region100: #{decoder_forward.1} parent=1 // pred_region
      %139 = dma.done [#allocation6], 1024
    $region101: #{decoder_forward.1} parent=1 // pred_fallthru
      _
    // Predicated region
    $region102: #{decoder_forward.1} parent=1 // pred_check
      _
    $region103: #{decoder_forward.1} parent=1 // pred_check_branch
      %141 = sbr.rel (0) target = $region105
    $region104: #{decoder_forward.1} parent=1 // pred_region
      %143 = dma.done [#allocation9], 32
    $region105: #{decoder_forward.1} parent=1 // pred_fallthru
      _
    // Predicated region
    $region106: #{decoder_forward.1} parent=1 // pred_check
      _
    $region107: #{decoder_forward.1} parent=1 // pred_check_branch
      %145 = sbr.rel (0) target = $region109
    $region108: #{decoder_forward.1} parent=1 // pred_region
      %147 = dma.done [#allocation9], 16
    $region109: #{decoder_forward.1} parent=1 // pred_fallthru
      _
    %v148 = vld [vmem:[%s0] sm:$0xff]
    %v149 = vld [vmem:[%s0 + $0x8] sm:$0xff]
    %v150 = vld [vmem:[%s1] sm:$0xff]
    %v151 = vld [vmem:[%s1 + $0x8] sm:$0xff]
    %v152 = vld [vmem:[%s2] sm:$0xff]
    %v153 = vld [vmem:[%s2 + $0x8] sm:$0xff]
    %v154 = vld [vmem:[%s3] sm:$0xff]
    %v155 = vld [vmem:[%s3 + $0x8] sm:$0xff]
    %v156 = vld [vmem:[%s18] sm:$0x7]
    %v157 = vld [vmem:[%s19] sm:$0x7]
    %vm158 = vcmask 261120
    %v159 = vsel %vm158, %v148, 0.0
    %160 = vadd.xlane.f32.xlu0 %v159
    %v161 = vpop.xlane.xlu0 %160
    %v162 = vsel %vm158, %v149, 0.0
    %163 = vadd.xlane.f32.xlu0 %v162
    %v164 = vpop.xlane.xlu0 %163
    %v165 = vrcp.pop 32.0
    %v166 = vmul.f32 32.0, %v165
    %v167 = vsub.f32 1.0, %v166
    %v168 = vmul.f32 %v165, %v167
    %v169 = vadd.f32 %v165, %v168
    %vm170 = vweird.f32 %v165
    %v171 = vsel %vm170, %v165, %v169
    %v172 = vmul.f32 %v161, %v171
    %v173 = vmul.f32 %v164, %v171
    %v174 = vsub.f32 %v148, %v172
    %v175 = vsub.f32 %v149, %v173
    %v176 = vmul.f32 %v174, %v174
    %v177 = vmul.f32 %v175, %v175
    %v178 = vsel %vm158, %v176, 0.0
    %179 = vadd.xlane.f32.xlu0 %v178
    %v180 = vpop.xlane.xlu0 %179
    %v181 = vsel %vm158, %v177, 0.0
    %182 = vadd.xlane.f32.xlu0 %v181
    %v183 = vpop.xlane.xlu0 %182
    %v184 = vrcp.pop 31.0
    %v185 = vmul.f32 31.0, %v184
    %v186 = vsub.f32 1.0, %v185
    %v187 = vmul.f32 %v184, %v186
    %v188 = vadd.f32 %v184, %v187
    %vm189 = vweird.f32 %v184
    %v190 = vsel %vm189, %v184, %v188
    %v191 = vmul.f32 %v180, %v190
    %v192 = vmul.f32 %v183, %v190
    %v193 = vperm.slane %v156, 0
    %v194 = vmul.f32 %v193, %v174
    %v195 = vmul.f32 %v193, %v175
    %v196 = vrsqrt.pop %v191
    %v197 = vmul.f32 %v196, %v191
    %v198 = vmul.f32 %v197, %v196
    %v199 = vmul.f32 0.5, %v198
    %v200 = vsub.f32 1.5, %v199
    %v201 = vmul.f32 %v196, %v200
    %v202 = vmul.f32 %v191, %v201
    %vm203 = vcmp.eq.f32.partialorder %v191, inf
    %v204 = vsel %vm203, %v191, %v202
    %vm205 = vcmp.eq.f32.partialorder %v191, 0.0
    %v206 = vand.u32 %v191, 2147483648
    %v207 = vsel %vm205, %v206, %v204
    %v208 = vrsqrt.pop %v192
    %v209 = vmul.f32 %v208, %v192
    %v210 = vmul.f32 %v209, %v208
    %v211 = vmul.f32 0.5, %v210
    %v212 = vsub.f32 1.5, %v211
    %v213 = vmul.f32 %v208, %v212
    %v214 = vmul.f32 %v192, %v213
    %vm215 = vcmp.eq.f32.partialorder %v192, inf
    %v216 = vsel %vm215, %v192, %v214
    %vm217 = vcmp.eq.f32.partialorder %v192, 0.0
    %v218 = vand.u32 %v192, 2147483648
    %v219 = vsel %vm217, %v218, %v216
    %v220 = vadd.f32 %v207, 1e-06
    %v221 = vadd.f32 %v219, 1e-06
    %v222 = vrcp.pop %v220
    %v223 = vmul.f32 %v220, %v222
    %v224 = vsub.f32 1.0, %v223
    %v225 = vmul.f32 %v222, %v224
    %v226 = vadd.f32 %v222, %v225
    %vm227 = vweird.f32 %v220
    %vm228 = vweird.f32 %v222
    %vm229 = vmor %vm227, %vm228
    %v230 = vsel %vm229, %v222, %v226
    %v231 = vand.u32 2147483647, %v220
    %vm232 = vcmp.eq.f32.partialorder %v231, 8.507059e+37
    %v233 = vand.u32 %v220, 2147483648
    %v234 = vor.u32 1.1754944e-38, %v233
    %v235 = vsel %vm232, %v234, %v230
    %v236 = vmul.f32 %v194, %v235
    %v237 = vrcp.pop %v221
    %v238 = vmul.f32 %v221, %v237
    %v239 = vsub.f32 1.0, %v238
    %v240 = vmul.f32 %v237, %v239
    %v241 = vadd.f32 %v237, %v240
    %vm242 = vweird.f32 %v221
    %vm243 = vweird.f32 %v237
    %vm244 = vmor %vm242, %vm243
    %v245 = vsel %vm244, %v237, %v241
    %v246 = vand.u32 2147483647, %v221
    %vm247 = vcmp.eq.f32.partialorder %v246, 8.507059e+37
    %v248 = vand.u32 %v221, 2147483648
    %v249 = vor.u32 1.1754944e-38, %v248
    %v250 = vsel %vm247, %v249, %v245
    %v251 = vmul.f32 %v195, %v250
    %v252 = vperm.slane %v157, 0
    %v253 = vadd.f32 %v236, %v252
    %v254 = vadd.f32 %v251, %v252
    %v255 = vld [vmem:[%s4] sm:$0xff]
    %v256 = vld [vmem:[%s4 + $0x8] sm:$0xff]
    %v257 = vld [vmem:[%s4 + $0x10] sm:$0xff]
    %v258 = vld [vmem:[%s4 + $0x18] sm:$0xff]
    %v259 = vld [vmem:[%s5] sm:$0x1]
    %v261 = vperm.slane %v259, 0
    %v264 = vsel %vm158, %v253, 0
    %v267 = vsel %vm158, %v254, 0
    %269 = vmatpush.msra.mxu0 0.0
    %270 = vmatpush.msra.mxu0 0.0
    %271 = vmatpush.msra.mxu0 0.0
    %272 = vmatpush.msra.mxu0 0.0
    %273 = vmatpush.msra.mxu0 0.0
    %274 = vmatpush.msra.mxu0 0.0
    %275 = vmatpush.msra.mxu0 0.0
    %276 = vmatpush.msra.mxu0 0.0
    %277 = vmatpush.msra.mxu0 0.0
    %278 = vmatpush.msra.mxu0 0.0
    %279 = vmatpush.msra.mxu0 0.0
    %280 = vmatpush.msra.mxu0 0.0
    %281 = vmatpush.msra.mxu0 %v258
    %282 = vmatpush.msra.mxu0 %v257
    %283 = vmatpush.msra.mxu0 %v256
    %284 = vmatpush.msra.mxu0 %v255
    %285 = vmatmul.f32.gmra.mxu0 %v264
    %v286 = vpop.f32.mrf.mxu0
    %v287 = vadd.f32 %v261, %v286
    %288 = vmatmul.f32.gmra.mxu0 %v267
    %v289 = vpop.f32.mrf.mxu0
    %v290 = vadd.f32 %v261, %v289
    %291 = vdwg.mxu0
    %v292 = vld [vmem:[%s6] sm:$0xff]
    %v293 = vld [vmem:[%s6 + $0x8] sm:$0xff]
    %v294 = vld [vmem:[%s6 + $0x10] sm:$0xff]
    %v295 = vld [vmem:[%s6 + $0x18] sm:$0xff]
    %297 = vrot.lane.b32.xlu0 %v287, 96
    %v298 = vpop.permute.xlu0 %297
    %vm299 = vcmask 64512
    %v300 = vsel %vm299, %v287, 0
    %v302 = vsel %vm299, %v298, 0
    %304 = vmatpush.xpose.msra.mxu0 0.0
    %305 = vmatpush.xpose.msra.mxu0 0.0
    %306 = vmatpush.xpose.msra.mxu0 0.0
    %307 = vmatpush.xpose.msra.mxu0 0.0
    %308 = vmatpush.xpose.msra.mxu0 0.0
    %309 = vmatpush.xpose.msra.mxu0 0.0
    %310 = vmatpush.xpose.msra.mxu0 0.0
    %311 = vmatpush.xpose.msra.mxu0 0.0
    %312 = vmatpush.xpose.msra.mxu0 0.0
    %313 = vmatpush.xpose.msra.mxu0 0.0
    %314 = vmatpush.xpose.msra.mxu0 0.0
    %315 = vmatpush.xpose.msra.mxu0 0.0
    %316 = vmatpush.xpose.msra.mxu0 0.0
    %317 = vmatpush.xpose.msra.mxu0 0.0
    %318 = vmatpush.xpose.msra.mxu0 0.0
    %319 = vmatpush.xpose.msra.mxu0 %v302
    %320 = vmatmul.f32.gmra.mxu0 %v300
    %v321 = vpop.f32.mrf.mxu0
    %v322 = vadd.f32 0.0, %v321
    %323 = vdwg.mxu0
    %325 = vrot.lane.b32.xlu0 %v290, 96
    %v326 = vpop.permute.xlu0 %325
    %v327 = vsel %vm299, %v290, 0
    %v329 = vsel %vm299, %v326, 0
    %331 = vmatpush.xpose.msra.mxu0 0.0
    %332 = vmatpush.xpose.msra.mxu0 0.0
    %333 = vmatpush.xpose.msra.mxu0 0.0
    %334 = vmatpush.xpose.msra.mxu0 0.0
    %335 = vmatpush.xpose.msra.mxu0 0.0
    %336 = vmatpush.xpose.msra.mxu0 0.0
    %337 = vmatpush.xpose.msra.mxu0 0.0
    %338 = vmatpush.xpose.msra.mxu0 0.0
    %339 = vmatpush.xpose.msra.mxu0 0.0
    %340 = vmatpush.xpose.msra.mxu0 0.0
    %341 = vmatpush.xpose.msra.mxu0 0.0
    %342 = vmatpush.xpose.msra.mxu0 0.0
    %343 = vmatpush.xpose.msra.mxu0 0.0
    %344 = vmatpush.xpose.msra.mxu0 0.0
    %345 = vmatpush.xpose.msra.mxu0 0.0
    %346 = vmatpush.xpose.msra.mxu0 %v329
    %347 = vmatmul.f32.gmra.mxu0 %v327
    %v348 = vpop.f32.mrf.mxu0
    %v349 = vadd.f32 0.0, %v348
    %350 = vdwg.mxu0
    %v351 = vmul.f32 %v322, 0.35355338
    %v352 = vmul.f32 %v349, 0.35355338
    %v353 = vadd.f32 %v351, %v152
    %v354 = vadd.f32 %v352, %v153
    %v355 = vsel %vm299, %v353, -inf
    %356 = vmax.xlane.f32.xlu0 %v355
    %v357 = vpop.xlane.xlu0 %356
    %v358 = vsel %vm299, %v354, -inf
    %359 = vmax.xlane.f32.xlu0 %v358
    %v360 = vpop.xlane.xlu0 %359
    %v361 = vsub.f32 %v353, %v357
    %v362 = vsub.f32 %v354, %v360
    %v363 = vmul.f32 %v361, 1.442695
    %v364 = vpow.pop %v363
    %v365 = vmul.f32 %v362, 1.442695
    %v366 = vpow.pop %v365
    %v367 = vsel %vm299, %v364, 0.0
    %368 = vadd.xlane.f32.xlu0 %v367
    %v369 = vpop.xlane.xlu0 %368
    %v370 = vsel %vm299, %v366, 0.0
    %371 = vadd.xlane.f32.xlu0 %v370
    %v372 = vpop.xlane.xlu0 %371
    %v373 = vrcp.pop %v369
    %v374 = vrcp.pop %v372
    %v375 = vmul.f32 %v364, %v373
    %v376 = vmul.f32 %v366, %v374
    %377 = vrot.lane.b32.xlu0 %v287, 64
    %v378 = vpop.permute.xlu0 %377
    %v381 = vsel %vm299, %v375, 0
    %383 = vmatpush.msra.mxu0 0.0
    %384 = vmatpush.msra.mxu0 0.0
    %385 = vmatpush.msra.mxu0 0.0
    %386 = vmatpush.msra.mxu0 0.0
    %387 = vmatpush.msra.mxu0 0.0
    %388 = vmatpush.msra.mxu0 0.0
    %389 = vmatpush.msra.mxu0 0.0
    %390 = vmatpush.msra.mxu0 0.0
    %391 = vmatpush.msra.mxu0 0.0
    %392 = vmatpush.msra.mxu0 0.0
    %393 = vmatpush.msra.mxu0 0.0
    %394 = vmatpush.msra.mxu0 0.0
    %395 = vmatpush.msra.mxu0 0.0
    %396 = vmatpush.msra.mxu0 0.0
    %397 = vmatpush.msra.mxu0 0.0
    %398 = vmatpush.msra.mxu0 %v378
    %399 = vmatmul.f32.gmra.mxu0 %v381
    %v400 = vpop.f32.mrf.mxu0
    %v401 = vadd.f32 0.0, %v400
    %402 = vdwg.mxu0
    %403 = vrot.lane.b32.xlu0 %v290, 64
    %v404 = vpop.permute.xlu0 %403
    %v407 = vsel %vm299, %v376, 0
    %409 = vmatpush.msra.mxu0 0.0
    %410 = vmatpush.msra.mxu0 0.0
    %411 = vmatpush.msra.mxu0 0.0
    %412 = vmatpush.msra.mxu0 0.0
    %413 = vmatpush.msra.mxu0 0.0
    %414 = vmatpush.msra.mxu0 0.0
    %415 = vmatpush.msra.mxu0 0.0
    %416 = vmatpush.msra.mxu0 0.0
    %417 = vmatpush.msra.mxu0 0.0
    %418 = vmatpush.msra.mxu0 0.0
    %419 = vmatpush.msra.mxu0 0.0
    %420 = vmatpush.msra.mxu0 0.0
    %421 = vmatpush.msra.mxu0 0.0
    %422 = vmatpush.msra.mxu0 0.0
    %423 = vmatpush.msra.mxu0 0.0
    %424 = vmatpush.msra.mxu0 %v404
    %425 = vmatmul.f32.gmra.mxu0 %v407
    %v426 = vpop.f32.mrf.mxu0
    %v427 = vadd.f32 0.0, %v426
    %428 = vdwg.mxu0
    %429 = vrot.lane.b32.xlu0 %v287, 120
    %v430 = vpop.permute.xlu0 %429
    %431 = vrot.lane.b32.xlu0 %v287, 88
    %v432 = vpop.permute.xlu0 %431
    %v433 = vsel %vm299, %v430, 0
    %v435 = vsel %vm299, %v432, 0
    %437 = vmatpush.xpose.msra.mxu0 0.0
    %438 = vmatpush.xpose.msra.mxu0 0.0
    %439 = vmatpush.xpose.msra.mxu0 0.0
    %440 = vmatpush.xpose.msra.mxu0 0.0
    %441 = vmatpush.xpose.msra.mxu0 0.0
    %442 = vmatpush.xpose.msra.mxu0 0.0
    %443 = vmatpush.xpose.msra.mxu0 0.0
    %444 = vmatpush.xpose.msra.mxu0 0.0
    %445 = vmatpush.xpose.msra.mxu0 0.0
    %446 = vmatpush.xpose.msra.mxu0 0.0
    %447 = vmatpush.xpose.msra.mxu0 0.0
    %448 = vmatpush.xpose.msra.mxu0 0.0
    %449 = vmatpush.xpose.msra.mxu0 0.0
    %450 = vmatpush.xpose.msra.mxu0 0.0
    %451 = vmatpush.xpose.msra.mxu0 0.0
    %452 = vmatpush.xpose.msra.mxu0 %v435
    %453 = vmatmul.f32.gmra.mxu0 %v433
    %v454 = vpop.f32.mrf.mxu0
    %v455 = vadd.f32 0.0, %v454
    %456 = vdwg.mxu0
    %457 = vrot.lane.b32.xlu0 %v290, 120
    %v458 = vpop.permute.xlu0 %457
    %459 = vrot.lane.b32.xlu0 %v290, 88
    %v460 = vpop.permute.xlu0 %459
    %v461 = vsel %vm299, %v458, 0
    %v463 = vsel %vm299, %v460, 0
    %465 = vmatpush.xpose.msra.mxu0 0.0
    %466 = vmatpush.xpose.msra.mxu0 0.0
    %467 = vmatpush.xpose.msra.mxu0 0.0
    %468 = vmatpush.xpose.msra.mxu0 0.0
    %469 = vmatpush.xpose.msra.mxu0 0.0
    %470 = vmatpush.xpose.msra.mxu0 0.0
    %471 = vmatpush.xpose.msra.mxu0 0.0
    %472 = vmatpush.xpose.msra.mxu0 0.0
    %473 = vmatpush.xpose.msra.mxu0 0.0
    %474 = vmatpush.xpose.msra.mxu0 0.0
    %475 = vmatpush.xpose.msra.mxu0 0.0
    %476 = vmatpush.xpose.msra.mxu0 0.0
    %477 = vmatpush.xpose.msra.mxu0 0.0
    %478 = vmatpush.xpose.msra.mxu0 0.0
    %479 = vmatpush.xpose.msra.mxu0 0.0
    %480 = vmatpush.xpose.msra.mxu0 %v463
    %481 = vmatmul.f32.gmra.mxu0 %v461
    %v482 = vpop.f32.mrf.mxu0
    %v483 = vadd.f32 0.0, %v482
    %484 = vdwg.mxu0
    %v485 = vmul.f32 %v455, 0.35355338
    %v486 = vmul.f32 %v483, 0.35355338
    %v487 = vadd.f32 %v485, %v152
    %v488 = vadd.f32 %v486, %v153
    %v489 = vsel %vm299, %v487, -inf
    %490 = vmax.xlane.f32.xlu0 %v489
    %v491 = vpop.xlane.xlu0 %490
    %v492 = vsel %vm299, %v488, -inf
    %493 = vmax.xlane.f32.xlu0 %v492
    %v494 = vpop.xlane.xlu0 %493
    %v495 = vsub.f32 %v487, %v491
    %v496 = vsub.f32 %v488, %v494
    %v497 = vmul.f32 %v495, 1.442695
    %v498 = vpow.pop %v497
    %v499 = vmul.f32 %v496, 1.442695
    %v500 = vpow.pop %v499
    %v501 = vsel %vm299, %v498, 0.0
    %502 = vadd.xlane.f32.xlu0 %v501
    %v503 = vpop.xlane.xlu0 %502
    %v504 = vsel %vm299, %v500, 0.0
    %505 = vadd.xlane.f32.xlu0 %v504
    %v506 = vpop.xlane.xlu0 %505
    %v507 = vrcp.pop %v503
    %v508 = vrcp.pop %v506
    %v509 = vmul.f32 %v498, %v507
    %v510 = vmul.f32 %v500, %v508
    %511 = vrot.lane.b32.xlu0 %v287, 56
    %v512 = vpop.permute.xlu0 %511
    %v515 = vsel %vm299, %v509, 0
    %517 = vmatpush.msra.mxu0 0.0
    %518 = vmatpush.msra.mxu0 0.0
    %519 = vmatpush.msra.mxu0 0.0
    %520 = vmatpush.msra.mxu0 0.0
    %521 = vmatpush.msra.mxu0 0.0
    %522 = vmatpush.msra.mxu0 0.0
    %523 = vmatpush.msra.mxu0 0.0
    %524 = vmatpush.msra.mxu0 0.0
    %525 = vmatpush.msra.mxu0 0.0
    %526 = vmatpush.msra.mxu0 0.0
    %527 = vmatpush.msra.mxu0 0.0
    %528 = vmatpush.msra.mxu0 0.0
    %529 = vmatpush.msra.mxu0 0.0
    %530 = vmatpush.msra.mxu0 0.0
    %531 = vmatpush.msra.mxu0 0.0
    %532 = vmatpush.msra.mxu0 %v512
    %533 = vmatmul.f32.gmra.mxu0 %v515
    %v534 = vpop.f32.mrf.mxu0
    %v535 = vadd.f32 0.0, %v534
    %536 = vdwg.mxu0
    %537 = vrot.lane.b32.xlu0 %v290, 56
    %v538 = vpop.permute.xlu0 %537
    %v541 = vsel %vm299, %v510, 0
    %543 = vmatpush.msra.mxu0 0.0
    %544 = vmatpush.msra.mxu0 0.0
    %545 = vmatpush.msra.mxu0 0.0
    %546 = vmatpush.msra.mxu0 0.0
    %547 = vmatpush.msra.mxu0 0.0
    %548 = vmatpush.msra.mxu0 0.0
    %549 = vmatpush.msra.mxu0 0.0
    %550 = vmatpush.msra.mxu0 0.0
    %551 = vmatpush.msra.mxu0 0.0
    %552 = vmatpush.msra.mxu0 0.0
    %553 = vmatpush.msra.mxu0 0.0
    %554 = vmatpush.msra.mxu0 0.0
    %555 = vmatpush.msra.mxu0 0.0
    %556 = vmatpush.msra.mxu0 0.0
    %557 = vmatpush.msra.mxu0 0.0
    %558 = vmatpush.msra.mxu0 %v538
    %559 = vmatmul.f32.gmra.mxu0 %v541
    %v560 = vpop.f32.mrf.mxu0
    %v561 = vadd.f32 0.0, %v560
    %562 = vdwg.mxu0
    %v564 = vsel %vm299, %v535, 0
    %v567 = vsel %vm299, %v561, 0
    %569 = vmatpush.msra.mxu0 0.0
    %570 = vmatpush.msra.mxu0 0.0
    %571 = vmatpush.msra.mxu0 0.0
    %572 = vmatpush.msra.mxu0 0.0
    %573 = vmatpush.msra.mxu0 0.0
    %574 = vmatpush.msra.mxu0 0.0
    %575 = vmatpush.msra.mxu0 0.0
    %576 = vmatpush.msra.mxu0 0.0
    %577 = vmatpush.msra.mxu0 0.0
    %578 = vmatpush.msra.mxu0 0.0
    %579 = vmatpush.msra.mxu0 0.0
    %580 = vmatpush.msra.mxu0 0.0
    %581 = vmatpush.msra.mxu0 0.0
    %582 = vmatpush.msra.mxu0 0.0
    %583 = vmatpush.msra.mxu0 0.0
    %584 = vmatpush.msra.mxu0 %v293
    %585 = vmatmul.f32.gmra.mxu0 %v564
    %v586 = vpop.f32.mrf.mxu0
    %v587 = vadd.f32 0.0, %v586
    %588 = vmatmul.f32.gmra.mxu0 %v567
    %v589 = vpop.f32.mrf.mxu0
    %v590 = vadd.f32 0.0, %v589
    %591 = vdwg.mxu0
    %v593 = vsel %vm299, %v401, 0
    %v596 = vsel %vm299, %v427, 0
    %598 = vmatpush.msra.mxu0 0.0
    %599 = vmatpush.msra.mxu0 0.0
    %600 = vmatpush.msra.mxu0 0.0
    %601 = vmatpush.msra.mxu0 0.0
    %602 = vmatpush.msra.mxu0 0.0
    %603 = vmatpush.msra.mxu0 0.0
    %604 = vmatpush.msra.mxu0 0.0
    %605 = vmatpush.msra.mxu0 0.0
    %606 = vmatpush.msra.mxu0 0.0
    %607 = vmatpush.msra.mxu0 0.0
    %608 = vmatpush.msra.mxu0 0.0
    %609 = vmatpush.msra.mxu0 0.0
    %610 = vmatpush.msra.mxu0 0.0
    %611 = vmatpush.msra.mxu0 0.0
    %612 = vmatpush.msra.mxu0 0.0
    %613 = vmatpush.msra.mxu0 %v292
    %614 = vmatmul.f32.gmra.mxu0 %v593
    %v615 = vpop.f32.mrf.mxu0
    %v616 = vadd.f32 %v587, %v615
    %617 = vmatmul.f32.gmra.mxu0 %v596
    %v618 = vpop.f32.mrf.mxu0
    %v619 = vadd.f32 %v590, %v618
    %620 = vdwg.mxu0
    %621 = vrot.lane.b32.xlu0 %v287, 112
    %v622 = vpop.permute.xlu0 %621
    %623 = vrot.lane.b32.xlu0 %v287, 80
    %v624 = vpop.permute.xlu0 %623
    %v625 = vsel %vm299, %v622, 0
    %v627 = vsel %vm299, %v624, 0
    %629 = vmatpush.xpose.msra.mxu0 0.0
    %630 = vmatpush.xpose.msra.mxu0 0.0
    %631 = vmatpush.xpose.msra.mxu0 0.0
    %632 = vmatpush.xpose.msra.mxu0 0.0
    %633 = vmatpush.xpose.msra.mxu0 0.0
    %634 = vmatpush.xpose.msra.mxu0 0.0
    %635 = vmatpush.xpose.msra.mxu0 0.0
    %636 = vmatpush.xpose.msra.mxu0 0.0
    %637 = vmatpush.xpose.msra.mxu0 0.0
    %638 = vmatpush.xpose.msra.mxu0 0.0
    %639 = vmatpush.xpose.msra.mxu0 0.0
    %640 = vmatpush.xpose.msra.mxu0 0.0
    %641 = vmatpush.xpose.msra.mxu0 0.0
    %642 = vmatpush.xpose.msra.mxu0 0.0
    %643 = vmatpush.xpose.msra.mxu0 0.0
    %644 = vmatpush.xpose.msra.mxu0 %v627
    %645 = vmatmul.f32.gmra.mxu0 %v625
    %v646 = vpop.f32.mrf.mxu0
    %v647 = vadd.f32 0.0, %v646
    %648 = vdwg.mxu0
    %649 = vrot.lane.b32.xlu0 %v290, 112
    %v650 = vpop.permute.xlu0 %649
    %651 = vrot.lane.b32.xlu0 %v290, 80
    %v652 = vpop.permute.xlu0 %651
    %v653 = vsel %vm299, %v650, 0
    %v655 = vsel %vm299, %v652, 0
    %657 = vmatpush.xpose.msra.mxu0 0.0
    %658 = vmatpush.xpose.msra.mxu0 0.0
    %659 = vmatpush.xpose.msra.mxu0 0.0
    %660 = vmatpush.xpose.msra.mxu0 0.0
    %661 = vmatpush.xpose.msra.mxu0 0.0
    %662 = vmatpush.xpose.msra.mxu0 0.0
    %663 = vmatpush.xpose.msra.mxu0 0.0
    %664 = vmatpush.xpose.msra.mxu0 0.0
    %665 = vmatpush.xpose.msra.mxu0 0.0
    %666 = vmatpush.xpose.msra.mxu0 0.0
    %667 = vmatpush.xpose.msra.mxu0 0.0
    %668 = vmatpush.xpose.msra.mxu0 0.0
    %669 = vmatpush.xpose.msra.mxu0 0.0
    %670 = vmatpush.xpose.msra.mxu0 0.0
    %671 = vmatpush.xpose.msra.mxu0 0.0
    %672 = vmatpush.xpose.msra.mxu0 %v655
    %673 = vmatmul.f32.gmra.mxu0 %v653
    %v674 = vpop.f32.mrf.mxu0
    %v675 = vadd.f32 0.0, %v674
    %676 = vdwg.mxu0
    %v677 = vmul.f32 %v647, 0.35355338
    %v678 = vmul.f32 %v675, 0.35355338
    %v679 = vadd.f32 %v677, %v152
    %v680 = vadd.f32 %v678, %v153
    %v681 = vsel %vm299, %v679, -inf
    %682 = vmax.xlane.f32.xlu0 %v681
    %v683 = vpop.xlane.xlu0 %682
    %v684 = vsel %vm299, %v680, -inf
    %685 = vmax.xlane.f32.xlu0 %v684
    %v686 = vpop.xlane.xlu0 %685
    %v687 = vsub.f32 %v679, %v683
    %v688 = vsub.f32 %v680, %v686
    %v689 = vmul.f32 %v687, 1.442695
    %v690 = vpow.pop %v689
    %v691 = vmul.f32 %v688, 1.442695
    %v692 = vpow.pop %v691
    %v693 = vsel %vm299, %v690, 0.0
    %694 = vadd.xlane.f32.xlu0 %v693
    %v695 = vpop.xlane.xlu0 %694
    %v696 = vsel %vm299, %v692, 0.0
    %697 = vadd.xlane.f32.xlu0 %v696
    %v698 = vpop.xlane.xlu0 %697
    %v699 = vrcp.pop %v695
    %v700 = vrcp.pop %v698
    %v701 = vmul.f32 %v690, %v699
    %v702 = vmul.f32 %v692, %v700
    %703 = vrot.lane.b32.xlu0 %v287, 48
    %v704 = vpop.permute.xlu0 %703
    %v707 = vsel %vm299, %v701, 0
    %709 = vmatpush.msra.mxu0 0.0
    %710 = vmatpush.msra.mxu0 0.0
    %711 = vmatpush.msra.mxu0 0.0
    %712 = vmatpush.msra.mxu0 0.0
    %713 = vmatpush.msra.mxu0 0.0
    %714 = vmatpush.msra.mxu0 0.0
    %715 = vmatpush.msra.mxu0 0.0
    %716 = vmatpush.msra.mxu0 0.0
    %717 = vmatpush.msra.mxu0 0.0
    %718 = vmatpush.msra.mxu0 0.0
    %719 = vmatpush.msra.mxu0 0.0
    %720 = vmatpush.msra.mxu0 0.0
    %721 = vmatpush.msra.mxu0 0.0
    %722 = vmatpush.msra.mxu0 0.0
    %723 = vmatpush.msra.mxu0 0.0
    %724 = vmatpush.msra.mxu0 %v704
    %725 = vmatmul.f32.gmra.mxu0 %v707
    %v726 = vpop.f32.mrf.mxu0
    %v727 = vadd.f32 0.0, %v726
    %728 = vdwg.mxu0
    %729 = vrot.lane.b32.xlu0 %v290, 48
    %v730 = vpop.permute.xlu0 %729
    %v733 = vsel %vm299, %v702, 0
    %735 = vmatpush.msra.mxu0 0.0
    %736 = vmatpush.msra.mxu0 0.0
    %737 = vmatpush.msra.mxu0 0.0
    %738 = vmatpush.msra.mxu0 0.0
    %739 = vmatpush.msra.mxu0 0.0
    %740 = vmatpush.msra.mxu0 0.0
    %741 = vmatpush.msra.mxu0 0.0
    %742 = vmatpush.msra.mxu0 0.0
    %743 = vmatpush.msra.mxu0 0.0
    %744 = vmatpush.msra.mxu0 0.0
    %745 = vmatpush.msra.mxu0 0.0
    %746 = vmatpush.msra.mxu0 0.0
    %747 = vmatpush.msra.mxu0 0.0
    %748 = vmatpush.msra.mxu0 0.0
    %749 = vmatpush.msra.mxu0 0.0
    %750 = vmatpush.msra.mxu0 %v730
    %751 = vmatmul.f32.gmra.mxu0 %v733
    %v752 = vpop.f32.mrf.mxu0
    %v753 = vadd.f32 0.0, %v752
    %754 = vdwg.mxu0
    %v756 = vsel %vm299, %v727, 0
    %v759 = vsel %vm299, %v753, 0
    %761 = vmatpush.msra.mxu0 0.0
    %762 = vmatpush.msra.mxu0 0.0
    %763 = vmatpush.msra.mxu0 0.0
    %764 = vmatpush.msra.mxu0 0.0
    %765 = vmatpush.msra.mxu0 0.0
    %766 = vmatpush.msra.mxu0 0.0
    %767 = vmatpush.msra.mxu0 0.0
    %768 = vmatpush.msra.mxu0 0.0
    %769 = vmatpush.msra.mxu0 0.0
    %770 = vmatpush.msra.mxu0 0.0
    %771 = vmatpush.msra.mxu0 0.0
    %772 = vmatpush.msra.mxu0 0.0
    %773 = vmatpush.msra.mxu0 0.0
    %774 = vmatpush.msra.mxu0 0.0
    %775 = vmatpush.msra.mxu0 0.0
    %776 = vmatpush.msra.mxu0 %v294
    %777 = vmatmul.f32.gmra.mxu0 %v756
    %v778 = vpop.f32.mrf.mxu0
    %v779 = vadd.f32 0.0, %v778
    %780 = vmatmul.f32.gmra.mxu0 %v759
    %v781 = vpop.f32.mrf.mxu0
    %v782 = vadd.f32 0.0, %v781
    %783 = vdwg.mxu0
    %v784 = vadd.f32 %v616, %v779
    %v785 = vadd.f32 %v619, %v782
    %786 = vrot.lane.b32.xlu0 %v287, 104
    %v787 = vpop.permute.xlu0 %786
    %788 = vrot.lane.b32.xlu0 %v287, 72
    %v789 = vpop.permute.xlu0 %788
    %v790 = vsel %vm299, %v787, 0
    %v792 = vsel %vm299, %v789, 0
    %794 = vmatpush.xpose.msra.mxu0 0.0
    %795 = vmatpush.xpose.msra.mxu0 0.0
    %796 = vmatpush.xpose.msra.mxu0 0.0
    %797 = vmatpush.xpose.msra.mxu0 0.0
    %798 = vmatpush.xpose.msra.mxu0 0.0
    %799 = vmatpush.xpose.msra.mxu0 0.0
    %800 = vmatpush.xpose.msra.mxu0 0.0
    %801 = vmatpush.xpose.msra.mxu0 0.0
    %802 = vmatpush.xpose.msra.mxu0 0.0
    %803 = vmatpush.xpose.msra.mxu0 0.0
    %804 = vmatpush.xpose.msra.mxu0 0.0
    %805 = vmatpush.xpose.msra.mxu0 0.0
    %806 = vmatpush.xpose.msra.mxu0 0.0
    %807 = vmatpush.xpose.msra.mxu0 0.0
    %808 = vmatpush.xpose.msra.mxu0 0.0
    %809 = vmatpush.xpose.msra.mxu0 %v792
    %810 = vmatmul.f32.gmra.mxu0 %v790
    %v811 = vpop.f32.mrf.mxu0
    %v812 = vadd.f32 0.0, %v811
    %813 = vdwg.mxu0
    %814 = vrot.lane.b32.xlu0 %v290, 104
    %v815 = vpop.permute.xlu0 %814
    %816 = vrot.lane.b32.xlu0 %v290, 72
    %v817 = vpop.permute.xlu0 %816
    %v818 = vsel %vm299, %v815, 0
    %v820 = vsel %vm299, %v817, 0
    %822 = vmatpush.xpose.msra.mxu0 0.0
    %823 = vmatpush.xpose.msra.mxu0 0.0
    %824 = vmatpush.xpose.msra.mxu0 0.0
    %825 = vmatpush.xpose.msra.mxu0 0.0
    %826 = vmatpush.xpose.msra.mxu0 0.0
    %827 = vmatpush.xpose.msra.mxu0 0.0
    %828 = vmatpush.xpose.msra.mxu0 0.0
    %829 = vmatpush.xpose.msra.mxu0 0.0
    %830 = vmatpush.xpose.msra.mxu0 0.0
    %831 = vmatpush.xpose.msra.mxu0 0.0
    %832 = vmatpush.xpose.msra.mxu0 0.0
    %833 = vmatpush.xpose.msra.mxu0 0.0
    %834 = vmatpush.xpose.msra.mxu0 0.0
    %835 = vmatpush.xpose.msra.mxu0 0.0
    %836 = vmatpush.xpose.msra.mxu0 0.0
    %837 = vmatpush.xpose.msra.mxu0 %v820
    %838 = vmatmul.f32.gmra.mxu0 %v818
    %v839 = vpop.f32.mrf.mxu0
    %v840 = vadd.f32 0.0, %v839
    %841 = vdwg.mxu0
    %v842 = vmul.f32 %v812, 0.35355338
    %v843 = vmul.f32 %v840, 0.35355338
    %v844 = vadd.f32 %v842, %v152
    %v845 = vadd.f32 %v843, %v153
    %v846 = vsel %vm299, %v844, -inf
    %847 = vmax.xlane.f32.xlu0 %v846
    %v848 = vpop.xlane.xlu0 %847
    %v849 = vsel %vm299, %v845, -inf
    %850 = vmax.xlane.f32.xlu0 %v849
    %v851 = vpop.xlane.xlu0 %850
    %v852 = vsub.f32 %v844, %v848
    %v853 = vsub.f32 %v845, %v851
    %v854 = vmul.f32 %v852, 1.442695
    %v855 = vpow.pop %v854
    %v856 = vmul.f32 %v853, 1.442695
    %v857 = vpow.pop %v856
    %v858 = vsel %vm299, %v855, 0.0
    %859 = vadd.xlane.f32.xlu0 %v858
    %v860 = vpop.xlane.xlu0 %859
    %v861 = vsel %vm299, %v857, 0.0
    %862 = vadd.xlane.f32.xlu0 %v861
    %v863 = vpop.xlane.xlu0 %862
    %v864 = vrcp.pop %v860
    %v865 = vrcp.pop %v863
    %v866 = vmul.f32 %v855, %v864
    %v867 = vmul.f32 %v857, %v865
    %868 = vrot.lane.b32.xlu0 %v287, 40
    %v869 = vpop.permute.xlu0 %868
    %v872 = vsel %vm299, %v866, 0
    %874 = vmatpush.msra.mxu0 0.0
    %875 = vmatpush.msra.mxu0 0.0
    %876 = vmatpush.msra.mxu0 0.0
    %877 = vmatpush.msra.mxu0 0.0
    %878 = vmatpush.msra.mxu0 0.0
    %879 = vmatpush.msra.mxu0 0.0
    %880 = vmatpush.msra.mxu0 0.0
    %881 = vmatpush.msra.mxu0 0.0
    %882 = vmatpush.msra.mxu0 0.0
    %883 = vmatpush.msra.mxu0 0.0
    %884 = vmatpush.msra.mxu0 0.0
    %885 = vmatpush.msra.mxu0 0.0
    %886 = vmatpush.msra.mxu0 0.0
    %887 = vmatpush.msra.mxu0 0.0
    %888 = vmatpush.msra.mxu0 0.0
    %889 = vmatpush.msra.mxu0 %v869
    %890 = vmatmul.f32.gmra.mxu0 %v872
    %v891 = vpop.f32.mrf.mxu0
    %v892 = vadd.f32 0.0, %v891
    %893 = vdwg.mxu0
    %894 = vrot.lane.b32.xlu0 %v290, 40
    %v895 = vpop.permute.xlu0 %894
    %v898 = vsel %vm299, %v867, 0
    %900 = vmatpush.msra.mxu0 0.0
    %901 = vmatpush.msra.mxu0 0.0
    %902 = vmatpush.msra.mxu0 0.0
    %903 = vmatpush.msra.mxu0 0.0
    %904 = vmatpush.msra.mxu0 0.0
    %905 = vmatpush.msra.mxu0 0.0
    %906 = vmatpush.msra.mxu0 0.0
    %907 = vmatpush.msra.mxu0 0.0
    %908 = vmatpush.msra.mxu0 0.0
    %909 = vmatpush.msra.mxu0 0.0
    %910 = vmatpush.msra.mxu0 0.0
    %911 = vmatpush.msra.mxu0 0.0
    %912 = vmatpush.msra.mxu0 0.0
    %913 = vmatpush.msra.mxu0 0.0
    %914 = vmatpush.msra.mxu0 0.0
    %915 = vmatpush.msra.mxu0 %v895
    %916 = vmatmul.f32.gmra.mxu0 %v898
    %v917 = vpop.f32.mrf.mxu0
    %v918 = vadd.f32 0.0, %v917
    %919 = vdwg.mxu0
    %v921 = vsel %vm299, %v892, 0
    %v924 = vsel %vm299, %v918, 0
    %926 = vmatpush.msra.mxu0 0.0
    %927 = vmatpush.msra.mxu0 0.0
    %928 = vmatpush.msra.mxu0 0.0
    %929 = vmatpush.msra.mxu0 0.0
    %930 = vmatpush.msra.mxu0 0.0
    %931 = vmatpush.msra.mxu0 0.0
    %932 = vmatpush.msra.mxu0 0.0
    %933 = vmatpush.msra.mxu0 0.0
    %934 = vmatpush.msra.mxu0 0.0
    %935 = vmatpush.msra.mxu0 0.0
    %936 = vmatpush.msra.mxu0 0.0
    %937 = vmatpush.msra.mxu0 0.0
    %938 = vmatpush.msra.mxu0 0.0
    %939 = vmatpush.msra.mxu0 0.0
    %940 = vmatpush.msra.mxu0 0.0
    %941 = vmatpush.msra.mxu0 %v295
    %942 = vmatmul.f32.gmra.mxu0 %v921
    %v943 = vpop.f32.mrf.mxu0
    %v944 = vadd.f32 0.0, %v943
    %945 = vmatmul.f32.gmra.mxu0 %v924
    %v946 = vpop.f32.mrf.mxu0
    %v947 = vadd.f32 0.0, %v946
    %948 = vdwg.mxu0
    %v949 = vadd.f32 %v784, %v944
    %v950 = vadd.f32 %v785, %v947
    %v951 = vld [vmem:[%s7] sm:$0x1]
    %v953 = vperm.slane %v951, 0
    %v955 = vadd.f32 %v949, %v953
    %v956 = vadd.f32 %v950, %v953
    %v957 = vadd.f32 %v148, %v955
    %v958 = vadd.f32 %v149, %v956
    %v959 = vsel %vm158, %v957, 0.0
    %960 = vadd.xlane.f32.xlu0 %v959
    %v961 = vpop.xlane.xlu0 %960
    %v962 = vsel %vm158, %v958, 0.0
    %963 = vadd.xlane.f32.xlu0 %v962
    %v964 = vpop.xlane.xlu0 %963
    %v965 = vmul.f32 %v961, %v171
    %v966 = vmul.f32 %v964, %v171
    %v967 = vsub.f32 %v957, %v965
    %v968 = vsub.f32 %v958, %v966
    %v969 = vmul.f32 %v967, %v967
    %v970 = vmul.f32 %v968, %v968
    %v971 = vsel %vm158, %v969, 0.0
    %972 = vadd.xlane.f32.xlu0 %v971
    %v973 = vpop.xlane.xlu0 %972
    %v974 = vsel %vm158, %v970, 0.0
    %975 = vadd.xlane.f32.xlu0 %v974
    %v976 = vpop.xlane.xlu0 %975
    %v977 = vmul.f32 %v973, %v190
    %v978 = vmul.f32 %v976, %v190
    %v979 = vperm.slane %v156, 1
    %v980 = vmul.f32 %v979, %v967
    %v981 = vmul.f32 %v979, %v968
    %v982 = vrsqrt.pop %v977
    %v983 = vmul.f32 %v982, %v977
    %v984 = vmul.f32 %v983, %v982
    %v985 = vmul.f32 0.5, %v984
    %v986 = vsub.f32 1.5, %v985
    %v987 = vmul.f32 %v982, %v986
    %v988 = vmul.f32 %v977, %v987
    %vm989 = vcmp.eq.f32.partialorder %v977, inf
    %v990 = vsel %vm989, %v977, %v988
    %vm991 = vcmp.eq.f32.partialorder %v977, 0.0
    %v992 = vand.u32 %v977, 2147483648
    %v993 = vsel %vm991, %v992, %v990
    %v994 = vrsqrt.pop %v978
    %v995 = vmul.f32 %v994, %v978
    %v996 = vmul.f32 %v995, %v994
    %v997 = vmul.f32 0.5, %v996
    %v998 = vsub.f32 1.5, %v997
    %v999 = vmul.f32 %v994, %v998
    %v1000 = vmul.f32 %v978, %v999
    %vm1001 = vcmp.eq.f32.partialorder %v978, inf
    %v1002 = vsel %vm1001, %v978, %v1000
    %vm1003 = vcmp.eq.f32.partialorder %v978, 0.0
    %v1004 = vand.u32 %v978, 2147483648
    %v1005 = vsel %vm1003, %v1004, %v1002
    %v1006 = vadd.f32 %v993, 1e-06
    %v1007 = vadd.f32 %v1005, 1e-06
    %v1008 = vrcp.pop %v1006
    %v1009 = vmul.f32 %v1006, %v1008
    %v1010 = vsub.f32 1.0, %v1009
    %v1011 = vmul.f32 %v1008, %v1010
    %v1012 = vadd.f32 %v1008, %v1011
    %vm1013 = vweird.f32 %v1006
    %vm1014 = vweird.f32 %v1008
    %vm1015 = vmor %vm1013, %vm1014
    %v1016 = vsel %vm1015, %v1008, %v1012
    %v1017 = vand.u32 2147483647, %v1006
    %vm1018 = vcmp.eq.f32.partialorder %v1017, 8.507059e+37
    %v1019 = vand.u32 %v1006, 2147483648
    %v1020 = vor.u32 1.1754944e-38, %v1019
    %v1021 = vsel %vm1018, %v1020, %v1016
    %v1022 = vmul.f32 %v980, %v1021
    %v1023 = vrcp.pop %v1007
    %v1024 = vmul.f32 %v1007, %v1023
    %v1025 = vsub.f32 1.0, %v1024
    %v1026 = vmul.f32 %v1023, %v1025
    %v1027 = vadd.f32 %v1023, %v1026
    %vm1028 = vweird.f32 %v1007
    %vm1029 = vweird.f32 %v1023
    %vm1030 = vmor %vm1028, %vm1029
    %v1031 = vsel %vm1030, %v1023, %v1027
    %v1032 = vand.u32 2147483647, %v1007
    %vm1033 = vcmp.eq.f32.partialorder %v1032, 8.507059e+37
    %v1034 = vand.u32 %v1007, 2147483648
    %v1035 = vor.u32 1.1754944e-38, %v1034
    %v1036 = vsel %vm1033, %v1035, %v1031
    %v1037 = vmul.f32 %v981, %v1036
    %v1038 = vperm.slane %v157, 1
    %v1039 = vadd.f32 %v1022, %v1038
    %v1040 = vadd.f32 %v1037, %v1038
    %v1041 = vld [vmem:[%s8] sm:$0xff]
    %v1042 = vld [vmem:[%s8 + $0x8] sm:$0xff]
    %v1043 = vld [vmem:[%s8 + $0x10] sm:$0xff]
    %v1044 = vld [vmem:[%s8 + $0x18] sm:$0xff]
    %v1045 = vld [vmem:[%s9] sm:$0x1]
    %v1047 = vperm.slane %v1045, 0
    %v1050 = vsel %vm158, %v1039, 0
    %v1053 = vsel %vm158, %v1040, 0
    %1055 = vmatpush.msra.mxu0 0.0
    %1056 = vmatpush.msra.mxu0 0.0
    %1057 = vmatpush.msra.mxu0 0.0
    %1058 = vmatpush.msra.mxu0 0.0
    %1059 = vmatpush.msra.mxu0 0.0
    %1060 = vmatpush.msra.mxu0 0.0
    %1061 = vmatpush.msra.mxu0 0.0
    %1062 = vmatpush.msra.mxu0 0.0
    %1063 = vmatpush.msra.mxu0 0.0
    %1064 = vmatpush.msra.mxu0 0.0
    %1065 = vmatpush.msra.mxu0 0.0
    %1066 = vmatpush.msra.mxu0 0.0
    %1067 = vmatpush.msra.mxu0 %v1044
    %1068 = vmatpush.msra.mxu0 %v1043
    %1069 = vmatpush.msra.mxu0 %v1042
    %1070 = vmatpush.msra.mxu0 %v1041
    %1071 = vmatmul.f32.gmra.mxu0 %v1050
    %v1072 = vpop.f32.mrf.mxu0
    %v1073 = vadd.f32 %v1047, %v1072
    %1074 = vmatmul.f32.gmra.mxu0 %v1053
    %v1075 = vpop.f32.mrf.mxu0
    %v1076 = vadd.f32 %v1047, %v1075
    %1077 = vdwg.mxu0
    %v1078 = vld [vmem:[#allocation2] sm:$0xff]
    %v1079 = vld [vmem:[#allocation2 + $0x8] sm:$0xff]
    %v1080 = vld [vmem:[#allocation2 + $0x10] sm:$0xff]
    %v1081 = vld [vmem:[#allocation2 + $0x18] sm:$0xff]
    %v1082 = vld [vmem:[%s11] sm:$0x1]
    %v1084 = vperm.slane %v1082, 0
    %v1087 = vsel %vm158, %v150, 0
    %v1090 = vsel %vm158, %v151, 0
    %1092 = vmatpush.msra.mxu0 0.0
    %1093 = vmatpush.msra.mxu0 0.0
    %1094 = vmatpush.msra.mxu0 0.0
    %1095 = vmatpush.msra.mxu0 0.0
    %1096 = vmatpush.msra.mxu0 0.0
    %1097 = vmatpush.msra.mxu0 0.0
    %1098 = vmatpush.msra.mxu0 0.0
    %1099 = vmatpush.msra.mxu0 0.0
    %1100 = vmatpush.msra.mxu0 0.0
    %1101 = vmatpush.msra.mxu0 0.0
    %1102 = vmatpush.msra.mxu0 0.0
    %1103 = vmatpush.msra.mxu0 0.0
    %1104 = vmatpush.msra.mxu0 %v1081
    %1105 = vmatpush.msra.mxu0 %v1080
    %1106 = vmatpush.msra.mxu0 %v1079
    %1107 = vmatpush.msra.mxu0 %v1078
    %1108 = vmatmul.f32.gmra.mxu0 %v1087
    %v1109 = vpop.f32.mrf.mxu0
    %v1110 = vadd.f32 %v1084, %v1109
    %1111 = vmatmul.f32.gmra.mxu0 %v1090
    %v1112 = vpop.f32.mrf.mxu0
    %v1113 = vadd.f32 %v1084, %v1112
    %1114 = vdwg.mxu0
    %v1115 = vld [vmem:[#allocation5] sm:$0xff]
    %v1116 = vld [vmem:[#allocation5 + $0x8] sm:$0xff]
    %v1117 = vld [vmem:[#allocation5 + $0x10] sm:$0xff]
    %v1118 = vld [vmem:[#allocation5 + $0x18] sm:$0xff]
    %v1120 = vsel %vm299, %v1073, 0
    %v1123 = vsel %vm299, %v1110, 0
    %1125 = vmatpush.xpose.msra.mxu0 0.0
    %1126 = vmatpush.xpose.msra.mxu0 0.0
    %1127 = vmatpush.xpose.msra.mxu0 0.0
    %1128 = vmatpush.xpose.msra.mxu0 0.0
    %1129 = vmatpush.xpose.msra.mxu0 0.0
    %1130 = vmatpush.xpose.msra.mxu0 0.0
    %1131 = vmatpush.xpose.msra.mxu0 0.0
    %1132 = vmatpush.xpose.msra.mxu0 0.0
    %1133 = vmatpush.xpose.msra.mxu0 0.0
    %1134 = vmatpush.xpose.msra.mxu0 0.0
    %1135 = vmatpush.xpose.msra.mxu0 0.0
    %1136 = vmatpush.xpose.msra.mxu0 0.0
    %1137 = vmatpush.xpose.msra.mxu0 0.0
    %1138 = vmatpush.xpose.msra.mxu0 0.0
    %1139 = vmatpush.xpose.msra.mxu0 0.0
    %1140 = vmatpush.xpose.msra.mxu0 %v1123
    %1141 = vmatmul.f32.gmra.mxu0 %v1120
    %v1142 = vpop.f32.mrf.mxu0
    %v1143 = vadd.f32 0.0, %v1142
    %1144 = vdwg.mxu0
    %v1146 = vsel %vm299, %v1076, 0
    %v1149 = vsel %vm299, %v1113, 0
    %1151 = vmatpush.xpose.msra.mxu0 0.0
    %1152 = vmatpush.xpose.msra.mxu0 0.0
    %1153 = vmatpush.xpose.msra.mxu0 0.0
    %1154 = vmatpush.xpose.msra.mxu0 0.0
    %1155 = vmatpush.xpose.msra.mxu0 0.0
    %1156 = vmatpush.xpose.msra.mxu0 0.0
    %1157 = vmatpush.xpose.msra.mxu0 0.0
    %1158 = vmatpush.xpose.msra.mxu0 0.0
    %1159 = vmatpush.xpose.msra.mxu0 0.0
    %1160 = vmatpush.xpose.msra.mxu0 0.0
    %1161 = vmatpush.xpose.msra.mxu0 0.0
    %1162 = vmatpush.xpose.msra.mxu0 0.0
    %1163 = vmatpush.xpose.msra.mxu0 0.0
    %1164 = vmatpush.xpose.msra.mxu0 0.0
    %1165 = vmatpush.xpose.msra.mxu0 0.0
    %1166 = vmatpush.xpose.msra.mxu0 %v1149
    %1167 = vmatmul.f32.gmra.mxu0 %v1146
    %v1168 = vpop.f32.mrf.mxu0
    %v1169 = vadd.f32 0.0, %v1168
    %1170 = vdwg.mxu0
    %v1171 = vmul.f32 %v1143, 0.35355338
    %v1172 = vmul.f32 %v1169, 0.35355338
    %v1173 = vadd.f32 %v1171, %v154
    %v1174 = vadd.f32 %v1172, %v155
    %v1175 = vsel %vm299, %v1173, -inf
    %1176 = vmax.xlane.f32.xlu0 %v1175
    %v1177 = vpop.xlane.xlu0 %1176
    %v1178 = vsel %vm299, %v1174, -inf
    %1179 = vmax.xlane.f32.xlu0 %v1178
    %v1180 = vpop.xlane.xlu0 %1179
    %v1181 = vsub.f32 %v1173, %v1177
    %v1182 = vsub.f32 %v1174, %v1180
    %v1183 = vmul.f32 %v1181, 1.442695
    %v1184 = vpow.pop %v1183
    %v1185 = vmul.f32 %v1182, 1.442695
    %v1186 = vpow.pop %v1185
    %v1187 = vsel %vm299, %v1184, 0.0
    %1188 = vadd.xlane.f32.xlu0 %v1187
    %v1189 = vpop.xlane.xlu0 %1188
    %v1190 = vsel %vm299, %v1186, 0.0
    %1191 = vadd.xlane.f32.xlu0 %v1190
    %v1192 = vpop.xlane.xlu0 %1191
    %v1193 = vrcp.pop %v1189
    %v1194 = vrcp.pop %v1192
    %v1195 = vmul.f32 %v1184, %v1193
    %v1196 = vmul.f32 %v1186, %v1194
    %1197 = vrot.lane.b32.xlu0 %v1110, 96
    %v1198 = vpop.permute.xlu0 %1197
    %v1201 = vsel %vm299, %v1195, 0
    %1203 = vmatpush.msra.mxu0 0.0
    %1204 = vmatpush.msra.mxu0 0.0
    %1205 = vmatpush.msra.mxu0 0.0
    %1206 = vmatpush.msra.mxu0 0.0
    %1207 = vmatpush.msra.mxu0 0.0
    %1208 = vmatpush.msra.mxu0 0.0
    %1209 = vmatpush.msra.mxu0 0.0
    %1210 = vmatpush.msra.mxu0 0.0
    %1211 = vmatpush.msra.mxu0 0.0
    %1212 = vmatpush.msra.mxu0 0.0
    %1213 = vmatpush.msra.mxu0 0.0
    %1214 = vmatpush.msra.mxu0 0.0
    %1215 = vmatpush.msra.mxu0 0.0
    %1216 = vmatpush.msra.mxu0 0.0
    %1217 = vmatpush.msra.mxu0 0.0
    %1218 = vmatpush.msra.mxu0 %v1198
    %1219 = vmatmul.f32.gmra.mxu0 %v1201
    %v1220 = vpop.f32.mrf.mxu0
    %v1221 = vadd.f32 0.0, %v1220
    %1222 = vdwg.mxu0
    %1223 = vrot.lane.b32.xlu0 %v1113, 96
    %v1224 = vpop.permute.xlu0 %1223
    %v1227 = vsel %vm299, %v1196, 0
    %1229 = vmatpush.msra.mxu0 0.0
    %1230 = vmatpush.msra.mxu0 0.0
    %1231 = vmatpush.msra.mxu0 0.0
    %1232 = vmatpush.msra.mxu0 0.0
    %1233 = vmatpush.msra.mxu0 0.0
    %1234 = vmatpush.msra.mxu0 0.0
    %1235 = vmatpush.msra.mxu0 0.0
    %1236 = vmatpush.msra.mxu0 0.0
    %1237 = vmatpush.msra.mxu0 0.0
    %1238 = vmatpush.msra.mxu0 0.0
    %1239 = vmatpush.msra.mxu0 0.0
    %1240 = vmatpush.msra.mxu0 0.0
    %1241 = vmatpush.msra.mxu0 0.0
    %1242 = vmatpush.msra.mxu0 0.0
    %1243 = vmatpush.msra.mxu0 0.0
    %1244 = vmatpush.msra.mxu0 %v1224
    %1245 = vmatmul.f32.gmra.mxu0 %v1227
    %v1246 = vpop.f32.mrf.mxu0
    %v1247 = vadd.f32 0.0, %v1246
    %1248 = vdwg.mxu0
    %1249 = vrot.lane.b32.xlu0 %v1073, 120
    %v1250 = vpop.permute.xlu0 %1249
    %1251 = vrot.lane.b32.xlu0 %v1110, 120
    %v1252 = vpop.permute.xlu0 %1251
    %v1253 = vsel %vm299, %v1250, 0
    %v1255 = vsel %vm299, %v1252, 0
    %1257 = vmatpush.xpose.msra.mxu0 0.0
    %1258 = vmatpush.xpose.msra.mxu0 0.0
    %1259 = vmatpush.xpose.msra.mxu0 0.0
    %1260 = vmatpush.xpose.msra.mxu0 0.0
    %1261 = vmatpush.xpose.msra.mxu0 0.0
    %1262 = vmatpush.xpose.msra.mxu0 0.0
    %1263 = vmatpush.xpose.msra.mxu0 0.0
    %1264 = vmatpush.xpose.msra.mxu0 0.0
    %1265 = vmatpush.xpose.msra.mxu0 0.0
    %1266 = vmatpush.xpose.msra.mxu0 0.0
    %1267 = vmatpush.xpose.msra.mxu0 0.0
    %1268 = vmatpush.xpose.msra.mxu0 0.0
    %1269 = vmatpush.xpose.msra.mxu0 0.0
    %1270 = vmatpush.xpose.msra.mxu0 0.0
    %1271 = vmatpush.xpose.msra.mxu0 0.0
    %1272 = vmatpush.xpose.msra.mxu0 %v1255
    %1273 = vmatmul.f32.gmra.mxu0 %v1253
    %v1274 = vpop.f32.mrf.mxu0
    %v1275 = vadd.f32 0.0, %v1274
    %1276 = vdwg.mxu0
    %1277 = vrot.lane.b32.xlu0 %v1076, 120
    %v1278 = vpop.permute.xlu0 %1277
    %1279 = vrot.lane.b32.xlu0 %v1113, 120
    %v1280 = vpop.permute.xlu0 %1279
    %v1281 = vsel %vm299, %v1278, 0
    %v1283 = vsel %vm299, %v1280, 0
    %1285 = vmatpush.xpose.msra.mxu0 0.0
    %1286 = vmatpush.xpose.msra.mxu0 0.0
    %1287 = vmatpush.xpose.msra.mxu0 0.0
    %1288 = vmatpush.xpose.msra.mxu0 0.0
    %1289 = vmatpush.xpose.msra.mxu0 0.0
    %1290 = vmatpush.xpose.msra.mxu0 0.0
    %1291 = vmatpush.xpose.msra.mxu0 0.0
    %1292 = vmatpush.xpose.msra.mxu0 0.0
    %1293 = vmatpush.xpose.msra.mxu0 0.0
    %1294 = vmatpush.xpose.msra.mxu0 0.0
    %1295 = vmatpush.xpose.msra.mxu0 0.0
    %1296 = vmatpush.xpose.msra.mxu0 0.0
    %1297 = vmatpush.xpose.msra.mxu0 0.0
    %1298 = vmatpush.xpose.msra.mxu0 0.0
    %1299 = vmatpush.xpose.msra.mxu0 0.0
    %1300 = vmatpush.xpose.msra.mxu0 %v1283
    %1301 = vmatmul.f32.gmra.mxu0 %v1281
    %v1302 = vpop.f32.mrf.mxu0
    %v1303 = vadd.f32 0.0, %v1302
    %1304 = vdwg.mxu0
    %v1305 = vmul.f32 %v1275, 0.35355338
    %v1306 = vmul.f32 %v1303, 0.35355338
    %v1307 = vadd.f32 %v1305, %v154
    %v1308 = vadd.f32 %v1306, %v155
    %v1309 = vsel %vm299, %v1307, -inf
    %1310 = vmax.xlane.f32.xlu0 %v1309
    %v1311 = vpop.xlane.xlu0 %1310
    %v1312 = vsel %vm299, %v1308, -inf
    %1313 = vmax.xlane.f32.xlu0 %v1312
    %v1314 = vpop.xlane.xlu0 %1313
    %v1315 = vsub.f32 %v1307, %v1311
    %v1316 = vsub.f32 %v1308, %v1314
    %v1317 = vmul.f32 %v1315, 1.442695
    %v1318 = vpow.pop %v1317
    %v1319 = vmul.f32 %v1316, 1.442695
    %v1320 = vpow.pop %v1319
    %v1321 = vsel %vm299, %v1318, 0.0
    %1322 = vadd.xlane.f32.xlu0 %v1321
    %v1323 = vpop.xlane.xlu0 %1322
    %v1324 = vsel %vm299, %v1320, 0.0
    %1325 = vadd.xlane.f32.xlu0 %v1324
    %v1326 = vpop.xlane.xlu0 %1325
    %v1327 = vrcp.pop %v1323
    %v1328 = vrcp.pop %v1326
    %v1329 = vmul.f32 %v1318, %v1327
    %v1330 = vmul.f32 %v1320, %v1328
    %1331 = vrot.lane.b32.xlu0 %v1110, 88
    %v1332 = vpop.permute.xlu0 %1331
    %v1335 = vsel %vm299, %v1329, 0
    %1337 = vmatpush.msra.mxu0 0.0
    %1338 = vmatpush.msra.mxu0 0.0
    %1339 = vmatpush.msra.mxu0 0.0
    %1340 = vmatpush.msra.mxu0 0.0
    %1341 = vmatpush.msra.mxu0 0.0
    %1342 = vmatpush.msra.mxu0 0.0
    %1343 = vmatpush.msra.mxu0 0.0
    %1344 = vmatpush.msra.mxu0 0.0
    %1345 = vmatpush.msra.mxu0 0.0
    %1346 = vmatpush.msra.mxu0 0.0
    %1347 = vmatpush.msra.mxu0 0.0
    %1348 = vmatpush.msra.mxu0 0.0
    %1349 = vmatpush.msra.mxu0 0.0
    %1350 = vmatpush.msra.mxu0 0.0
    %1351 = vmatpush.msra.mxu0 0.0
    %1352 = vmatpush.msra.mxu0 %v1332
    %1353 = vmatmul.f32.gmra.mxu0 %v1335
    %v1354 = vpop.f32.mrf.mxu0
    %v1355 = vadd.f32 0.0, %v1354
    %1356 = vdwg.mxu0
    %1357 = vrot.lane.b32.xlu0 %v1113, 88
    %v1358 = vpop.permute.xlu0 %1357
    %v1361 = vsel %vm299, %v1330, 0
    %1363 = vmatpush.msra.mxu0 0.0
    %1364 = vmatpush.msra.mxu0 0.0
    %1365 = vmatpush.msra.mxu0 0.0
    %1366 = vmatpush.msra.mxu0 0.0
    %1367 = vmatpush.msra.mxu0 0.0
    %1368 = vmatpush.msra.mxu0 0.0
    %1369 = vmatpush.msra.mxu0 0.0
    %1370 = vmatpush.msra.mxu0 0.0
    %1371 = vmatpush.msra.mxu0 0.0
    %1372 = vmatpush.msra.mxu0 0.0
    %1373 = vmatpush.msra.mxu0 0.0
    %1374 = vmatpush.msra.mxu0 0.0
    %1375 = vmatpush.msra.mxu0 0.0
    %1376 = vmatpush.msra.mxu0 0.0
    %1377 = vmatpush.msra.mxu0 0.0
    %1378 = vmatpush.msra.mxu0 %v1358
    %1379 = vmatmul.f32.gmra.mxu0 %v1361
    %v1380 = vpop.f32.mrf.mxu0
    %v1381 = vadd.f32 0.0, %v1380
    %1382 = vdwg.mxu0
    %v1384 = vsel %vm299, %v1355, 0
    %v1387 = vsel %vm299, %v1381, 0
    %1389 = vmatpush.msra.mxu0 0.0
    %1390 = vmatpush.msra.mxu0 0.0
    %1391 = vmatpush.msra.mxu0 0.0
    %1392 = vmatpush.msra.mxu0 0.0
    %1393 = vmatpush.msra.mxu0 0.0
    %1394 = vmatpush.msra.mxu0 0.0
    %1395 = vmatpush.msra.mxu0 0.0
    %1396 = vmatpush.msra.mxu0 0.0
    %1397 = vmatpush.msra.mxu0 0.0
    %1398 = vmatpush.msra.mxu0 0.0
    %1399 = vmatpush.msra.mxu0 0.0
    %1400 = vmatpush.msra.mxu0 0.0
    %1401 = vmatpush.msra.mxu0 0.0
    %1402 = vmatpush.msra.mxu0 0.0
    %1403 = vmatpush.msra.mxu0 0.0
    %1404 = vmatpush.msra.mxu0 %v1116
    %1405 = vmatmul.f32.gmra.mxu0 %v1384
    %v1406 = vpop.f32.mrf.mxu0
    %v1407 = vadd.f32 0.0, %v1406
    %1408 = vmatmul.f32.gmra.mxu0 %v1387
    %v1409 = vpop.f32.mrf.mxu0
    %v1410 = vadd.f32 0.0, %v1409
    %1411 = vdwg.mxu0
    %v1413 = vsel %vm299, %v1221, 0
    %v1416 = vsel %vm299, %v1247, 0
    %1418 = vmatpush.msra.mxu0 0.0
    %1419 = vmatpush.msra.mxu0 0.0
    %1420 = vmatpush.msra.mxu0 0.0
    %1421 = vmatpush.msra.mxu0 0.0
    %1422 = vmatpush.msra.mxu0 0.0
    %1423 = vmatpush.msra.mxu0 0.0
    %1424 = vmatpush.msra.mxu0 0.0
    %1425 = vmatpush.msra.mxu0 0.0
    %1426 = vmatpush.msra.mxu0 0.0
    %1427 = vmatpush.msra.mxu0 0.0
    %1428 = vmatpush.msra.mxu0 0.0
    %1429 = vmatpush.msra.mxu0 0.0
    %1430 = vmatpush.msra.mxu0 0.0
    %1431 = vmatpush.msra.mxu0 0.0
    %1432 = vmatpush.msra.mxu0 0.0
    %1433 = vmatpush.msra.mxu0 %v1115
    %1434 = vmatmul.f32.gmra.mxu0 %v1413
    %v1435 = vpop.f32.mrf.mxu0
    %v1436 = vadd.f32 %v1407, %v1435
    %1437 = vmatmul.f32.gmra.mxu0 %v1416
    %v1438 = vpop.f32.mrf.mxu0
    %v1439 = vadd.f32 %v1410, %v1438
    %1440 = vdwg.mxu0
    %1441 = vrot.lane.b32.xlu0 %v1073, 112
    %v1442 = vpop.permute.xlu0 %1441
    %1443 = vrot.lane.b32.xlu0 %v1110, 112
    %v1444 = vpop.permute.xlu0 %1443
    %v1445 = vsel %vm299, %v1442, 0
    %v1447 = vsel %vm299, %v1444, 0
    %1449 = vmatpush.xpose.msra.mxu0 0.0
    %1450 = vmatpush.xpose.msra.mxu0 0.0
    %1451 = vmatpush.xpose.msra.mxu0 0.0
    %1452 = vmatpush.xpose.msra.mxu0 0.0
    %1453 = vmatpush.xpose.msra.mxu0 0.0
    %1454 = vmatpush.xpose.msra.mxu0 0.0
    %1455 = vmatpush.xpose.msra.mxu0 0.0
    %1456 = vmatpush.xpose.msra.mxu0 0.0
    %1457 = vmatpush.xpose.msra.mxu0 0.0
    %1458 = vmatpush.xpose.msra.mxu0 0.0
    %1459 = vmatpush.xpose.msra.mxu0 0.0
    %1460 = vmatpush.xpose.msra.mxu0 0.0
    %1461 = vmatpush.xpose.msra.mxu0 0.0
    %1462 = vmatpush.xpose.msra.mxu0 0.0
    %1463 = vmatpush.xpose.msra.mxu0 0.0
    %1464 = vmatpush.xpose.msra.mxu0 %v1447
    %1465 = vmatmul.f32.gmra.mxu0 %v1445
    %v1466 = vpop.f32.mrf.mxu0
    %v1467 = vadd.f32 0.0, %v1466
    %1468 = vdwg.mxu0
    %1469 = vrot.lane.b32.xlu0 %v1076, 112
    %v1470 = vpop.permute.xlu0 %1469
    %1471 = vrot.lane.b32.xlu0 %v1113, 112
    %v1472 = vpop.permute.xlu0 %1471
    %v1473 = vsel %vm299, %v1470, 0
    %v1475 = vsel %vm299, %v1472, 0
    %1477 = vmatpush.xpose.msra.mxu0 0.0
    %1478 = vmatpush.xpose.msra.mxu0 0.0
    %1479 = vmatpush.xpose.msra.mxu0 0.0
    %1480 = vmatpush.xpose.msra.mxu0 0.0
    %1481 = vmatpush.xpose.msra.mxu0 0.0
    %1482 = vmatpush.xpose.msra.mxu0 0.0
    %1483 = vmatpush.xpose.msra.mxu0 0.0
    %1484 = vmatpush.xpose.msra.mxu0 0.0
    %1485 = vmatpush.xpose.msra.mxu0 0.0
    %1486 = vmatpush.xpose.msra.mxu0 0.0
    %1487 = vmatpush.xpose.msra.mxu0 0.0
    %1488 = vmatpush.xpose.msra.mxu0 0.0
    %1489 = vmatpush.xpose.msra.mxu0 0.0
    %1490 = vmatpush.xpose.msra.mxu0 0.0
    %1491 = vmatpush.xpose.msra.mxu0 0.0
    %1492 = vmatpush.xpose.msra.mxu0 %v1475
    %1493 = vmatmul.f32.gmra.mxu0 %v1473
    %v1494 = vpop.f32.mrf.mxu0
    %v1495 = vadd.f32 0.0, %v1494
    %1496 = vdwg.mxu0
    %v1497 = vmul.f32 %v1467, 0.35355338
    %v1498 = vmul.f32 %v1495, 0.35355338
    %v1499 = vadd.f32 %v1497, %v154
    %v1500 = vadd.f32 %v1498, %v155
    %v1501 = vsel %vm299, %v1499, -inf
    %1502 = vmax.xlane.f32.xlu0 %v1501
    %v1503 = vpop.xlane.xlu0 %1502
    %v1504 = vsel %vm299, %v1500, -inf
    %1505 = vmax.xlane.f32.xlu0 %v1504
    %v1506 = vpop.xlane.xlu0 %1505
    %v1507 = vsub.f32 %v1499, %v1503
    %v1508 = vsub.f32 %v1500, %v1506
    %v1509 = vmul.f32 %v1507, 1.442695
    %v1510 = vpow.pop %v1509
    %v1511 = vmul.f32 %v1508, 1.442695
    %v1512 = vpow.pop %v1511
    %v1513 = vsel %vm299, %v1510, 0.0
    %1514 = vadd.xlane.f32.xlu0 %v1513
    %v1515 = vpop.xlane.xlu0 %1514
    %v1516 = vsel %vm299, %v1512, 0.0
    %1517 = vadd.xlane.f32.xlu0 %v1516
    %v1518 = vpop.xlane.xlu0 %1517
    %v1519 = vrcp.pop %v1515
    %v1520 = vrcp.pop %v1518
    %v1521 = vmul.f32 %v1510, %v1519
    %v1522 = vmul.f32 %v1512, %v1520
    %1523 = vrot.lane.b32.xlu0 %v1110, 80
    %v1524 = vpop.permute.xlu0 %1523
    %v1527 = vsel %vm299, %v1521, 0
    %1529 = vmatpush.msra.mxu0 0.0
    %1530 = vmatpush.msra.mxu0 0.0
    %1531 = vmatpush.msra.mxu0 0.0
    %1532 = vmatpush.msra.mxu0 0.0
    %1533 = vmatpush.msra.mxu0 0.0
    %1534 = vmatpush.msra.mxu0 0.0
    %1535 = vmatpush.msra.mxu0 0.0
    %1536 = vmatpush.msra.mxu0 0.0
    %1537 = vmatpush.msra.mxu0 0.0
    %1538 = vmatpush.msra.mxu0 0.0
    %1539 = vmatpush.msra.mxu0 0.0
    %1540 = vmatpush.msra.mxu0 0.0
    %1541 = vmatpush.msra.mxu0 0.0
    %1542 = vmatpush.msra.mxu0 0.0
    %1543 = vmatpush.msra.mxu0 0.0
    %1544 = vmatpush.msra.mxu0 %v1524
    %1545 = vmatmul.f32.gmra.mxu0 %v1527
    %v1546 = vpop.f32.mrf.mxu0
    %v1547 = vadd.f32 0.0, %v1546
    %1548 = vdwg.mxu0
    %1549 = vrot.lane.b32.xlu0 %v1113, 80
    %v1550 = vpop.permute.xlu0 %1549
    %v1553 = vsel %vm299, %v1522, 0
    %1555 = vmatpush.msra.mxu0 0.0
    %1556 = vmatpush.msra.mxu0 0.0
    %1557 = vmatpush.msra.mxu0 0.0
    %1558 = vmatpush.msra.mxu0 0.0
    %1559 = vmatpush.msra.mxu0 0.0
    %1560 = vmatpush.msra.mxu0 0.0
    %1561 = vmatpush.msra.mxu0 0.0
    %1562 = vmatpush.msra.mxu0 0.0
    %1563 = vmatpush.msra.mxu0 0.0
    %1564 = vmatpush.msra.mxu0 0.0
    %1565 = vmatpush.msra.mxu0 0.0
    %1566 = vmatpush.msra.mxu0 0.0
    %1567 = vmatpush.msra.mxu0 0.0
    %1568 = vmatpush.msra.mxu0 0.0
    %1569 = vmatpush.msra.mxu0 0.0
    %1570 = vmatpush.msra.mxu0 %v1550
    %1571 = vmatmul.f32.gmra.mxu0 %v1553
    %v1572 = vpop.f32.mrf.mxu0
    %v1573 = vadd.f32 0.0, %v1572
    %1574 = vdwg.mxu0
    %v1576 = vsel %vm299, %v1547, 0
    %v1579 = vsel %vm299, %v1573, 0
    %1581 = vmatpush.msra.mxu0 0.0
    %1582 = vmatpush.msra.mxu0 0.0
    %1583 = vmatpush.msra.mxu0 0.0
    %1584 = vmatpush.msra.mxu0 0.0
    %1585 = vmatpush.msra.mxu0 0.0
    %1586 = vmatpush.msra.mxu0 0.0
    %1587 = vmatpush.msra.mxu0 0.0
    %1588 = vmatpush.msra.mxu0 0.0
    %1589 = vmatpush.msra.mxu0 0.0
    %1590 = vmatpush.msra.mxu0 0.0
    %1591 = vmatpush.msra.mxu0 0.0
    %1592 = vmatpush.msra.mxu0 0.0
    %1593 = vmatpush.msra.mxu0 0.0
    %1594 = vmatpush.msra.mxu0 0.0
    %1595 = vmatpush.msra.mxu0 0.0
    %1596 = vmatpush.msra.mxu0 %v1117
    %1597 = vmatmul.f32.gmra.mxu0 %v1576
    %v1598 = vpop.f32.mrf.mxu0
    %v1599 = vadd.f32 0.0, %v1598
    %1600 = vmatmul.f32.gmra.mxu0 %v1579
    %v1601 = vpop.f32.mrf.mxu0
    %v1602 = vadd.f32 0.0, %v1601
    %1603 = vdwg.mxu0
    %v1604 = vadd.f32 %v1436, %v1599
    %v1605 = vadd.f32 %v1439, %v1602
    %1606 = vrot.lane.b32.xlu0 %v1073, 104
    %v1607 = vpop.permute.xlu0 %1606
    %1608 = vrot.lane.b32.xlu0 %v1110, 104
    %v1609 = vpop.permute.xlu0 %1608
    %v1610 = vsel %vm299, %v1607, 0
    %v1612 = vsel %vm299, %v1609, 0
    %1614 = vmatpush.xpose.msra.mxu0 0.0
    %1615 = vmatpush.xpose.msra.mxu0 0.0
    %1616 = vmatpush.xpose.msra.mxu0 0.0
    %1617 = vmatpush.xpose.msra.mxu0 0.0
    %1618 = vmatpush.xpose.msra.mxu0 0.0
    %1619 = vmatpush.xpose.msra.mxu0 0.0
    %1620 = vmatpush.xpose.msra.mxu0 0.0
    %1621 = vmatpush.xpose.msra.mxu0 0.0
    %1622 = vmatpush.xpose.msra.mxu0 0.0
    %1623 = vmatpush.xpose.msra.mxu0 0.0
    %1624 = vmatpush.xpose.msra.mxu0 0.0
    %1625 = vmatpush.xpose.msra.mxu0 0.0
    %1626 = vmatpush.xpose.msra.mxu0 0.0
    %1627 = vmatpush.xpose.msra.mxu0 0.0
    %1628 = vmatpush.xpose.msra.mxu0 0.0
    %1629 = vmatpush.xpose.msra.mxu0 %v1612
    %1630 = vmatmul.f32.gmra.mxu0 %v1610
    %v1631 = vpop.f32.mrf.mxu0
    %v1632 = vadd.f32 0.0, %v1631
    %1633 = vdwg.mxu0
    %1634 = vrot.lane.b32.xlu0 %v1076, 104
    %v1635 = vpop.permute.xlu0 %1634
    %1636 = vrot.lane.b32.xlu0 %v1113, 104
    %v1637 = vpop.permute.xlu0 %1636
    %v1638 = vsel %vm299, %v1635, 0
    %v1640 = vsel %vm299, %v1637, 0
    %1642 = vmatpush.xpose.msra.mxu0 0.0
    %1643 = vmatpush.xpose.msra.mxu0 0.0
    %1644 = vmatpush.xpose.msra.mxu0 0.0
    %1645 = vmatpush.xpose.msra.mxu0 0.0
    %1646 = vmatpush.xpose.msra.mxu0 0.0
    %1647 = vmatpush.xpose.msra.mxu0 0.0
    %1648 = vmatpush.xpose.msra.mxu0 0.0
    %1649 = vmatpush.xpose.msra.mxu0 0.0
    %1650 = vmatpush.xpose.msra.mxu0 0.0
    %1651 = vmatpush.xpose.msra.mxu0 0.0
    %1652 = vmatpush.xpose.msra.mxu0 0.0
    %1653 = vmatpush.xpose.msra.mxu0 0.0
    %1654 = vmatpush.xpose.msra.mxu0 0.0
    %1655 = vmatpush.xpose.msra.mxu0 0.0
    %1656 = vmatpush.xpose.msra.mxu0 0.0
    %1657 = vmatpush.xpose.msra.mxu0 %v1640
    %1658 = vmatmul.f32.gmra.mxu0 %v1638
    %v1659 = vpop.f32.mrf.mxu0
    %v1660 = vadd.f32 0.0, %v1659
    %1661 = vdwg.mxu0
    %v1662 = vmul.f32 %v1632, 0.35355338
    %v1663 = vmul.f32 %v1660, 0.35355338
    %v1664 = vadd.f32 %v1662, %v154
    %v1665 = vadd.f32 %v1663, %v155
    %v1666 = vsel %vm299, %v1664, -inf
    %1667 = vmax.xlane.f32.xlu0 %v1666
    %v1668 = vpop.xlane.xlu0 %1667
    %v1669 = vsel %vm299, %v1665, -inf
    %1670 = vmax.xlane.f32.xlu0 %v1669
    %v1671 = vpop.xlane.xlu0 %1670
    %v1672 = vsub.f32 %v1664, %v1668
    %v1673 = vsub.f32 %v1665, %v1671
    %v1674 = vmul.f32 %v1672, 1.442695
    %v1675 = vpow.pop %v1674
    %v1676 = vmul.f32 %v1673, 1.442695
    %v1677 = vpow.pop %v1676
    %v1678 = vsel %vm299, %v1675, 0.0
    %1679 = vadd.xlane.f32.xlu0 %v1678
    %v1680 = vpop.xlane.xlu0 %1679
    %v1681 = vsel %vm299, %v1677, 0.0
    %1682 = vadd.xlane.f32.xlu0 %v1681
    %v1683 = vpop.xlane.xlu0 %1682
    %v1684 = vrcp.pop %v1680
    %v1685 = vrcp.pop %v1683
    %v1686 = vmul.f32 %v1675, %v1684
    %v1687 = vmul.f32 %v1677, %v1685
    %1688 = vrot.lane.b32.xlu0 %v1110, 72
    %v1689 = vpop.permute.xlu0 %1688
    %v1692 = vsel %vm299, %v1686, 0
    %1694 = vmatpush.msra.mxu0 0.0
    %1695 = vmatpush.msra.mxu0 0.0
    %1696 = vmatpush.msra.mxu0 0.0
    %1697 = vmatpush.msra.mxu0 0.0
    %1698 = vmatpush.msra.mxu0 0.0
    %1699 = vmatpush.msra.mxu0 0.0
    %1700 = vmatpush.msra.mxu0 0.0
    %1701 = vmatpush.msra.mxu0 0.0
    %1702 = vmatpush.msra.mxu0 0.0
    %1703 = vmatpush.msra.mxu0 0.0
    %1704 = vmatpush.msra.mxu0 0.0
    %1705 = vmatpush.msra.mxu0 0.0
    %1706 = vmatpush.msra.mxu0 0.0
    %1707 = vmatpush.msra.mxu0 0.0
    %1708 = vmatpush.msra.mxu0 0.0
    %1709 = vmatpush.msra.mxu0 %v1689
    %1710 = vmatmul.f32.gmra.mxu0 %v1692
    %v1711 = vpop.f32.mrf.mxu0
    %v1712 = vadd.f32 0.0, %v1711
    %1713 = vdwg.mxu0
    %1714 = vrot.lane.b32.xlu0 %v1113, 72
    %v1715 = vpop.permute.xlu0 %1714
    %v1718 = vsel %vm299, %v1687, 0
    %1720 = vmatpush.msra.mxu0 0.0
    %1721 = vmatpush.msra.mxu0 0.0
    %1722 = vmatpush.msra.mxu0 0.0
    %1723 = vmatpush.msra.mxu0 0.0
    %1724 = vmatpush.msra.mxu0 0.0
    %1725 = vmatpush.msra.mxu0 0.0
    %1726 = vmatpush.msra.mxu0 0.0
    %1727 = vmatpush.msra.mxu0 0.0
    %1728 = vmatpush.msra.mxu0 0.0
    %1729 = vmatpush.msra.mxu0 0.0
    %1730 = vmatpush.msra.mxu0 0.0
    %1731 = vmatpush.msra.mxu0 0.0
    %1732 = vmatpush.msra.mxu0 0.0
    %1733 = vmatpush.msra.mxu0 0.0
    %1734 = vmatpush.msra.mxu0 0.0
    %1735 = vmatpush.msra.mxu0 %v1715
    %1736 = vmatmul.f32.gmra.mxu0 %v1718
    %v1737 = vpop.f32.mrf.mxu0
    %v1738 = vadd.f32 0.0, %v1737
    %1739 = vdwg.mxu0
    %v1741 = vsel %vm299, %v1712, 0
    %v1744 = vsel %vm299, %v1738, 0
    %1746 = vmatpush.msra.mxu0 0.0
    %1747 = vmatpush.msra.mxu0 0.0
    %1748 = vmatpush.msra.mxu0 0.0
    %1749 = vmatpush.msra.mxu0 0.0
    %1750 = vmatpush.msra.mxu0 0.0
    %1751 = vmatpush.msra.mxu0 0.0
    %1752 = vmatpush.msra.mxu0 0.0
    %1753 = vmatpush.msra.mxu0 0.0
    %1754 = vmatpush.msra.mxu0 0.0
    %1755 = vmatpush.msra.mxu0 0.0
    %1756 = vmatpush.msra.mxu0 0.0
    %1757 = vmatpush.msra.mxu0 0.0
    %1758 = vmatpush.msra.mxu0 0.0
    %1759 = vmatpush.msra.mxu0 0.0
    %1760 = vmatpush.msra.mxu0 0.0
    %1761 = vmatpush.msra.mxu0 %v1118
    %1762 = vmatmul.f32.gmra.mxu0 %v1741
    %v1763 = vpop.f32.mrf.mxu0
    %v1764 = vadd.f32 0.0, %v1763
    %1765 = vmatmul.f32.gmra.mxu0 %v1744
    %v1766 = vpop.f32.mrf.mxu0
    %v1767 = vadd.f32 0.0, %v1766
    %1768 = vdwg.mxu0
    %v1769 = vadd.f32 %v1604, %v1764
    %v1770 = vadd.f32 %v1605, %v1767
    %v1771 = vld [vmem:[%s13] sm:$0x1]
    %v1773 = vperm.slane %v1771, 0
    %v1775 = vadd.f32 %v1769, %v1773
    %v1776 = vadd.f32 %v1770, %v1773
    %v1777 = vadd.f32 %v957, %v1775
    %v1778 = vadd.f32 %v958, %v1776
    %v1779 = vsel %vm158, %v1777, 0.0
    %1780 = vadd.xlane.f32.xlu0 %v1779
    %v1781 = vpop.xlane.xlu0 %1780
    %v1782 = vsel %vm158, %v1778, 0.0
    %1783 = vadd.xlane.f32.xlu0 %v1782
    %v1784 = vpop.xlane.xlu0 %1783
    %v1785 = vmul.f32 %v1781, %v171
    %v1786 = vmul.f32 %v1784, %v171
    %v1787 = vsub.f32 %v1777, %v1785
    %v1788 = vsub.f32 %v1778, %v1786
    %v1789 = vmul.f32 %v1787, %v1787
    %v1790 = vmul.f32 %v1788, %v1788
    %v1791 = vsel %vm158, %v1789, 0.0
    %1792 = vadd.xlane.f32.xlu0 %v1791
    %v1793 = vpop.xlane.xlu0 %1792
    %v1794 = vsel %vm158, %v1790, 0.0
    %1795 = vadd.xlane.f32.xlu0 %v1794
    %v1796 = vpop.xlane.xlu0 %1795
    %v1797 = vmul.f32 %v1793, %v190
    %v1798 = vmul.f32 %v1796, %v190
    %v1799 = vperm.slane %v156, 2
    %v1800 = vmul.f32 %v1799, %v1787
    %v1801 = vmul.f32 %v1799, %v1788
    %v1802 = vrsqrt.pop %v1797
    %v1803 = vmul.f32 %v1802, %v1797
    %v1804 = vmul.f32 %v1803, %v1802
    %v1805 = vmul.f32 0.5, %v1804
    %v1806 = vsub.f32 1.5, %v1805
    %v1807 = vmul.f32 %v1802, %v1806
    %v1808 = vmul.f32 %v1797, %v1807
    %vm1809 = vcmp.eq.f32.partialorder %v1797, inf
    %v1810 = vsel %vm1809, %v1797, %v1808
    %vm1811 = vcmp.eq.f32.partialorder %v1797, 0.0
    %v1812 = vand.u32 %v1797, 2147483648
    %v1813 = vsel %vm1811, %v1812, %v1810
    %v1814 = vrsqrt.pop %v1798
    %v1815 = vmul.f32 %v1814, %v1798
    %v1816 = vmul.f32 %v1815, %v1814
    %v1817 = vmul.f32 0.5, %v1816
    %v1818 = vsub.f32 1.5, %v1817
    %v1819 = vmul.f32 %v1814, %v1818
    %v1820 = vmul.f32 %v1798, %v1819
    %vm1821 = vcmp.eq.f32.partialorder %v1798, inf
    %v1822 = vsel %vm1821, %v1798, %v1820
    %vm1823 = vcmp.eq.f32.partialorder %v1798, 0.0
    %v1824 = vand.u32 %v1798, 2147483648
    %v1825 = vsel %vm1823, %v1824, %v1822
    %v1826 = vadd.f32 %v1813, 1e-06
    %v1827 = vadd.f32 %v1825, 1e-06
    %v1828 = vrcp.pop %v1826
    %v1829 = vmul.f32 %v1826, %v1828
    %v1830 = vsub.f32 1.0, %v1829
    %v1831 = vmul.f32 %v1828, %v1830
    %v1832 = vadd.f32 %v1828, %v1831
    %vm1833 = vweird.f32 %v1826
    %vm1834 = vweird.f32 %v1828
    %vm1835 = vmor %vm1833, %vm1834
    %v1836 = vsel %vm1835, %v1828, %v1832
    %v1837 = vand.u32 2147483647, %v1826
    %vm1838 = vcmp.eq.f32.partialorder %v1837, 8.507059e+37
    %v1839 = vand.u32 %v1826, 2147483648
    %v1840 = vor.u32 1.1754944e-38, %v1839
    %v1841 = vsel %vm1838, %v1840, %v1836
    %v1842 = vmul.f32 %v1800, %v1841
    %v1843 = vrcp.pop %v1827
    %v1844 = vmul.f32 %v1827, %v1843
    %v1845 = vsub.f32 1.0, %v1844
    %v1846 = vmul.f32 %v1843, %v1845
    %v1847 = vadd.f32 %v1843, %v1846
    %vm1848 = vweird.f32 %v1827
    %vm1849 = vweird.f32 %v1843
    %vm1850 = vmor %vm1848, %vm1849
    %v1851 = vsel %vm1850, %v1843, %v1847
    %v1852 = vand.u32 2147483647, %v1827
    %vm1853 = vcmp.eq.f32.partialorder %v1852, 8.507059e+37
    %v1854 = vand.u32 %v1827, 2147483648
    %v1855 = vor.u32 1.1754944e-38, %v1854
    %v1856 = vsel %vm1853, %v1855, %v1851
    %v1857 = vmul.f32 %v1801, %v1856
    %v1858 = vperm.slane %v157, 2
    %v1859 = vadd.f32 %v1842, %v1858
    %v1860 = vadd.f32 %v1857, %v1858
    %v1861 = vld [vmem:[#allocation7] sm:$0xff]
    %v1862 = vld [vmem:[#allocation7 + $0x8] sm:$0xff]
    %v1863 = vld [vmem:[#allocation7 + $0x10] sm:$0xff]
    %v1864 = vld [vmem:[#allocation7 + $0x18] sm:$0xff]
    %v1865 = vld [vmem:[%s15] sm:$0x1]
    %v1867 = vperm.slane %v1865, 0
    %v1870 = vsel %vm158, %v1859, 0
    %v1873 = vsel %vm158, %v1860, 0
    %1875 = vmatpush.msra.mxu0 0.0
    %1876 = vmatpush.msra.mxu0 0.0
    %1877 = vmatpush.msra.mxu0 0.0
    %1878 = vmatpush.msra.mxu0 0.0
    %1879 = vmatpush.msra.mxu0 0.0
    %1880 = vmatpush.msra.mxu0 0.0
    %1881 = vmatpush.msra.mxu0 0.0
    %1882 = vmatpush.msra.mxu0 0.0
    %1883 = vmatpush.msra.mxu0 0.0
    %1884 = vmatpush.msra.mxu0 0.0
    %1885 = vmatpush.msra.mxu0 0.0
    %1886 = vmatpush.msra.mxu0 0.0
    %1887 = vmatpush.msra.mxu0 %v1864
    %1888 = vmatpush.msra.mxu0 %v1863
    %1889 = vmatpush.msra.mxu0 %v1862
    %1890 = vmatpush.msra.mxu0 %v1861
    %1891 = vmatmul.f32.gmra.mxu0 %v1870
    %v1892 = vpop.f32.mrf.mxu0
    %v1893 = vadd.f32 %v1867, %v1892
    %1894 = vmatmul.f32.gmra.mxu0 %v1873
    %v1895 = vpop.f32.mrf.mxu0
    %v1896 = vadd.f32 %v1867, %v1895
    %1897 = vdwg.mxu0
    %v1898 = vmax.f32 %v1893, 0.0
    %v1899 = vmax.f32 %v1896, 0.0
    %v1900 = vld [vmem:[%s16] sm:$0xff]
    %v1901 = vld [vmem:[%s16 + $0x8] sm:$0xff]
    %v1902 = vld [vmem:[%s16 + $0x10] sm:$0xff]
    %v1903 = vld [vmem:[%s16 + $0x18] sm:$0xff]
    %v1904 = vld [vmem:[%s16 + $0x20] sm:$0xff]
    %v1905 = vld [vmem:[%s16 + $0x28] sm:$0xff]
    %v1906 = vld [vmem:[%s16 + $0x30] sm:$0xff]
    %v1907 = vld [vmem:[%s16 + $0x38] sm:$0xff]
    %vm1908 = vcmask 523264
    %v1910 = vsel %vm1908, %v1898, 0
    %v1913 = vsel %vm1908, %v1899, 0
    %1915 = vmatpush.msra.mxu0 0.0
    %1916 = vmatpush.msra.mxu0 0.0
    %1917 = vmatpush.msra.mxu0 0.0
    %1918 = vmatpush.msra.mxu0 0.0
    %1919 = vmatpush.msra.mxu0 0.0
    %1920 = vmatpush.msra.mxu0 0.0
    %1921 = vmatpush.msra.mxu0 0.0
    %1922 = vmatpush.msra.mxu0 0.0
    %1923 = vmatpush.msra.mxu0 %v1907
    %1924 = vmatpush.msra.mxu0 %v1906
    %1925 = vmatpush.msra.mxu0 %v1905
    %1926 = vmatpush.msra.mxu0 %v1904
    %1927 = vmatpush.msra.mxu0 %v1903
    %1928 = vmatpush.msra.mxu0 %v1902
    %1929 = vmatpush.msra.mxu0 %v1901
    %1930 = vmatpush.msra.mxu0 %v1900
    %1931 = vmatmul.f32.gmra.mxu0 %v1910
    %v1932 = vpop.f32.mrf.mxu0
    %v1933 = vadd.f32 0.0, %v1932
    %1934 = vmatmul.f32.gmra.mxu0 %v1913
    %v1935 = vpop.f32.mrf.mxu0
    %v1936 = vadd.f32 0.0, %v1935
    %1937 = vdwg.mxu0
    %v1938 = vadd.f32 %v1777, %v1933
    %v1939 = vadd.f32 %v1778, %v1936
    %v1940 = vld [vmem:[#allocation8] sm:$0x1]
    %v1942 = vperm.slane %v1940, 0
    %v1944 = vadd.f32 %v1938, %v1942
    %v1945 = vadd.f32 %v1939, %v1942
    %s1946 = scalar_lea.vmem %s18, 4
    %v1947 = vld [vmem:[%s1946] sm:$0x7]
    %s1948 = scalar_lea.vmem %s19, 4
    %v1949 = vld [vmem:[%s1948] sm:$0x7]
    %v1950 = vsel %vm158, %v1944, 0.0
    %1951 = vadd.xlane.f32.xlu0 %v1950
    %v1952 = vpop.xlane.xlu0 %1951
    %v1953 = vsel %vm158, %v1945, 0.0
    %1954 = vadd.xlane.f32.xlu0 %v1953
    %v1955 = vpop.xlane.xlu0 %1954
    %v1956 = vmul.f32 %v1952, %v171
    %v1957 = vmul.f32 %v1955, %v171
    %v1958 = vsub.f32 %v1944, %v1956
    %v1959 = vsub.f32 %v1945, %v1957
    %v1960 = vmul.f32 %v1958, %v1958
    %v1961 = vmul.f32 %v1959, %v1959
    %v1962 = vsel %vm158, %v1960, 0.0
    %1963 = vadd.xlane.f32.xlu0 %v1962
    %v1964 = vpop.xlane.xlu0 %1963
    %v1965 = vsel %vm158, %v1961, 0.0
    %1966 = vadd.xlane.f32.xlu0 %v1965
    %v1967 = vpop.xlane.xlu0 %1966
    %v1968 = vmul.f32 %v1964, %v190
    %v1969 = vmul.f32 %v1967, %v190
    %v1970 = vperm.slane %v1947, 0
    %v1971 = vmul.f32 %v1970, %v1958
    %v1972 = vmul.f32 %v1970, %v1959
    %v1973 = vrsqrt.pop %v1968
    %v1974 = vmul.f32 %v1973, %v1968
    %v1975 = vmul.f32 %v1974, %v1973
    %v1976 = vmul.f32 0.5, %v1975
    %v1977 = vsub.f32 1.5, %v1976
    %v1978 = vmul.f32 %v1973, %v1977
    %v1979 = vmul.f32 %v1968, %v1978
    %vm1980 = vcmp.eq.f32.partialorder %v1968, inf
    %v1981 = vsel %vm1980, %v1968, %v1979
    %vm1982 = vcmp.eq.f32.partialorder %v1968, 0.0
    %v1983 = vand.u32 %v1968, 2147483648
    %v1984 = vsel %vm1982, %v1983, %v1981
    %v1985 = vrsqrt.pop %v1969
    %v1986 = vmul.f32 %v1985, %v1969
    %v1987 = vmul.f32 %v1986, %v1985
    %v1988 = vmul.f32 0.5, %v1987
    %v1989 = vsub.f32 1.5, %v1988
    %v1990 = vmul.f32 %v1985, %v1989
    %v1991 = vmul.f32 %v1969, %v1990
    %vm1992 = vcmp.eq.f32.partialorder %v1969, inf
    %v1993 = vsel %vm1992, %v1969, %v1991
    %vm1994 = vcmp.eq.f32.partialorder %v1969, 0.0
    %v1995 = vand.u32 %v1969, 2147483648
    %v1996 = vsel %vm1994, %v1995, %v1993
    %v1997 = vadd.f32 %v1984, 1e-06
    %v1998 = vadd.f32 %v1996, 1e-06
    %v1999 = vrcp.pop %v1997
    %v2000 = vmul.f32 %v1997, %v1999
    %v2001 = vsub.f32 1.0, %v2000
    %v2002 = vmul.f32 %v1999, %v2001
    %v2003 = vadd.f32 %v1999, %v2002
    %vm2004 = vweird.f32 %v1997
    %vm2005 = vweird.f32 %v1999
    %vm2006 = vmor %vm2004, %vm2005
    %v2007 = vsel %vm2006, %v1999, %v2003
    %v2008 = vand.u32 2147483647, %v1997
    %vm2009 = vcmp.eq.f32.partialorder %v2008, 8.507059e+37
    %v2010 = vand.u32 %v1997, 2147483648
    %v2011 = vor.u32 1.1754944e-38, %v2010
    %v2012 = vsel %vm2009, %v2011, %v2007
    %v2013 = vmul.f32 %v1971, %v2012
    %v2014 = vrcp.pop %v1998
    %v2015 = vmul.f32 %v1998, %v2014
    %v2016 = vsub.f32 1.0, %v2015
    %v2017 = vmul.f32 %v2014, %v2016
    %v2018 = vadd.f32 %v2014, %v2017
    %vm2019 = vweird.f32 %v1998
    %vm2020 = vweird.f32 %v2014
    %vm2021 = vmor %vm2019, %vm2020
    %v2022 = vsel %vm2021, %v2014, %v2018
    %v2023 = vand.u32 2147483647, %v1998
    %vm2024 = vcmp.eq.f32.partialorder %v2023, 8.507059e+37
    %v2025 = vand.u32 %v1998, 2147483648
    %v2026 = vor.u32 1.1754944e-38, %v2025
    %v2027 = vsel %vm2024, %v2026, %v2022
    %v2028 = vmul.f32 %v1972, %v2027
    %v2029 = vperm.slane %v1949, 0
    %v2030 = vadd.f32 %v2013, %v2029
    %v2031 = vadd.f32 %v2028, %v2029
    %s2032 = scalar_lea.vmem %s4, 32
    %v2033 = vld [vmem:[%s2032] sm:$0xff]
    %v2034 = vld [vmem:[%s2032 + $0x8] sm:$0xff]
    %v2035 = vld [vmem:[%s2032 + $0x10] sm:$0xff]
    %v2036 = vld [vmem:[%s2032 + $0x18] sm:$0xff]
    %s2037 = scalar_lea.vmem %s5, 1
    %v2038 = vld [vmem:[%s2037] sm:$0x1]
    %v2040 = vperm.slane %v2038, 0
    %v2043 = vsel %vm158, %v2030, 0
    %v2046 = vsel %vm158, %v2031, 0
    %2048 = vmatpush.msra.mxu0 0.0
    %2049 = vmatpush.msra.mxu0 0.0
    %2050 = vmatpush.msra.mxu0 0.0
    %2051 = vmatpush.msra.mxu0 0.0
    %2052 = vmatpush.msra.mxu0 0.0
    %2053 = vmatpush.msra.mxu0 0.0
    %2054 = vmatpush.msra.mxu0 0.0
    %2055 = vmatpush.msra.mxu0 0.0
    %2056 = vmatpush.msra.mxu0 0.0
    %2057 = vmatpush.msra.mxu0 0.0
    %2058 = vmatpush.msra.mxu0 0.0
    %2059 = vmatpush.msra.mxu0 0.0
    %2060 = vmatpush.msra.mxu0 %v2036
    %2061 = vmatpush.msra.mxu0 %v2035
    %2062 = vmatpush.msra.mxu0 %v2034
    %2063 = vmatpush.msra.mxu0 %v2033
    %2064 = vmatmul.f32.gmra.mxu0 %v2043
    %v2065 = vpop.f32.mrf.mxu0
    %v2066 = vadd.f32 %v2040, %v2065
    %2067 = vmatmul.f32.gmra.mxu0 %v2046
    %v2068 = vpop.f32.mrf.mxu0
    %v2069 = vadd.f32 %v2040, %v2068
    %2070 = vdwg.mxu0
    %s2071 = scalar_lea.vmem %s6, 32
    %v2072 = vld [vmem:[%s2071] sm:$0xff]
    %v2073 = vld [vmem:[%s2071 + $0x8] sm:$0xff]
    %v2074 = vld [vmem:[%s2071 + $0x10] sm:$0xff]
    %v2075 = vld [vmem:[%s2071 + $0x18] sm:$0xff]
    %2077 = vrot.lane.b32.xlu0 %v2066, 96
    %v2078 = vpop.permute.xlu0 %2077
    %v2079 = vsel %vm299, %v2066, 0
    %v2081 = vsel %vm299, %v2078, 0
    %2083 = vmatpush.xpose.msra.mxu0 0.0
    %2084 = vmatpush.xpose.msra.mxu0 0.0
    %2085 = vmatpush.xpose.msra.mxu0 0.0
    %2086 = vmatpush.xpose.msra.mxu0 0.0
    %2087 = vmatpush.xpose.msra.mxu0 0.0
    %2088 = vmatpush.xpose.msra.mxu0 0.0
    %2089 = vmatpush.xpose.msra.mxu0 0.0
    %2090 = vmatpush.xpose.msra.mxu0 0.0
    %2091 = vmatpush.xpose.msra.mxu0 0.0
    %2092 = vmatpush.xpose.msra.mxu0 0.0
    %2093 = vmatpush.xpose.msra.mxu0 0.0
    %2094 = vmatpush.xpose.msra.mxu0 0.0
    %2095 = vmatpush.xpose.msra.mxu0 0.0
    %2096 = vmatpush.xpose.msra.mxu0 0.0
    %2097 = vmatpush.xpose.msra.mxu0 0.0
    %2098 = vmatpush.xpose.msra.mxu0 %v2081
    %2099 = vmatmul.f32.gmra.mxu0 %v2079
    %v2100 = vpop.f32.mrf.mxu0
    %v2101 = vadd.f32 0.0, %v2100
    %2102 = vdwg.mxu0
    %2104 = vrot.lane.b32.xlu0 %v2069, 96
    %v2105 = vpop.permute.xlu0 %2104
    %v2106 = vsel %vm299, %v2069, 0
    %v2108 = vsel %vm299, %v2105, 0
    %2110 = vmatpush.xpose.msra.mxu0 0.0
    %2111 = vmatpush.xpose.msra.mxu0 0.0
    %2112 = vmatpush.xpose.msra.mxu0 0.0
    %2113 = vmatpush.xpose.msra.mxu0 0.0
    %2114 = vmatpush.xpose.msra.mxu0 0.0
    %2115 = vmatpush.xpose.msra.mxu0 0.0
    %2116 = vmatpush.xpose.msra.mxu0 0.0
    %2117 = vmatpush.xpose.msra.mxu0 0.0
    %2118 = vmatpush.xpose.msra.mxu0 0.0
    %2119 = vmatpush.xpose.msra.mxu0 0.0
    %2120 = vmatpush.xpose.msra.mxu0 0.0
    %2121 = vmatpush.xpose.msra.mxu0 0.0
    %2122 = vmatpush.xpose.msra.mxu0 0.0
    %2123 = vmatpush.xpose.msra.mxu0 0.0
    %2124 = vmatpush.xpose.msra.mxu0 0.0
    %2125 = vmatpush.xpose.msra.mxu0 %v2108
    %2126 = vmatmul.f32.gmra.mxu0 %v2106
    %v2127 = vpop.f32.mrf.mxu0
    %v2128 = vadd.f32 0.0, %v2127
    %2129 = vdwg.mxu0
    %v2130 = vmul.f32 %v2101, 0.35355338
    %v2131 = vmul.f32 %v2128, 0.35355338
    %v2132 = vadd.f32 %v2130, %v152
    %v2133 = vadd.f32 %v2131, %v153
    %v2134 = vsel %vm299, %v2132, -inf
    %2135 = vmax.xlane.f32.xlu0 %v2134
    %v2136 = vpop.xlane.xlu0 %2135
    %v2137 = vsel %vm299, %v2133, -inf
    %2138 = vmax.xlane.f32.xlu0 %v2137
    %v2139 = vpop.xlane.xlu0 %2138
    %v2140 = vsub.f32 %v2132, %v2136
    %v2141 = vsub.f32 %v2133, %v2139
    %v2142 = vmul.f32 %v2140, 1.442695
    %v2143 = vpow.pop %v2142
    %v2144 = vmul.f32 %v2141, 1.442695
    %v2145 = vpow.pop %v2144
    %v2146 = vsel %vm299, %v2143, 0.0
    %2147 = vadd.xlane.f32.xlu0 %v2146
    %v2148 = vpop.xlane.xlu0 %2147
    %v2149 = vsel %vm299, %v2145, 0.0
    %2150 = vadd.xlane.f32.xlu0 %v2149
    %v2151 = vpop.xlane.xlu0 %2150
    %v2152 = vrcp.pop %v2148
    %v2153 = vrcp.pop %v2151
    %v2154 = vmul.f32 %v2143, %v2152
    %v2155 = vmul.f32 %v2145, %v2153
    %2156 = vrot.lane.b32.xlu0 %v2066, 64
    %v2157 = vpop.permute.xlu0 %2156
    %v2160 = vsel %vm299, %v2154, 0
    %2162 = vmatpush.msra.mxu0 0.0
    %2163 = vmatpush.msra.mxu0 0.0
    %2164 = vmatpush.msra.mxu0 0.0
    %2165 = vmatpush.msra.mxu0 0.0
    %2166 = vmatpush.msra.mxu0 0.0
    %2167 = vmatpush.msra.mxu0 0.0
    %2168 = vmatpush.msra.mxu0 0.0
    %2169 = vmatpush.msra.mxu0 0.0
    %2170 = vmatpush.msra.mxu0 0.0
    %2171 = vmatpush.msra.mxu0 0.0
    %2172 = vmatpush.msra.mxu0 0.0
    %2173 = vmatpush.msra.mxu0 0.0
    %2174 = vmatpush.msra.mxu0 0.0
    %2175 = vmatpush.msra.mxu0 0.0
    %2176 = vmatpush.msra.mxu0 0.0
    %2177 = vmatpush.msra.mxu0 %v2157
    %2178 = vmatmul.f32.gmra.mxu0 %v2160
    %v2179 = vpop.f32.mrf.mxu0
    %v2180 = vadd.f32 0.0, %v2179
    %2181 = vdwg.mxu0
    %2182 = vrot.lane.b32.xlu0 %v2069, 64
    %v2183 = vpop.permute.xlu0 %2182
    %v2186 = vsel %vm299, %v2155, 0
    %2188 = vmatpush.msra.mxu0 0.0
    %2189 = vmatpush.msra.mxu0 0.0
    %2190 = vmatpush.msra.mxu0 0.0
    %2191 = vmatpush.msra.mxu0 0.0
    %2192 = vmatpush.msra.mxu0 0.0
    %2193 = vmatpush.msra.mxu0 0.0
    %2194 = vmatpush.msra.mxu0 0.0
    %2195 = vmatpush.msra.mxu0 0.0
    %2196 = vmatpush.msra.mxu0 0.0
    %2197 = vmatpush.msra.mxu0 0.0
    %2198 = vmatpush.msra.mxu0 0.0
    %2199 = vmatpush.msra.mxu0 0.0
    %2200 = vmatpush.msra.mxu0 0.0
    %2201 = vmatpush.msra.mxu0 0.0
    %2202 = vmatpush.msra.mxu0 0.0
    %2203 = vmatpush.msra.mxu0 %v2183
    %2204 = vmatmul.f32.gmra.mxu0 %v2186
    %v2205 = vpop.f32.mrf.mxu0
    %v2206 = vadd.f32 0.0, %v2205
    %2207 = vdwg.mxu0
    %2208 = vrot.lane.b32.xlu0 %v2066, 120
    %v2209 = vpop.permute.xlu0 %2208
    %2210 = vrot.lane.b32.xlu0 %v2066, 88
    %v2211 = vpop.permute.xlu0 %2210
    %v2212 = vsel %vm299, %v2209, 0
    %v2214 = vsel %vm299, %v2211, 0
    %2216 = vmatpush.xpose.msra.mxu0 0.0
    %2217 = vmatpush.xpose.msra.mxu0 0.0
    %2218 = vmatpush.xpose.msra.mxu0 0.0
    %2219 = vmatpush.xpose.msra.mxu0 0.0
    %2220 = vmatpush.xpose.msra.mxu0 0.0
    %2221 = vmatpush.xpose.msra.mxu0 0.0
    %2222 = vmatpush.xpose.msra.mxu0 0.0
    %2223 = vmatpush.xpose.msra.mxu0 0.0
    %2224 = vmatpush.xpose.msra.mxu0 0.0
    %2225 = vmatpush.xpose.msra.mxu0 0.0
    %2226 = vmatpush.xpose.msra.mxu0 0.0
    %2227 = vmatpush.xpose.msra.mxu0 0.0
    %2228 = vmatpush.xpose.msra.mxu0 0.0
    %2229 = vmatpush.xpose.msra.mxu0 0.0
    %2230 = vmatpush.xpose.msra.mxu0 0.0
    %2231 = vmatpush.xpose.msra.mxu0 %v2214
    %2232 = vmatmul.f32.gmra.mxu0 %v2212
    %v2233 = vpop.f32.mrf.mxu0
    %v2234 = vadd.f32 0.0, %v2233
    %2235 = vdwg.mxu0
    %2236 = vrot.lane.b32.xlu0 %v2069, 120
    %v2237 = vpop.permute.xlu0 %2236
    %2238 = vrot.lane.b32.xlu0 %v2069, 88
    %v2239 = vpop.permute.xlu0 %2238
    %v2240 = vsel %vm299, %v2237, 0
    %v2242 = vsel %vm299, %v2239, 0
    %2244 = vmatpush.xpose.msra.mxu0 0.0
    %2245 = vmatpush.xpose.msra.mxu0 0.0
    %2246 = vmatpush.xpose.msra.mxu0 0.0
    %2247 = vmatpush.xpose.msra.mxu0 0.0
    %2248 = vmatpush.xpose.msra.mxu0 0.0
    %2249 = vmatpush.xpose.msra.mxu0 0.0
    %2250 = vmatpush.xpose.msra.mxu0 0.0
    %2251 = vmatpush.xpose.msra.mxu0 0.0
    %2252 = vmatpush.xpose.msra.mxu0 0.0
    %2253 = vmatpush.xpose.msra.mxu0 0.0
    %2254 = vmatpush.xpose.msra.mxu0 0.0
    %2255 = vmatpush.xpose.msra.mxu0 0.0
    %2256 = vmatpush.xpose.msra.mxu0 0.0
    %2257 = vmatpush.xpose.msra.mxu0 0.0
    %2258 = vmatpush.xpose.msra.mxu0 0.0
    %2259 = vmatpush.xpose.msra.mxu0 %v2242
    %2260 = vmatmul.f32.gmra.mxu0 %v2240
    %v2261 = vpop.f32.mrf.mxu0
    %v2262 = vadd.f32 0.0, %v2261
    %2263 = vdwg.mxu0
    %v2264 = vmul.f32 %v2234, 0.35355338
    %v2265 = vmul.f32 %v2262, 0.35355338
    %v2266 = vadd.f32 %v2264, %v152
    %v2267 = vadd.f32 %v2265, %v153
    %v2268 = vsel %vm299, %v2266, -inf
    %2269 = vmax.xlane.f32.xlu0 %v2268
    %v2270 = vpop.xlane.xlu0 %2269
    %v2271 = vsel %vm299, %v2267, -inf
    %2272 = vmax.xlane.f32.xlu0 %v2271
    %v2273 = vpop.xlane.xlu0 %2272
    %v2274 = vsub.f32 %v2266, %v2270
    %v2275 = vsub.f32 %v2267, %v2273
    %v2276 = vmul.f32 %v2274, 1.442695
    %v2277 = vpow.pop %v2276
    %v2278 = vmul.f32 %v2275, 1.442695
    %v2279 = vpow.pop %v2278
    %v2280 = vsel %vm299, %v2277, 0.0
    %2281 = vadd.xlane.f32.xlu0 %v2280
    %v2282 = vpop.xlane.xlu0 %2281
    %v2283 = vsel %vm299, %v2279, 0.0
    %2284 = vadd.xlane.f32.xlu0 %v2283
    %v2285 = vpop.xlane.xlu0 %2284
    %v2286 = vrcp.pop %v2282
    %v2287 = vrcp.pop %v2285
    %v2288 = vmul.f32 %v2277, %v2286
    %v2289 = vmul.f32 %v2279, %v2287
    %2290 = vrot.lane.b32.xlu0 %v2066, 56
    %v2291 = vpop.permute.xlu0 %2290
    %v2294 = vsel %vm299, %v2288, 0
    %2296 = vmatpush.msra.mxu0 0.0
    %2297 = vmatpush.msra.mxu0 0.0
    %2298 = vmatpush.msra.mxu0 0.0
    %2299 = vmatpush.msra.mxu0 0.0
    %2300 = vmatpush.msra.mxu0 0.0
    %2301 = vmatpush.msra.mxu0 0.0
    %2302 = vmatpush.msra.mxu0 0.0
    %2303 = vmatpush.msra.mxu0 0.0
    %2304 = vmatpush.msra.mxu0 0.0
    %2305 = vmatpush.msra.mxu0 0.0
    %2306 = vmatpush.msra.mxu0 0.0
    %2307 = vmatpush.msra.mxu0 0.0
    %2308 = vmatpush.msra.mxu0 0.0
    %2309 = vmatpush.msra.mxu0 0.0
    %2310 = vmatpush.msra.mxu0 0.0
    %2311 = vmatpush.msra.mxu0 %v2291
    %2312 = vmatmul.f32.gmra.mxu0 %v2294
    %v2313 = vpop.f32.mrf.mxu0
    %v2314 = vadd.f32 0.0, %v2313
    %2315 = vdwg.mxu0
    %2316 = vrot.lane.b32.xlu0 %v2069, 56
    %v2317 = vpop.permute.xlu0 %2316
    %v2320 = vsel %vm299, %v2289, 0
    %2322 = vmatpush.msra.mxu0 0.0
    %2323 = vmatpush.msra.mxu0 0.0
    %2324 = vmatpush.msra.mxu0 0.0
    %2325 = vmatpush.msra.mxu0 0.0
    %2326 = vmatpush.msra.mxu0 0.0
    %2327 = vmatpush.msra.mxu0 0.0
    %2328 = vmatpush.msra.mxu0 0.0
    %2329 = vmatpush.msra.mxu0 0.0
    %2330 = vmatpush.msra.mxu0 0.0
    %2331 = vmatpush.msra.mxu0 0.0
    %2332 = vmatpush.msra.mxu0 0.0
    %2333 = vmatpush.msra.mxu0 0.0
    %2334 = vmatpush.msra.mxu0 0.0
    %2335 = vmatpush.msra.mxu0 0.0
    %2336 = vmatpush.msra.mxu0 0.0
    %2337 = vmatpush.msra.mxu0 %v2317
    %2338 = vmatmul.f32.gmra.mxu0 %v2320
    %v2339 = vpop.f32.mrf.mxu0
    %v2340 = vadd.f32 0.0, %v2339
    %2341 = vdwg.mxu0
    %v2343 = vsel %vm299, %v2314, 0
    %v2346 = vsel %vm299, %v2340, 0
    %2348 = vmatpush.msra.mxu0 0.0
    %2349 = vmatpush.msra.mxu0 0.0
    %2350 = vmatpush.msra.mxu0 0.0
    %2351 = vmatpush.msra.mxu0 0.0
    %2352 = vmatpush.msra.mxu0 0.0
    %2353 = vmatpush.msra.mxu0 0.0
    %2354 = vmatpush.msra.mxu0 0.0
    %2355 = vmatpush.msra.mxu0 0.0
    %2356 = vmatpush.msra.mxu0 0.0
    %2357 = vmatpush.msra.mxu0 0.0
    %2358 = vmatpush.msra.mxu0 0.0
    %2359 = vmatpush.msra.mxu0 0.0
    %2360 = vmatpush.msra.mxu0 0.0
    %2361 = vmatpush.msra.mxu0 0.0
    %2362 = vmatpush.msra.mxu0 0.0
    %2363 = vmatpush.msra.mxu0 %v2073
    %2364 = vmatmul.f32.gmra.mxu0 %v2343
    %v2365 = vpop.f32.mrf.mxu0
    %v2366 = vadd.f32 0.0, %v2365
    %2367 = vmatmul.f32.gmra.mxu0 %v2346
    %v2368 = vpop.f32.mrf.mxu0
    %v2369 = vadd.f32 0.0, %v2368
    %2370 = vdwg.mxu0
    %v2372 = vsel %vm299, %v2180, 0
    %v2375 = vsel %vm299, %v2206, 0
    %2377 = vmatpush.msra.mxu0 0.0
    %2378 = vmatpush.msra.mxu0 0.0
    %2379 = vmatpush.msra.mxu0 0.0
    %2380 = vmatpush.msra.mxu0 0.0
    %2381 = vmatpush.msra.mxu0 0.0
    %2382 = vmatpush.msra.mxu0 0.0
    %2383 = vmatpush.msra.mxu0 0.0
    %2384 = vmatpush.msra.mxu0 0.0
    %2385 = vmatpush.msra.mxu0 0.0
    %2386 = vmatpush.msra.mxu0 0.0
    %2387 = vmatpush.msra.mxu0 0.0
    %2388 = vmatpush.msra.mxu0 0.0
    %2389 = vmatpush.msra.mxu0 0.0
    %2390 = vmatpush.msra.mxu0 0.0
    %2391 = vmatpush.msra.mxu0 0.0
    %2392 = vmatpush.msra.mxu0 %v2072
    %2393 = vmatmul.f32.gmra.mxu0 %v2372
    %v2394 = vpop.f32.mrf.mxu0
    %v2395 = vadd.f32 %v2366, %v2394
    %2396 = vmatmul.f32.gmra.mxu0 %v2375
    %v2397 = vpop.f32.mrf.mxu0
    %v2398 = vadd.f32 %v2369, %v2397
    %2399 = vdwg.mxu0
    %2400 = vrot.lane.b32.xlu0 %v2066, 112
    %v2401 = vpop.permute.xlu0 %2400
    %2402 = vrot.lane.b32.xlu0 %v2066, 80
    %v2403 = vpop.permute.xlu0 %2402
    %v2404 = vsel %vm299, %v2401, 0
    %v2406 = vsel %vm299, %v2403, 0
    %2408 = vmatpush.xpose.msra.mxu0 0.0
    %2409 = vmatpush.xpose.msra.mxu0 0.0
    %2410 = vmatpush.xpose.msra.mxu0 0.0
    %2411 = vmatpush.xpose.msra.mxu0 0.0
    %2412 = vmatpush.xpose.msra.mxu0 0.0
    %2413 = vmatpush.xpose.msra.mxu0 0.0
    %2414 = vmatpush.xpose.msra.mxu0 0.0
    %2415 = vmatpush.xpose.msra.mxu0 0.0
    %2416 = vmatpush.xpose.msra.mxu0 0.0
    %2417 = vmatpush.xpose.msra.mxu0 0.0
    %2418 = vmatpush.xpose.msra.mxu0 0.0
    %2419 = vmatpush.xpose.msra.mxu0 0.0
    %2420 = vmatpush.xpose.msra.mxu0 0.0
    %2421 = vmatpush.xpose.msra.mxu0 0.0
    %2422 = vmatpush.xpose.msra.mxu0 0.0
    %2423 = vmatpush.xpose.msra.mxu0 %v2406
    %2424 = vmatmul.f32.gmra.mxu0 %v2404
    %v2425 = vpop.f32.mrf.mxu0
    %v2426 = vadd.f32 0.0, %v2425
    %2427 = vdwg.mxu0
    %2428 = vrot.lane.b32.xlu0 %v2069, 112
    %v2429 = vpop.permute.xlu0 %2428
    %2430 = vrot.lane.b32.xlu0 %v2069, 80
    %v2431 = vpop.permute.xlu0 %2430
    %v2432 = vsel %vm299, %v2429, 0
    %v2434 = vsel %vm299, %v2431, 0
    %2436 = vmatpush.xpose.msra.mxu0 0.0
    %2437 = vmatpush.xpose.msra.mxu0 0.0
    %2438 = vmatpush.xpose.msra.mxu0 0.0
    %2439 = vmatpush.xpose.msra.mxu0 0.0
    %2440 = vmatpush.xpose.msra.mxu0 0.0
    %2441 = vmatpush.xpose.msra.mxu0 0.0
    %2442 = vmatpush.xpose.msra.mxu0 0.0
    %2443 = vmatpush.xpose.msra.mxu0 0.0
    %2444 = vmatpush.xpose.msra.mxu0 0.0
    %2445 = vmatpush.xpose.msra.mxu0 0.0
    %2446 = vmatpush.xpose.msra.mxu0 0.0
    %2447 = vmatpush.xpose.msra.mxu0 0.0
    %2448 = vmatpush.xpose.msra.mxu0 0.0
    %2449 = vmatpush.xpose.msra.mxu0 0.0
    %2450 = vmatpush.xpose.msra.mxu0 0.0
    %2451 = vmatpush.xpose.msra.mxu0 %v2434
    %2452 = vmatmul.f32.gmra.mxu0 %v2432
    %v2453 = vpop.f32.mrf.mxu0
    %v2454 = vadd.f32 0.0, %v2453
    %2455 = vdwg.mxu0
    %v2456 = vmul.f32 %v2426, 0.35355338
    %v2457 = vmul.f32 %v2454, 0.35355338
    %v2458 = vadd.f32 %v2456, %v152
    %v2459 = vadd.f32 %v2457, %v153
    %v2460 = vsel %vm299, %v2458, -inf
    %2461 = vmax.xlane.f32.xlu0 %v2460
    %v2462 = vpop.xlane.xlu0 %2461
    %v2463 = vsel %vm299, %v2459, -inf
    %2464 = vmax.xlane.f32.xlu0 %v2463
    %v2465 = vpop.xlane.xlu0 %2464
    %v2466 = vsub.f32 %v2458, %v2462
    %v2467 = vsub.f32 %v2459, %v2465
    %v2468 = vmul.f32 %v2466, 1.442695
    %v2469 = vpow.pop %v2468
    %v2470 = vmul.f32 %v2467, 1.442695
    %v2471 = vpow.pop %v2470
    %v2472 = vsel %vm299, %v2469, 0.0
    %2473 = vadd.xlane.f32.xlu0 %v2472
    %v2474 = vpop.xlane.xlu0 %2473
    %v2475 = vsel %vm299, %v2471, 0.0
    %2476 = vadd.xlane.f32.xlu0 %v2475
    %v2477 = vpop.xlane.xlu0 %2476
    %v2478 = vrcp.pop %v2474
    %v2479 = vrcp.pop %v2477
    %v2480 = vmul.f32 %v2469, %v2478
    %v2481 = vmul.f32 %v2471, %v2479
    %2482 = vrot.lane.b32.xlu0 %v2066, 48
    %v2483 = vpop.permute.xlu0 %2482
    %v2486 = vsel %vm299, %v2480, 0
    %2488 = vmatpush.msra.mxu0 0.0
    %2489 = vmatpush.msra.mxu0 0.0
    %2490 = vmatpush.msra.mxu0 0.0
    %2491 = vmatpush.msra.mxu0 0.0
    %2492 = vmatpush.msra.mxu0 0.0
    %2493 = vmatpush.msra.mxu0 0.0
    %2494 = vmatpush.msra.mxu0 0.0
    %2495 = vmatpush.msra.mxu0 0.0
    %2496 = vmatpush.msra.mxu0 0.0
    %2497 = vmatpush.msra.mxu0 0.0
    %2498 = vmatpush.msra.mxu0 0.0
    %2499 = vmatpush.msra.mxu0 0.0
    %2500 = vmatpush.msra.mxu0 0.0
    %2501 = vmatpush.msra.mxu0 0.0
    %2502 = vmatpush.msra.mxu0 0.0
    %2503 = vmatpush.msra.mxu0 %v2483
    %2504 = vmatmul.f32.gmra.mxu0 %v2486
    %v2505 = vpop.f32.mrf.mxu0
    %v2506 = vadd.f32 0.0, %v2505
    %2507 = vdwg.mxu0
    %2508 = vrot.lane.b32.xlu0 %v2069, 48
    %v2509 = vpop.permute.xlu0 %2508
    %v2512 = vsel %vm299, %v2481, 0
    %2514 = vmatpush.msra.mxu0 0.0
    %2515 = vmatpush.msra.mxu0 0.0
    %2516 = vmatpush.msra.mxu0 0.0
    %2517 = vmatpush.msra.mxu0 0.0
    %2518 = vmatpush.msra.mxu0 0.0
    %2519 = vmatpush.msra.mxu0 0.0
    %2520 = vmatpush.msra.mxu0 0.0
    %2521 = vmatpush.msra.mxu0 0.0
    %2522 = vmatpush.msra.mxu0 0.0
    %2523 = vmatpush.msra.mxu0 0.0
    %2524 = vmatpush.msra.mxu0 0.0
    %2525 = vmatpush.msra.mxu0 0.0
    %2526 = vmatpush.msra.mxu0 0.0
    %2527 = vmatpush.msra.mxu0 0.0
    %2528 = vmatpush.msra.mxu0 0.0
    %2529 = vmatpush.msra.mxu0 %v2509
    %2530 = vmatmul.f32.gmra.mxu0 %v2512
    %v2531 = vpop.f32.mrf.mxu0
    %v2532 = vadd.f32 0.0, %v2531
    %2533 = vdwg.mxu0
    %v2535 = vsel %vm299, %v2506, 0
    %v2538 = vsel %vm299, %v2532, 0
    %2540 = vmatpush.msra.mxu0 0.0
    %2541 = vmatpush.msra.mxu0 0.0
    %2542 = vmatpush.msra.mxu0 0.0
    %2543 = vmatpush.msra.mxu0 0.0
    %2544 = vmatpush.msra.mxu0 0.0
    %2545 = vmatpush.msra.mxu0 0.0
    %2546 = vmatpush.msra.mxu0 0.0
    %2547 = vmatpush.msra.mxu0 0.0
    %2548 = vmatpush.msra.mxu0 0.0
    %2549 = vmatpush.msra.mxu0 0.0
    %2550 = vmatpush.msra.mxu0 0.0
    %2551 = vmatpush.msra.mxu0 0.0
    %2552 = vmatpush.msra.mxu0 0.0
    %2553 = vmatpush.msra.mxu0 0.0
    %2554 = vmatpush.msra.mxu0 0.0
    %2555 = vmatpush.msra.mxu0 %v2074
    %2556 = vmatmul.f32.gmra.mxu0 %v2535
    %v2557 = vpop.f32.mrf.mxu0
    %v2558 = vadd.f32 0.0, %v2557
    %2559 = vmatmul.f32.gmra.mxu0 %v2538
    %v2560 = vpop.f32.mrf.mxu0
    %v2561 = vadd.f32 0.0, %v2560
    %2562 = vdwg.mxu0
    %v2563 = vadd.f32 %v2395, %v2558
    %v2564 = vadd.f32 %v2398, %v2561
    %2565 = vrot.lane.b32.xlu0 %v2066, 104
    %v2566 = vpop.permute.xlu0 %2565
    %2567 = vrot.lane.b32.xlu0 %v2066, 72
    %v2568 = vpop.permute.xlu0 %2567
    %v2569 = vsel %vm299, %v2566, 0
    %v2571 = vsel %vm299, %v2568, 0
    %2573 = vmatpush.xpose.msra.mxu0 0.0
    %2574 = vmatpush.xpose.msra.mxu0 0.0
    %2575 = vmatpush.xpose.msra.mxu0 0.0
    %2576 = vmatpush.xpose.msra.mxu0 0.0
    %2577 = vmatpush.xpose.msra.mxu0 0.0
    %2578 = vmatpush.xpose.msra.mxu0 0.0
    %2579 = vmatpush.xpose.msra.mxu0 0.0
    %2580 = vmatpush.xpose.msra.mxu0 0.0
    %2581 = vmatpush.xpose.msra.mxu0 0.0
    %2582 = vmatpush.xpose.msra.mxu0 0.0
    %2583 = vmatpush.xpose.msra.mxu0 0.0
    %2584 = vmatpush.xpose.msra.mxu0 0.0
    %2585 = vmatpush.xpose.msra.mxu0 0.0
    %2586 = vmatpush.xpose.msra.mxu0 0.0
    %2587 = vmatpush.xpose.msra.mxu0 0.0
    %2588 = vmatpush.xpose.msra.mxu0 %v2571
    %2589 = vmatmul.f32.gmra.mxu0 %v2569
    %v2590 = vpop.f32.mrf.mxu0
    %v2591 = vadd.f32 0.0, %v2590
    %2592 = vdwg.mxu0
    %2593 = vrot.lane.b32.xlu0 %v2069, 104
    %v2594 = vpop.permute.xlu0 %2593
    %2595 = vrot.lane.b32.xlu0 %v2069, 72
    %v2596 = vpop.permute.xlu0 %2595
    %v2597 = vsel %vm299, %v2594, 0
    %v2599 = vsel %vm299, %v2596, 0
    %2601 = vmatpush.xpose.msra.mxu0 0.0
    %2602 = vmatpush.xpose.msra.mxu0 0.0
    %2603 = vmatpush.xpose.msra.mxu0 0.0
    %2604 = vmatpush.xpose.msra.mxu0 0.0
    %2605 = vmatpush.xpose.msra.mxu0 0.0
    %2606 = vmatpush.xpose.msra.mxu0 0.0
    %2607 = vmatpush.xpose.msra.mxu0 0.0
    %2608 = vmatpush.xpose.msra.mxu0 0.0
    %2609 = vmatpush.xpose.msra.mxu0 0.0
    %2610 = vmatpush.xpose.msra.mxu0 0.0
    %2611 = vmatpush.xpose.msra.mxu0 0.0
    %2612 = vmatpush.xpose.msra.mxu0 0.0
    %2613 = vmatpush.xpose.msra.mxu0 0.0
    %2614 = vmatpush.xpose.msra.mxu0 0.0
    %2615 = vmatpush.xpose.msra.mxu0 0.0
    %2616 = vmatpush.xpose.msra.mxu0 %v2599
    %2617 = vmatmul.f32.gmra.mxu0 %v2597
    %v2618 = vpop.f32.mrf.mxu0
    %v2619 = vadd.f32 0.0, %v2618
    %2620 = vdwg.mxu0
    %v2621 = vmul.f32 %v2591, 0.35355338
    %v2622 = vmul.f32 %v2619, 0.35355338
    %v2623 = vadd.f32 %v2621, %v152
    %v2624 = vadd.f32 %v2622, %v153
    %v2625 = vsel %vm299, %v2623, -inf
    %2626 = vmax.xlane.f32.xlu0 %v2625
    %v2627 = vpop.xlane.xlu0 %2626
    %v2628 = vsel %vm299, %v2624, -inf
    %2629 = vmax.xlane.f32.xlu0 %v2628
    %v2630 = vpop.xlane.xlu0 %2629
    %v2631 = vsub.f32 %v2623, %v2627
    %v2632 = vsub.f32 %v2624, %v2630
    %v2633 = vmul.f32 %v2631, 1.442695
    %v2634 = vpow.pop %v2633
    %v2635 = vmul.f32 %v2632, 1.442695
    %v2636 = vpow.pop %v2635
    %v2637 = vsel %vm299, %v2634, 0.0
    %2638 = vadd.xlane.f32.xlu0 %v2637
    %v2639 = vpop.xlane.xlu0 %2638
    %v2640 = vsel %vm299, %v2636, 0.0
    %2641 = vadd.xlane.f32.xlu0 %v2640
    %v2642 = vpop.xlane.xlu0 %2641
    %v2643 = vrcp.pop %v2639
    %v2644 = vrcp.pop %v2642
    %v2645 = vmul.f32 %v2634, %v2643
    %v2646 = vmul.f32 %v2636, %v2644
    %2647 = vrot.lane.b32.xlu0 %v2066, 40
    %v2648 = vpop.permute.xlu0 %2647
    %v2651 = vsel %vm299, %v2645, 0
    %2653 = vmatpush.msra.mxu0 0.0
    %2654 = vmatpush.msra.mxu0 0.0
    %2655 = vmatpush.msra.mxu0 0.0
    %2656 = vmatpush.msra.mxu0 0.0
    %2657 = vmatpush.msra.mxu0 0.0
    %2658 = vmatpush.msra.mxu0 0.0
    %2659 = vmatpush.msra.mxu0 0.0
    %2660 = vmatpush.msra.mxu0 0.0
    %2661 = vmatpush.msra.mxu0 0.0
    %2662 = vmatpush.msra.mxu0 0.0
    %2663 = vmatpush.msra.mxu0 0.0
    %2664 = vmatpush.msra.mxu0 0.0
    %2665 = vmatpush.msra.mxu0 0.0
    %2666 = vmatpush.msra.mxu0 0.0
    %2667 = vmatpush.msra.mxu0 0.0
    %2668 = vmatpush.msra.mxu0 %v2648
    %2669 = vmatmul.f32.gmra.mxu0 %v2651
    %v2670 = vpop.f32.mrf.mxu0
    %v2671 = vadd.f32 0.0, %v2670
    %2672 = vdwg.mxu0
    %2673 = vrot.lane.b32.xlu0 %v2069, 40
    %v2674 = vpop.permute.xlu0 %2673
    %v2677 = vsel %vm299, %v2646, 0
    %2679 = vmatpush.msra.mxu0 0.0
    %2680 = vmatpush.msra.mxu0 0.0
    %2681 = vmatpush.msra.mxu0 0.0
    %2682 = vmatpush.msra.mxu0 0.0
    %2683 = vmatpush.msra.mxu0 0.0
    %2684 = vmatpush.msra.mxu0 0.0
    %2685 = vmatpush.msra.mxu0 0.0
    %2686 = vmatpush.msra.mxu0 0.0
    %2687 = vmatpush.msra.mxu0 0.0
    %2688 = vmatpush.msra.mxu0 0.0
    %2689 = vmatpush.msra.mxu0 0.0
    %2690 = vmatpush.msra.mxu0 0.0
    %2691 = vmatpush.msra.mxu0 0.0
    %2692 = vmatpush.msra.mxu0 0.0
    %2693 = vmatpush.msra.mxu0 0.0
    %2694 = vmatpush.msra.mxu0 %v2674
    %2695 = vmatmul.f32.gmra.mxu0 %v2677
    %v2696 = vpop.f32.mrf.mxu0
    %v2697 = vadd.f32 0.0, %v2696
    %2698 = vdwg.mxu0
    %v2700 = vsel %vm299, %v2671, 0
    %v2703 = vsel %vm299, %v2697, 0
    %2705 = vmatpush.msra.mxu0 0.0
    %2706 = vmatpush.msra.mxu0 0.0
    %2707 = vmatpush.msra.mxu0 0.0
    %2708 = vmatpush.msra.mxu0 0.0
    %2709 = vmatpush.msra.mxu0 0.0
    %2710 = vmatpush.msra.mxu0 0.0
    %2711 = vmatpush.msra.mxu0 0.0
    %2712 = vmatpush.msra.mxu0 0.0
    %2713 = vmatpush.msra.mxu0 0.0
    %2714 = vmatpush.msra.mxu0 0.0
    %2715 = vmatpush.msra.mxu0 0.0
    %2716 = vmatpush.msra.mxu0 0.0
    %2717 = vmatpush.msra.mxu0 0.0
    %2718 = vmatpush.msra.mxu0 0.0
    %2719 = vmatpush.msra.mxu0 0.0
    %2720 = vmatpush.msra.mxu0 %v2075
    %2721 = vmatmul.f32.gmra.mxu0 %v2700
    %v2722 = vpop.f32.mrf.mxu0
    %v2723 = vadd.f32 0.0, %v2722
    %2724 = vmatmul.f32.gmra.mxu0 %v2703
    %v2725 = vpop.f32.mrf.mxu0
    %v2726 = vadd.f32 0.0, %v2725
    %2727 = vdwg.mxu0
    %v2728 = vadd.f32 %v2563, %v2723
    %v2729 = vadd.f32 %v2564, %v2726
    %s2730 = scalar_lea.vmem %s7, 1
    %v2731 = vld [vmem:[%s2730] sm:$0x1]
    %v2733 = vperm.slane %v2731, 0
    %v2735 = vadd.f32 %v2728, %v2733
    %v2736 = vadd.f32 %v2729, %v2733
    %v2737 = vadd.f32 %v1944, %v2735
    %v2738 = vadd.f32 %v1945, %v2736
    %v2739 = vsel %vm158, %v2737, 0.0
    %2740 = vadd.xlane.f32.xlu0 %v2739
    %v2741 = vpop.xlane.xlu0 %2740
    %v2742 = vsel %vm158, %v2738, 0.0
    %2743 = vadd.xlane.f32.xlu0 %v2742
    %v2744 = vpop.xlane.xlu0 %2743
    %v2745 = vmul.f32 %v2741, %v171
    %v2746 = vmul.f32 %v2744, %v171
    %v2747 = vsub.f32 %v2737, %v2745
    %v2748 = vsub.f32 %v2738, %v2746
    %v2749 = vmul.f32 %v2747, %v2747
    %v2750 = vmul.f32 %v2748, %v2748
    %v2751 = vsel %vm158, %v2749, 0.0
    %2752 = vadd.xlane.f32.xlu0 %v2751
    %v2753 = vpop.xlane.xlu0 %2752
    %v2754 = vsel %vm158, %v2750, 0.0
    %2755 = vadd.xlane.f32.xlu0 %v2754
    %v2756 = vpop.xlane.xlu0 %2755
    %v2757 = vmul.f32 %v2753, %v190
    %v2758 = vmul.f32 %v2756, %v190
    %v2759 = vperm.slane %v1947, 1
    %v2760 = vmul.f32 %v2759, %v2747
    %v2761 = vmul.f32 %v2759, %v2748
    %v2762 = vrsqrt.pop %v2757
    %v2763 = vmul.f32 %v2762, %v2757
    %v2764 = vmul.f32 %v2763, %v2762
    %v2765 = vmul.f32 0.5, %v2764
    %v2766 = vsub.f32 1.5, %v2765
    %v2767 = vmul.f32 %v2762, %v2766
    %v2768 = vmul.f32 %v2757, %v2767
    %vm2769 = vcmp.eq.f32.partialorder %v2757, inf
    %v2770 = vsel %vm2769, %v2757, %v2768
    %vm2771 = vcmp.eq.f32.partialorder %v2757, 0.0
    %v2772 = vand.u32 %v2757, 2147483648
    %v2773 = vsel %vm2771, %v2772, %v2770
    %v2774 = vrsqrt.pop %v2758
    %v2775 = vmul.f32 %v2774, %v2758
    %v2776 = vmul.f32 %v2775, %v2774
    %v2777 = vmul.f32 0.5, %v2776
    %v2778 = vsub.f32 1.5, %v2777
    %v2779 = vmul.f32 %v2774, %v2778
    %v2780 = vmul.f32 %v2758, %v2779
    %vm2781 = vcmp.eq.f32.partialorder %v2758, inf
    %v2782 = vsel %vm2781, %v2758, %v2780
    %vm2783 = vcmp.eq.f32.partialorder %v2758, 0.0
    %v2784 = vand.u32 %v2758, 2147483648
    %v2785 = vsel %vm2783, %v2784, %v2782
    %v2786 = vadd.f32 %v2773, 1e-06
    %v2787 = vadd.f32 %v2785, 1e-06
    %v2788 = vrcp.pop %v2786
    %v2789 = vmul.f32 %v2786, %v2788
    %v2790 = vsub.f32 1.0, %v2789
    %v2791 = vmul.f32 %v2788, %v2790
    %v2792 = vadd.f32 %v2788, %v2791
    %vm2793 = vweird.f32 %v2786
    %vm2794 = vweird.f32 %v2788
    %vm2795 = vmor %vm2793, %vm2794
    %v2796 = vsel %vm2795, %v2788, %v2792
    %v2797 = vand.u32 2147483647, %v2786
    %vm2798 = vcmp.eq.f32.partialorder %v2797, 8.507059e+37
    %v2799 = vand.u32 %v2786, 2147483648
    %v2800 = vor.u32 1.1754944e-38, %v2799
    %v2801 = vsel %vm2798, %v2800, %v2796
    %v2802 = vmul.f32 %v2760, %v2801
    %v2803 = vrcp.pop %v2787
    %v2804 = vmul.f32 %v2787, %v2803
    %v2805 = vsub.f32 1.0, %v2804
    %v2806 = vmul.f32 %v2803, %v2805
    %v2807 = vadd.f32 %v2803, %v2806
    %vm2808 = vweird.f32 %v2787
    %vm2809 = vweird.f32 %v2803
    %vm2810 = vmor %vm2808, %vm2809
    %v2811 = vsel %vm2810, %v2803, %v2807
    %v2812 = vand.u32 2147483647, %v2787
    %vm2813 = vcmp.eq.f32.partialorder %v2812, 8.507059e+37
    %v2814 = vand.u32 %v2787, 2147483648
    %v2815 = vor.u32 1.1754944e-38, %v2814
    %v2816 = vsel %vm2813, %v2815, %v2811
    %v2817 = vmul.f32 %v2761, %v2816
    %v2818 = vperm.slane %v1949, 1
    %v2819 = vadd.f32 %v2802, %v2818
    %v2820 = vadd.f32 %v2817, %v2818
    %s2821 = scalar_lea.vmem %s8, 32
    %v2822 = vld [vmem:[%s2821] sm:$0xff]
    %v2823 = vld [vmem:[%s2821 + $0x8] sm:$0xff]
    %v2824 = vld [vmem:[%s2821 + $0x10] sm:$0xff]
    %v2825 = vld [vmem:[%s2821 + $0x18] sm:$0xff]
    %s2826 = scalar_lea.vmem %s9, 1
    %v2827 = vld [vmem:[%s2826] sm:$0x1]
    %v2829 = vperm.slane %v2827, 0
    %v2832 = vsel %vm158, %v2819, 0
    %v2835 = vsel %vm158, %v2820, 0
    %2837 = vmatpush.msra.mxu0 0.0
    %2838 = vmatpush.msra.mxu0 0.0
    %2839 = vmatpush.msra.mxu0 0.0
    %2840 = vmatpush.msra.mxu0 0.0
    %2841 = vmatpush.msra.mxu0 0.0
    %2842 = vmatpush.msra.mxu0 0.0
    %2843 = vmatpush.msra.mxu0 0.0
    %2844 = vmatpush.msra.mxu0 0.0
    %2845 = vmatpush.msra.mxu0 0.0
    %2846 = vmatpush.msra.mxu0 0.0
    %2847 = vmatpush.msra.mxu0 0.0
    %2848 = vmatpush.msra.mxu0 0.0
    %2849 = vmatpush.msra.mxu0 %v2825
    %2850 = vmatpush.msra.mxu0 %v2824
    %2851 = vmatpush.msra.mxu0 %v2823
    %2852 = vmatpush.msra.mxu0 %v2822
    %2853 = vmatmul.f32.gmra.mxu0 %v2832
    %v2854 = vpop.f32.mrf.mxu0
    %v2855 = vadd.f32 %v2829, %v2854
    %2856 = vmatmul.f32.gmra.mxu0 %v2835
    %v2857 = vpop.f32.mrf.mxu0
    %v2858 = vadd.f32 %v2829, %v2857
    %2859 = vdwg.mxu0
    %s2860 = scalar_lea.vmem [#allocation2], 32
    %v2861 = vld [vmem:[%s2860] sm:$0xff]
    %v2862 = vld [vmem:[%s2860 + $0x8] sm:$0xff]
    %v2863 = vld [vmem:[%s2860 + $0x10] sm:$0xff]
    %v2864 = vld [vmem:[%s2860 + $0x18] sm:$0xff]
    %s2865 = scalar_lea.vmem %s11, 1
    %v2866 = vld [vmem:[%s2865] sm:$0x1]
    %v2868 = vperm.slane %v2866, 0
    %2870 = vmatpush.msra.mxu0 0.0
    %2871 = vmatpush.msra.mxu0 0.0
    %2872 = vmatpush.msra.mxu0 0.0
    %2873 = vmatpush.msra.mxu0 0.0
    %2874 = vmatpush.msra.mxu0 0.0
    %2875 = vmatpush.msra.mxu0 0.0
    %2876 = vmatpush.msra.mxu0 0.0
    %2877 = vmatpush.msra.mxu0 0.0
    %2878 = vmatpush.msra.mxu0 0.0
    %2879 = vmatpush.msra.mxu0 0.0
    %2880 = vmatpush.msra.mxu0 0.0
    %2881 = vmatpush.msra.mxu0 0.0
    %2882 = vmatpush.msra.mxu0 %v2864
    %2883 = vmatpush.msra.mxu0 %v2863
    %2884 = vmatpush.msra.mxu0 %v2862
    %2885 = vmatpush.msra.mxu0 %v2861
    %2886 = vmatmul.f32.gmra.mxu0 %v1087
    %v2887 = vpop.f32.mrf.mxu0
    %v2888 = vadd.f32 %v2868, %v2887
    %2889 = vmatmul.f32.gmra.mxu0 %v1090
    %v2890 = vpop.f32.mrf.mxu0
    %v2891 = vadd.f32 %v2868, %v2890
    %2892 = vdwg.mxu0
    %s2893 = scalar_lea.vmem [#allocation5], 32
    %v2894 = vld [vmem:[%s2893] sm:$0xff]
    %v2895 = vld [vmem:[%s2893 + $0x8] sm:$0xff]
    %v2896 = vld [vmem:[%s2893 + $0x10] sm:$0xff]
    %v2897 = vld [vmem:[%s2893 + $0x18] sm:$0xff]
    %v2899 = vsel %vm299, %v2855, 0
    %v2902 = vsel %vm299, %v2888, 0
    %2904 = vmatpush.xpose.msra.mxu0 0.0
    %2905 = vmatpush.xpose.msra.mxu0 0.0
    %2906 = vmatpush.xpose.msra.mxu0 0.0
    %2907 = vmatpush.xpose.msra.mxu0 0.0
    %2908 = vmatpush.xpose.msra.mxu0 0.0
    %2909 = vmatpush.xpose.msra.mxu0 0.0
    %2910 = vmatpush.xpose.msra.mxu0 0.0
    %2911 = vmatpush.xpose.msra.mxu0 0.0
    %2912 = vmatpush.xpose.msra.mxu0 0.0
    %2913 = vmatpush.xpose.msra.mxu0 0.0
    %2914 = vmatpush.xpose.msra.mxu0 0.0
    %2915 = vmatpush.xpose.msra.mxu0 0.0
    %2916 = vmatpush.xpose.msra.mxu0 0.0
    %2917 = vmatpush.xpose.msra.mxu0 0.0
    %2918 = vmatpush.xpose.msra.mxu0 0.0
    %2919 = vmatpush.xpose.msra.mxu0 %v2902
    %2920 = vmatmul.f32.gmra.mxu0 %v2899
    %v2921 = vpop.f32.mrf.mxu0
    %v2922 = vadd.f32 0.0, %v2921
    %2923 = vdwg.mxu0
    %v2925 = vsel %vm299, %v2858, 0
    %v2928 = vsel %vm299, %v2891, 0
    %2930 = vmatpush.xpose.msra.mxu0 0.0
    %2931 = vmatpush.xpose.msra.mxu0 0.0
    %2932 = vmatpush.xpose.msra.mxu0 0.0
    %2933 = vmatpush.xpose.msra.mxu0 0.0
    %2934 = vmatpush.xpose.msra.mxu0 0.0
    %2935 = vmatpush.xpose.msra.mxu0 0.0
    %2936 = vmatpush.xpose.msra.mxu0 0.0
    %2937 = vmatpush.xpose.msra.mxu0 0.0
    %2938 = vmatpush.xpose.msra.mxu0 0.0
    %2939 = vmatpush.xpose.msra.mxu0 0.0
    %2940 = vmatpush.xpose.msra.mxu0 0.0
    %2941 = vmatpush.xpose.msra.mxu0 0.0
    %2942 = vmatpush.xpose.msra.mxu0 0.0
    %2943 = vmatpush.xpose.msra.mxu0 0.0
    %2944 = vmatpush.xpose.msra.mxu0 0.0
    %2945 = vmatpush.xpose.msra.mxu0 %v2928
    %2946 = vmatmul.f32.gmra.mxu0 %v2925
    %v2947 = vpop.f32.mrf.mxu0
    %v2948 = vadd.f32 0.0, %v2947
    %2949 = vdwg.mxu0
    %v2950 = vmul.f32 %v2922, 0.35355338
    %v2951 = vmul.f32 %v2948, 0.35355338
    %v2952 = vadd.f32 %v2950, %v154
    %v2953 = vadd.f32 %v2951, %v155
    %v2954 = vsel %vm299, %v2952, -inf
    %2955 = vmax.xlane.f32.xlu0 %v2954
    %v2956 = vpop.xlane.xlu0 %2955
    %v2957 = vsel %vm299, %v2953, -inf
    %2958 = vmax.xlane.f32.xlu0 %v2957
    %v2959 = vpop.xlane.xlu0 %2958
    %v2960 = vsub.f32 %v2952, %v2956
    %v2961 = vsub.f32 %v2953, %v2959
    %v2962 = vmul.f32 %v2960, 1.442695
    %v2963 = vpow.pop %v2962
    %v2964 = vmul.f32 %v2961, 1.442695
    %v2965 = vpow.pop %v2964
    %v2966 = vsel %vm299, %v2963, 0.0
    %2967 = vadd.xlane.f32.xlu0 %v2966
    %v2968 = vpop.xlane.xlu0 %2967
    %v2969 = vsel %vm299, %v2965, 0.0
    %2970 = vadd.xlane.f32.xlu0 %v2969
    %v2971 = vpop.xlane.xlu0 %2970
    %v2972 = vrcp.pop %v2968
    %v2973 = vrcp.pop %v2971
    %v2974 = vmul.f32 %v2963, %v2972
    %v2975 = vmul.f32 %v2965, %v2973
    %2976 = vrot.lane.b32.xlu0 %v2888, 96
    %v2977 = vpop.permute.xlu0 %2976
    %v2980 = vsel %vm299, %v2974, 0
    %2982 = vmatpush.msra.mxu0 0.0
    %2983 = vmatpush.msra.mxu0 0.0
    %2984 = vmatpush.msra.mxu0 0.0
    %2985 = vmatpush.msra.mxu0 0.0
    %2986 = vmatpush.msra.mxu0 0.0
    %2987 = vmatpush.msra.mxu0 0.0
    %2988 = vmatpush.msra.mxu0 0.0
    %2989 = vmatpush.msra.mxu0 0.0
    %2990 = vmatpush.msra.mxu0 0.0
    %2991 = vmatpush.msra.mxu0 0.0
    %2992 = vmatpush.msra.mxu0 0.0
    %2993 = vmatpush.msra.mxu0 0.0
    %2994 = vmatpush.msra.mxu0 0.0
    %2995 = vmatpush.msra.mxu0 0.0
    %2996 = vmatpush.msra.mxu0 0.0
    %2997 = vmatpush.msra.mxu0 %v2977
    %2998 = vmatmul.f32.gmra.mxu0 %v2980
    %v2999 = vpop.f32.mrf.mxu0
    %v3000 = vadd.f32 0.0, %v2999
    %3001 = vdwg.mxu0
    %3002 = vrot.lane.b32.xlu0 %v2891, 96
    %v3003 = vpop.permute.xlu0 %3002
    %v3006 = vsel %vm299, %v2975, 0
    %3008 = vmatpush.msra.mxu0 0.0
    %3009 = vmatpush.msra.mxu0 0.0
    %3010 = vmatpush.msra.mxu0 0.0
    %3011 = vmatpush.msra.mxu0 0.0
    %3012 = vmatpush.msra.mxu0 0.0
    %3013 = vmatpush.msra.mxu0 0.0
    %3014 = vmatpush.msra.mxu0 0.0
    %3015 = vmatpush.msra.mxu0 0.0
    %3016 = vmatpush.msra.mxu0 0.0
    %3017 = vmatpush.msra.mxu0 0.0
    %3018 = vmatpush.msra.mxu0 0.0
    %3019 = vmatpush.msra.mxu0 0.0
    %3020 = vmatpush.msra.mxu0 0.0
    %3021 = vmatpush.msra.mxu0 0.0
    %3022 = vmatpush.msra.mxu0 0.0
    %3023 = vmatpush.msra.mxu0 %v3003
    %3024 = vmatmul.f32.gmra.mxu0 %v3006
    %v3025 = vpop.f32.mrf.mxu0
    %v3026 = vadd.f32 0.0, %v3025
    %3027 = vdwg.mxu0
    %3028 = vrot.lane.b32.xlu0 %v2855, 120
    %v3029 = vpop.permute.xlu0 %3028
    %3030 = vrot.lane.b32.xlu0 %v2888, 120
    %v3031 = vpop.permute.xlu0 %3030
    %v3032 = vsel %vm299, %v3029, 0
    %v3034 = vsel %vm299, %v3031, 0
    %3036 = vmatpush.xpose.msra.mxu0 0.0
    %3037 = vmatpush.xpose.msra.mxu0 0.0
    %3038 = vmatpush.xpose.msra.mxu0 0.0
    %3039 = vmatpush.xpose.msra.mxu0 0.0
    %3040 = vmatpush.xpose.msra.mxu0 0.0
    %3041 = vmatpush.xpose.msra.mxu0 0.0
    %3042 = vmatpush.xpose.msra.mxu0 0.0
    %3043 = vmatpush.xpose.msra.mxu0 0.0
    %3044 = vmatpush.xpose.msra.mxu0 0.0
    %3045 = vmatpush.xpose.msra.mxu0 0.0
    %3046 = vmatpush.xpose.msra.mxu0 0.0
    %3047 = vmatpush.xpose.msra.mxu0 0.0
    %3048 = vmatpush.xpose.msra.mxu0 0.0
    %3049 = vmatpush.xpose.msra.mxu0 0.0
    %3050 = vmatpush.xpose.msra.mxu0 0.0
    %3051 = vmatpush.xpose.msra.mxu0 %v3034
    %3052 = vmatmul.f32.gmra.mxu0 %v3032
    %v3053 = vpop.f32.mrf.mxu0
    %v3054 = vadd.f32 0.0, %v3053
    %3055 = vdwg.mxu0
    %3056 = vrot.lane.b32.xlu0 %v2858, 120
    %v3057 = vpop.permute.xlu0 %3056
    %3058 = vrot.lane.b32.xlu0 %v2891, 120
    %v3059 = vpop.permute.xlu0 %3058
    %v3060 = vsel %vm299, %v3057, 0
    %v3062 = vsel %vm299, %v3059, 0
    %3064 = vmatpush.xpose.msra.mxu0 0.0
    %3065 = vmatpush.xpose.msra.mxu0 0.0
    %3066 = vmatpush.xpose.msra.mxu0 0.0
    %3067 = vmatpush.xpose.msra.mxu0 0.0
    %3068 = vmatpush.xpose.msra.mxu0 0.0
    %3069 = vmatpush.xpose.msra.mxu0 0.0
    %3070 = vmatpush.xpose.msra.mxu0 0.0
    %3071 = vmatpush.xpose.msra.mxu0 0.0
    %3072 = vmatpush.xpose.msra.mxu0 0.0
    %3073 = vmatpush.xpose.msra.mxu0 0.0
    %3074 = vmatpush.xpose.msra.mxu0 0.0
    %3075 = vmatpush.xpose.msra.mxu0 0.0
    %3076 = vmatpush.xpose.msra.mxu0 0.0
    %3077 = vmatpush.xpose.msra.mxu0 0.0
    %3078 = vmatpush.xpose.msra.mxu0 0.0
    %3079 = vmatpush.xpose.msra.mxu0 %v3062
    %3080 = vmatmul.f32.gmra.mxu0 %v3060
    %v3081 = vpop.f32.mrf.mxu0
    %v3082 = vadd.f32 0.0, %v3081
    %3083 = vdwg.mxu0
    %v3084 = vmul.f32 %v3054, 0.35355338
    %v3085 = vmul.f32 %v3082, 0.35355338
    %v3086 = vadd.f32 %v3084, %v154
    %v3087 = vadd.f32 %v3085, %v155
    %v3088 = vsel %vm299, %v3086, -inf
    %3089 = vmax.xlane.f32.xlu0 %v3088
    %v3090 = vpop.xlane.xlu0 %3089
    %v3091 = vsel %vm299, %v3087, -inf
    %3092 = vmax.xlane.f32.xlu0 %v3091
    %v3093 = vpop.xlane.xlu0 %3092
    %v3094 = vsub.f32 %v3086, %v3090
    %v3095 = vsub.f32 %v3087, %v3093
    %v3096 = vmul.f32 %v3094, 1.442695
    %v3097 = vpow.pop %v3096
    %v3098 = vmul.f32 %v3095, 1.442695
    %v3099 = vpow.pop %v3098
    %v3100 = vsel %vm299, %v3097, 0.0
    %3101 = vadd.xlane.f32.xlu0 %v3100
    %v3102 = vpop.xlane.xlu0 %3101
    %v3103 = vsel %vm299, %v3099, 0.0
    %3104 = vadd.xlane.f32.xlu0 %v3103
    %v3105 = vpop.xlane.xlu0 %3104
    %v3106 = vrcp.pop %v3102
    %v3107 = vrcp.pop %v3105
    %v3108 = vmul.f32 %v3097, %v3106
    %v3109 = vmul.f32 %v3099, %v3107
    %3110 = vrot.lane.b32.xlu0 %v2888, 88
    %v3111 = vpop.permute.xlu0 %3110
    %v3114 = vsel %vm299, %v3108, 0
    %3116 = vmatpush.msra.mxu0 0.0
    %3117 = vmatpush.msra.mxu0 0.0
    %3118 = vmatpush.msra.mxu0 0.0
    %3119 = vmatpush.msra.mxu0 0.0
    %3120 = vmatpush.msra.mxu0 0.0
    %3121 = vmatpush.msra.mxu0 0.0
    %3122 = vmatpush.msra.mxu0 0.0
    %3123 = vmatpush.msra.mxu0 0.0
    %3124 = vmatpush.msra.mxu0 0.0
    %3125 = vmatpush.msra.mxu0 0.0
    %3126 = vmatpush.msra.mxu0 0.0
    %3127 = vmatpush.msra.mxu0 0.0
    %3128 = vmatpush.msra.mxu0 0.0
    %3129 = vmatpush.msra.mxu0 0.0
    %3130 = vmatpush.msra.mxu0 0.0
    %3131 = vmatpush.msra.mxu0 %v3111
    %3132 = vmatmul.f32.gmra.mxu0 %v3114
    %v3133 = vpop.f32.mrf.mxu0
    %v3134 = vadd.f32 0.0, %v3133
    %3135 = vdwg.mxu0
    %3136 = vrot.lane.b32.xlu0 %v2891, 88
    %v3137 = vpop.permute.xlu0 %3136
    %v3140 = vsel %vm299, %v3109, 0
    %3142 = vmatpush.msra.mxu0 0.0
    %3143 = vmatpush.msra.mxu0 0.0
    %3144 = vmatpush.msra.mxu0 0.0
    %3145 = vmatpush.msra.mxu0 0.0
    %3146 = vmatpush.msra.mxu0 0.0
    %3147 = vmatpush.msra.mxu0 0.0
    %3148 = vmatpush.msra.mxu0 0.0
    %3149 = vmatpush.msra.mxu0 0.0
    %3150 = vmatpush.msra.mxu0 0.0
    %3151 = vmatpush.msra.mxu0 0.0
    %3152 = vmatpush.msra.mxu0 0.0
    %3153 = vmatpush.msra.mxu0 0.0
    %3154 = vmatpush.msra.mxu0 0.0
    %3155 = vmatpush.msra.mxu0 0.0
    %3156 = vmatpush.msra.mxu0 0.0
    %3157 = vmatpush.msra.mxu0 %v3137
    %3158 = vmatmul.f32.gmra.mxu0 %v3140
    %v3159 = vpop.f32.mrf.mxu0
    %v3160 = vadd.f32 0.0, %v3159
    %3161 = vdwg.mxu0
    %v3163 = vsel %vm299, %v3134, 0
    %v3166 = vsel %vm299, %v3160, 0
    %3168 = vmatpush.msra.mxu0 0.0
    %3169 = vmatpush.msra.mxu0 0.0
    %3170 = vmatpush.msra.mxu0 0.0
    %3171 = vmatpush.msra.mxu0 0.0
    %3172 = vmatpush.msra.mxu0 0.0
    %3173 = vmatpush.msra.mxu0 0.0
    %3174 = vmatpush.msra.mxu0 0.0
    %3175 = vmatpush.msra.mxu0 0.0
    %3176 = vmatpush.msra.mxu0 0.0
    %3177 = vmatpush.msra.mxu0 0.0
    %3178 = vmatpush.msra.mxu0 0.0
    %3179 = vmatpush.msra.mxu0 0.0
    %3180 = vmatpush.msra.mxu0 0.0
    %3181 = vmatpush.msra.mxu0 0.0
    %3182 = vmatpush.msra.mxu0 0.0
    %3183 = vmatpush.msra.mxu0 %v2895
    %3184 = vmatmul.f32.gmra.mxu0 %v3163
    %v3185 = vpop.f32.mrf.mxu0
    %v3186 = vadd.f32 0.0, %v3185
    %3187 = vmatmul.f32.gmra.mxu0 %v3166
    %v3188 = vpop.f32.mrf.mxu0
    %v3189 = vadd.f32 0.0, %v3188
    %3190 = vdwg.mxu0
    %v3192 = vsel %vm299, %v3000, 0
    %v3195 = vsel %vm299, %v3026, 0
    %3197 = vmatpush.msra.mxu0 0.0
    %3198 = vmatpush.msra.mxu0 0.0
    %3199 = vmatpush.msra.mxu0 0.0
    %3200 = vmatpush.msra.mxu0 0.0
    %3201 = vmatpush.msra.mxu0 0.0
    %3202 = vmatpush.msra.mxu0 0.0
    %3203 = vmatpush.msra.mxu0 0.0
    %3204 = vmatpush.msra.mxu0 0.0
    %3205 = vmatpush.msra.mxu0 0.0
    %3206 = vmatpush.msra.mxu0 0.0
    %3207 = vmatpush.msra.mxu0 0.0
    %3208 = vmatpush.msra.mxu0 0.0
    %3209 = vmatpush.msra.mxu0 0.0
    %3210 = vmatpush.msra.mxu0 0.0
    %3211 = vmatpush.msra.mxu0 0.0
    %3212 = vmatpush.msra.mxu0 %v2894
    %3213 = vmatmul.f32.gmra.mxu0 %v3192
    %v3214 = vpop.f32.mrf.mxu0
    %v3215 = vadd.f32 %v3186, %v3214
    %3216 = vmatmul.f32.gmra.mxu0 %v3195
    %v3217 = vpop.f32.mrf.mxu0
    %v3218 = vadd.f32 %v3189, %v3217
    %3219 = vdwg.mxu0
    %3220 = vrot.lane.b32.xlu0 %v2855, 112
    %v3221 = vpop.permute.xlu0 %3220
    %3222 = vrot.lane.b32.xlu0 %v2888, 112
    %v3223 = vpop.permute.xlu0 %3222
    %v3224 = vsel %vm299, %v3221, 0
    %v3226 = vsel %vm299, %v3223, 0
    %3228 = vmatpush.xpose.msra.mxu0 0.0
    %3229 = vmatpush.xpose.msra.mxu0 0.0
    %3230 = vmatpush.xpose.msra.mxu0 0.0
    %3231 = vmatpush.xpose.msra.mxu0 0.0
    %3232 = vmatpush.xpose.msra.mxu0 0.0
    %3233 = vmatpush.xpose.msra.mxu0 0.0
    %3234 = vmatpush.xpose.msra.mxu0 0.0
    %3235 = vmatpush.xpose.msra.mxu0 0.0
    %3236 = vmatpush.xpose.msra.mxu0 0.0
    %3237 = vmatpush.xpose.msra.mxu0 0.0
    %3238 = vmatpush.xpose.msra.mxu0 0.0
    %3239 = vmatpush.xpose.msra.mxu0 0.0
    %3240 = vmatpush.xpose.msra.mxu0 0.0
    %3241 = vmatpush.xpose.msra.mxu0 0.0
    %3242 = vmatpush.xpose.msra.mxu0 0.0
    %3243 = vmatpush.xpose.msra.mxu0 %v3226
    %3244 = vmatmul.f32.gmra.mxu0 %v3224
    %v3245 = vpop.f32.mrf.mxu0
    %v3246 = vadd.f32 0.0, %v3245
    %3247 = vdwg.mxu0
    %3248 = vrot.lane.b32.xlu0 %v2858, 112
    %v3249 = vpop.permute.xlu0 %3248
    %3250 = vrot.lane.b32.xlu0 %v2891, 112
    %v3251 = vpop.permute.xlu0 %3250
    %v3252 = vsel %vm299, %v3249, 0
    %v3254 = vsel %vm299, %v3251, 0
    %3256 = vmatpush.xpose.msra.mxu0 0.0
    %3257 = vmatpush.xpose.msra.mxu0 0.0
    %3258 = vmatpush.xpose.msra.mxu0 0.0
    %3259 = vmatpush.xpose.msra.mxu0 0.0
    %3260 = vmatpush.xpose.msra.mxu0 0.0
    %3261 = vmatpush.xpose.msra.mxu0 0.0
    %3262 = vmatpush.xpose.msra.mxu0 0.0
    %3263 = vmatpush.xpose.msra.mxu0 0.0
    %3264 = vmatpush.xpose.msra.mxu0 0.0
    %3265 = vmatpush.xpose.msra.mxu0 0.0
    %3266 = vmatpush.xpose.msra.mxu0 0.0
    %3267 = vmatpush.xpose.msra.mxu0 0.0
    %3268 = vmatpush.xpose.msra.mxu0 0.0
    %3269 = vmatpush.xpose.msra.mxu0 0.0
    %3270 = vmatpush.xpose.msra.mxu0 0.0
    %3271 = vmatpush.xpose.msra.mxu0 %v3254
    %3272 = vmatmul.f32.gmra.mxu0 %v3252
    %v3273 = vpop.f32.mrf.mxu0
    %v3274 = vadd.f32 0.0, %v3273
    %3275 = vdwg.mxu0
    %v3276 = vmul.f32 %v3246, 0.35355338
    %v3277 = vmul.f32 %v3274, 0.35355338
    %v3278 = vadd.f32 %v3276, %v154
    %v3279 = vadd.f32 %v3277, %v155
    %v3280 = vsel %vm299, %v3278, -inf
    %3281 = vmax.xlane.f32.xlu0 %v3280
    %v3282 = vpop.xlane.xlu0 %3281
    %v3283 = vsel %vm299, %v3279, -inf
    %3284 = vmax.xlane.f32.xlu0 %v3283
    %v3285 = vpop.xlane.xlu0 %3284
    %v3286 = vsub.f32 %v3278, %v3282
    %v3287 = vsub.f32 %v3279, %v3285
    %v3288 = vmul.f32 %v3286, 1.442695
    %v3289 = vpow.pop %v3288
    %v3290 = vmul.f32 %v3287, 1.442695
    %v3291 = vpow.pop %v3290
    %v3292 = vsel %vm299, %v3289, 0.0
    %3293 = vadd.xlane.f32.xlu0 %v3292
    %v3294 = vpop.xlane.xlu0 %3293
    %v3295 = vsel %vm299, %v3291, 0.0
    %3296 = vadd.xlane.f32.xlu0 %v3295
    %v3297 = vpop.xlane.xlu0 %3296
    %v3298 = vrcp.pop %v3294
    %v3299 = vrcp.pop %v3297
    %v3300 = vmul.f32 %v3289, %v3298
    %v3301 = vmul.f32 %v3291, %v3299
    %3302 = vrot.lane.b32.xlu0 %v2888, 80
    %v3303 = vpop.permute.xlu0 %3302
    %v3306 = vsel %vm299, %v3300, 0
    %3308 = vmatpush.msra.mxu0 0.0
    %3309 = vmatpush.msra.mxu0 0.0
    %3310 = vmatpush.msra.mxu0 0.0
    %3311 = vmatpush.msra.mxu0 0.0
    %3312 = vmatpush.msra.mxu0 0.0
    %3313 = vmatpush.msra.mxu0 0.0
    %3314 = vmatpush.msra.mxu0 0.0
    %3315 = vmatpush.msra.mxu0 0.0
    %3316 = vmatpush.msra.mxu0 0.0
    %3317 = vmatpush.msra.mxu0 0.0
    %3318 = vmatpush.msra.mxu0 0.0
    %3319 = vmatpush.msra.mxu0 0.0
    %3320 = vmatpush.msra.mxu0 0.0
    %3321 = vmatpush.msra.mxu0 0.0
    %3322 = vmatpush.msra.mxu0 0.0
    %3323 = vmatpush.msra.mxu0 %v3303
    %3324 = vmatmul.f32.gmra.mxu0 %v3306
    %v3325 = vpop.f32.mrf.mxu0
    %v3326 = vadd.f32 0.0, %v3325
    %3327 = vdwg.mxu0
    %3328 = vrot.lane.b32.xlu0 %v2891, 80
    %v3329 = vpop.permute.xlu0 %3328
    %v3332 = vsel %vm299, %v3301, 0
    %3334 = vmatpush.msra.mxu0 0.0
    %3335 = vmatpush.msra.mxu0 0.0
    %3336 = vmatpush.msra.mxu0 0.0
    %3337 = vmatpush.msra.mxu0 0.0
    %3338 = vmatpush.msra.mxu0 0.0
    %3339 = vmatpush.msra.mxu0 0.0
    %3340 = vmatpush.msra.mxu0 0.0
    %3341 = vmatpush.msra.mxu0 0.0
    %3342 = vmatpush.msra.mxu0 0.0
    %3343 = vmatpush.msra.mxu0 0.0
    %3344 = vmatpush.msra.mxu0 0.0
    %3345 = vmatpush.msra.mxu0 0.0
    %3346 = vmatpush.msra.mxu0 0.0
    %3347 = vmatpush.msra.mxu0 0.0
    %3348 = vmatpush.msra.mxu0 0.0
    %3349 = vmatpush.msra.mxu0 %v3329
    %3350 = vmatmul.f32.gmra.mxu0 %v3332
    %v3351 = vpop.f32.mrf.mxu0
    %v3352 = vadd.f32 0.0, %v3351
    %3353 = vdwg.mxu0
    %v3355 = vsel %vm299, %v3326, 0
    %v3358 = vsel %vm299, %v3352, 0
    %3360 = vmatpush.msra.mxu0 0.0
    %3361 = vmatpush.msra.mxu0 0.0
    %3362 = vmatpush.msra.mxu0 0.0
    %3363 = vmatpush.msra.mxu0 0.0
    %3364 = vmatpush.msra.mxu0 0.0
    %3365 = vmatpush.msra.mxu0 0.0
    %3366 = vmatpush.msra.mxu0 0.0
    %3367 = vmatpush.msra.mxu0 0.0
    %3368 = vmatpush.msra.mxu0 0.0
    %3369 = vmatpush.msra.mxu0 0.0
    %3370 = vmatpush.msra.mxu0 0.0
    %3371 = vmatpush.msra.mxu0 0.0
    %3372 = vmatpush.msra.mxu0 0.0
    %3373 = vmatpush.msra.mxu0 0.0
    %3374 = vmatpush.msra.mxu0 0.0
    %3375 = vmatpush.msra.mxu0 %v2896
    %3376 = vmatmul.f32.gmra.mxu0 %v3355
    %v3377 = vpop.f32.mrf.mxu0
    %v3378 = vadd.f32 0.0, %v3377
    %3379 = vmatmul.f32.gmra.mxu0 %v3358
    %v3380 = vpop.f32.mrf.mxu0
    %v3381 = vadd.f32 0.0, %v3380
    %3382 = vdwg.mxu0
    %v3383 = vadd.f32 %v3215, %v3378
    %v3384 = vadd.f32 %v3218, %v3381
    %3385 = vrot.lane.b32.xlu0 %v2855, 104
    %v3386 = vpop.permute.xlu0 %3385
    %3387 = vrot.lane.b32.xlu0 %v2888, 104
    %v3388 = vpop.permute.xlu0 %3387
    %v3389 = vsel %vm299, %v3386, 0
    %v3391 = vsel %vm299, %v3388, 0
    %3393 = vmatpush.xpose.msra.mxu0 0.0
    %3394 = vmatpush.xpose.msra.mxu0 0.0
    %3395 = vmatpush.xpose.msra.mxu0 0.0
    %3396 = vmatpush.xpose.msra.mxu0 0.0
    %3397 = vmatpush.xpose.msra.mxu0 0.0
    %3398 = vmatpush.xpose.msra.mxu0 0.0
    %3399 = vmatpush.xpose.msra.mxu0 0.0
    %3400 = vmatpush.xpose.msra.mxu0 0.0
    %3401 = vmatpush.xpose.msra.mxu0 0.0
    %3402 = vmatpush.xpose.msra.mxu0 0.0
    %3403 = vmatpush.xpose.msra.mxu0 0.0
    %3404 = vmatpush.xpose.msra.mxu0 0.0
    %3405 = vmatpush.xpose.msra.mxu0 0.0
    %3406 = vmatpush.xpose.msra.mxu0 0.0
    %3407 = vmatpush.xpose.msra.mxu0 0.0
    %3408 = vmatpush.xpose.msra.mxu0 %v3391
    %3409 = vmatmul.f32.gmra.mxu0 %v3389
    %v3410 = vpop.f32.mrf.mxu0
    %v3411 = vadd.f32 0.0, %v3410
    %3412 = vdwg.mxu0
    %3413 = vrot.lane.b32.xlu0 %v2858, 104
    %v3414 = vpop.permute.xlu0 %3413
    %3415 = vrot.lane.b32.xlu0 %v2891, 104
    %v3416 = vpop.permute.xlu0 %3415
    %v3417 = vsel %vm299, %v3414, 0
    %v3419 = vsel %vm299, %v3416, 0
    %3421 = vmatpush.xpose.msra.mxu0 0.0
    %3422 = vmatpush.xpose.msra.mxu0 0.0
    %3423 = vmatpush.xpose.msra.mxu0 0.0
    %3424 = vmatpush.xpose.msra.mxu0 0.0
    %3425 = vmatpush.xpose.msra.mxu0 0.0
    %3426 = vmatpush.xpose.msra.mxu0 0.0
    %3427 = vmatpush.xpose.msra.mxu0 0.0
    %3428 = vmatpush.xpose.msra.mxu0 0.0
    %3429 = vmatpush.xpose.msra.mxu0 0.0
    %3430 = vmatpush.xpose.msra.mxu0 0.0
    %3431 = vmatpush.xpose.msra.mxu0 0.0
    %3432 = vmatpush.xpose.msra.mxu0 0.0
    %3433 = vmatpush.xpose.msra.mxu0 0.0
    %3434 = vmatpush.xpose.msra.mxu0 0.0
    %3435 = vmatpush.xpose.msra.mxu0 0.0
    %3436 = vmatpush.xpose.msra.mxu0 %v3419
    %3437 = vmatmul.f32.gmra.mxu0 %v3417
    %v3438 = vpop.f32.mrf.mxu0
    %v3439 = vadd.f32 0.0, %v3438
    %3440 = vdwg.mxu0
    %v3441 = vmul.f32 %v3411, 0.35355338
    %v3442 = vmul.f32 %v3439, 0.35355338
    %v3443 = vadd.f32 %v3441, %v154
    %v3444 = vadd.f32 %v3442, %v155
    %v3445 = vsel %vm299, %v3443, -inf
    %3446 = vmax.xlane.f32.xlu0 %v3445
    %v3447 = vpop.xlane.xlu0 %3446
    %v3448 = vsel %vm299, %v3444, -inf
    %3449 = vmax.xlane.f32.xlu0 %v3448
    %v3450 = vpop.xlane.xlu0 %3449
    %v3451 = vsub.f32 %v3443, %v3447
    %v3452 = vsub.f32 %v3444, %v3450
    %v3453 = vmul.f32 %v3451, 1.442695
    %v3454 = vpow.pop %v3453
    %v3455 = vmul.f32 %v3452, 1.442695
    %v3456 = vpow.pop %v3455
    %v3457 = vsel %vm299, %v3454, 0.0
    %3458 = vadd.xlane.f32.xlu0 %v3457
    %v3459 = vpop.xlane.xlu0 %3458
    %v3460 = vsel %vm299, %v3456, 0.0
    %3461 = vadd.xlane.f32.xlu0 %v3460
    %v3462 = vpop.xlane.xlu0 %3461
    %v3463 = vrcp.pop %v3459
    %v3464 = vrcp.pop %v3462
    %v3465 = vmul.f32 %v3454, %v3463
    %v3466 = vmul.f32 %v3456, %v3464
    %3467 = vrot.lane.b32.xlu0 %v2888, 72
    %v3468 = vpop.permute.xlu0 %3467
    %v3471 = vsel %vm299, %v3465, 0
    %3473 = vmatpush.msra.mxu0 0.0
    %3474 = vmatpush.msra.mxu0 0.0
    %3475 = vmatpush.msra.mxu0 0.0
    %3476 = vmatpush.msra.mxu0 0.0
    %3477 = vmatpush.msra.mxu0 0.0
    %3478 = vmatpush.msra.mxu0 0.0
    %3479 = vmatpush.msra.mxu0 0.0
    %3480 = vmatpush.msra.mxu0 0.0
    %3481 = vmatpush.msra.mxu0 0.0
    %3482 = vmatpush.msra.mxu0 0.0
    %3483 = vmatpush.msra.mxu0 0.0
    %3484 = vmatpush.msra.mxu0 0.0
    %3485 = vmatpush.msra.mxu0 0.0
    %3486 = vmatpush.msra.mxu0 0.0
    %3487 = vmatpush.msra.mxu0 0.0
    %3488 = vmatpush.msra.mxu0 %v3468
    %3489 = vmatmul.f32.gmra.mxu0 %v3471
    %v3490 = vpop.f32.mrf.mxu0
    %v3491 = vadd.f32 0.0, %v3490
    %3492 = vdwg.mxu0
    %3493 = vrot.lane.b32.xlu0 %v2891, 72
    %v3494 = vpop.permute.xlu0 %3493
    %v3497 = vsel %vm299, %v3466, 0
    %3499 = vmatpush.msra.mxu0 0.0
    %3500 = vmatpush.msra.mxu0 0.0
    %3501 = vmatpush.msra.mxu0 0.0
    %3502 = vmatpush.msra.mxu0 0.0
    %3503 = vmatpush.msra.mxu0 0.0
    %3504 = vmatpush.msra.mxu0 0.0
    %3505 = vmatpush.msra.mxu0 0.0
    %3506 = vmatpush.msra.mxu0 0.0
    %3507 = vmatpush.msra.mxu0 0.0
    %3508 = vmatpush.msra.mxu0 0.0
    %3509 = vmatpush.msra.mxu0 0.0
    %3510 = vmatpush.msra.mxu0 0.0
    %3511 = vmatpush.msra.mxu0 0.0
    %3512 = vmatpush.msra.mxu0 0.0
    %3513 = vmatpush.msra.mxu0 0.0
    %3514 = vmatpush.msra.mxu0 %v3494
    %3515 = vmatmul.f32.gmra.mxu0 %v3497
    %v3516 = vpop.f32.mrf.mxu0
    %v3517 = vadd.f32 0.0, %v3516
    %3518 = vdwg.mxu0
    %v3520 = vsel %vm299, %v3491, 0
    %v3523 = vsel %vm299, %v3517, 0
    %3525 = vmatpush.msra.mxu0 0.0
    %3526 = vmatpush.msra.mxu0 0.0
    %3527 = vmatpush.msra.mxu0 0.0
    %3528 = vmatpush.msra.mxu0 0.0
    %3529 = vmatpush.msra.mxu0 0.0
    %3530 = vmatpush.msra.mxu0 0.0
    %3531 = vmatpush.msra.mxu0 0.0
    %3532 = vmatpush.msra.mxu0 0.0
    %3533 = vmatpush.msra.mxu0 0.0
    %3534 = vmatpush.msra.mxu0 0.0
    %3535 = vmatpush.msra.mxu0 0.0
    %3536 = vmatpush.msra.mxu0 0.0
    %3537 = vmatpush.msra.mxu0 0.0
    %3538 = vmatpush.msra.mxu0 0.0
    %3539 = vmatpush.msra.mxu0 0.0
    %3540 = vmatpush.msra.mxu0 %v2897
    %3541 = vmatmul.f32.gmra.mxu0 %v3520
    %v3542 = vpop.f32.mrf.mxu0
    %v3543 = vadd.f32 0.0, %v3542
    %3544 = vmatmul.f32.gmra.mxu0 %v3523
    %v3545 = vpop.f32.mrf.mxu0
    %v3546 = vadd.f32 0.0, %v3545
    %3547 = vdwg.mxu0
    %v3548 = vadd.f32 %v3383, %v3543
    %v3549 = vadd.f32 %v3384, %v3546
    %s3550 = scalar_lea.vmem %s13, 1
    %v3551 = vld [vmem:[%s3550] sm:$0x1]
    %v3553 = vperm.slane %v3551, 0
    %v3555 = vadd.f32 %v3548, %v3553
    %v3556 = vadd.f32 %v3549, %v3553
    %v3557 = vadd.f32 %v2737, %v3555
    %v3558 = vadd.f32 %v2738, %v3556
    %v3559 = vsel %vm158, %v3557, 0.0
    %3560 = vadd.xlane.f32.xlu0 %v3559
    %v3561 = vpop.xlane.xlu0 %3560
    %v3562 = vsel %vm158, %v3558, 0.0
    %3563 = vadd.xlane.f32.xlu0 %v3562
    %v3564 = vpop.xlane.xlu0 %3563
    %v3565 = vmul.f32 %v3561, %v171
    %v3566 = vmul.f32 %v3564, %v171
    %v3567 = vsub.f32 %v3557, %v3565
    %v3568 = vsub.f32 %v3558, %v3566
    %v3569 = vmul.f32 %v3567, %v3567
    %v3570 = vmul.f32 %v3568, %v3568
    %v3571 = vsel %vm158, %v3569, 0.0
    %3572 = vadd.xlane.f32.xlu0 %v3571
    %v3573 = vpop.xlane.xlu0 %3572
    %v3574 = vsel %vm158, %v3570, 0.0
    %3575 = vadd.xlane.f32.xlu0 %v3574
    %v3576 = vpop.xlane.xlu0 %3575
    %v3577 = vmul.f32 %v3573, %v190
    %v3578 = vmul.f32 %v3576, %v190
    %v3579 = vperm.slane %v1947, 2
    %v3580 = vmul.f32 %v3579, %v3567
    %v3581 = vmul.f32 %v3579, %v3568
    %v3582 = vrsqrt.pop %v3577
    %v3583 = vmul.f32 %v3582, %v3577
    %v3584 = vmul.f32 %v3583, %v3582
    %v3585 = vmul.f32 0.5, %v3584
    %v3586 = vsub.f32 1.5, %v3585
    %v3587 = vmul.f32 %v3582, %v3586
    %v3588 = vmul.f32 %v3577, %v3587
    %vm3589 = vcmp.eq.f32.partialorder %v3577, inf
    %v3590 = vsel %vm3589, %v3577, %v3588
    %vm3591 = vcmp.eq.f32.partialorder %v3577, 0.0
    %v3592 = vand.u32 %v3577, 2147483648
    %v3593 = vsel %vm3591, %v3592, %v3590
    %v3594 = vrsqrt.pop %v3578
    %v3595 = vmul.f32 %v3594, %v3578
    %v3596 = vmul.f32 %v3595, %v3594
    %v3597 = vmul.f32 0.5, %v3596
    %v3598 = vsub.f32 1.5, %v3597
    %v3599 = vmul.f32 %v3594, %v3598
    %v3600 = vmul.f32 %v3578, %v3599
    %vm3601 = vcmp.eq.f32.partialorder %v3578, inf
    %v3602 = vsel %vm3601, %v3578, %v3600
    %vm3603 = vcmp.eq.f32.partialorder %v3578, 0.0
    %v3604 = vand.u32 %v3578, 2147483648
    %v3605 = vsel %vm3603, %v3604, %v3602
    %v3606 = vadd.f32 %v3593, 1e-06
    %v3607 = vadd.f32 %v3605, 1e-06
    %v3608 = vrcp.pop %v3606
    %v3609 = vmul.f32 %v3606, %v3608
    %v3610 = vsub.f32 1.0, %v3609
    %v3611 = vmul.f32 %v3608, %v3610
    %v3612 = vadd.f32 %v3608, %v3611
    %vm3613 = vweird.f32 %v3606
    %vm3614 = vweird.f32 %v3608
    %vm3615 = vmor %vm3613, %vm3614
    %v3616 = vsel %vm3615, %v3608, %v3612
    %v3617 = vand.u32 2147483647, %v3606
    %vm3618 = vcmp.eq.f32.partialorder %v3617, 8.507059e+37
    %v3619 = vand.u32 %v3606, 2147483648
    %v3620 = vor.u32 1.1754944e-38, %v3619
    %v3621 = vsel %vm3618, %v3620, %v3616
    %v3622 = vmul.f32 %v3580, %v3621
    %v3623 = vrcp.pop %v3607
    %v3624 = vmul.f32 %v3607, %v3623
    %v3625 = vsub.f32 1.0, %v3624
    %v3626 = vmul.f32 %v3623, %v3625
    %v3627 = vadd.f32 %v3623, %v3626
    %vm3628 = vweird.f32 %v3607
    %vm3629 = vweird.f32 %v3623
    %vm3630 = vmor %vm3628, %vm3629
    %v3631 = vsel %vm3630, %v3623, %v3627
    %v3632 = vand.u32 2147483647, %v3607
    %vm3633 = vcmp.eq.f32.partialorder %v3632, 8.507059e+37
    %v3634 = vand.u32 %v3607, 2147483648
    %v3635 = vor.u32 1.1754944e-38, %v3634
    %v3636 = vsel %vm3633, %v3635, %v3631
    %v3637 = vmul.f32 %v3581, %v3636
    %v3638 = vperm.slane %v1949, 2
    %v3639 = vadd.f32 %v3622, %v3638
    %v3640 = vadd.f32 %v3637, %v3638
    %s3641 = scalar_lea.vmem [#allocation7], 32
    %v3642 = vld [vmem:[%s3641] sm:$0xff]
    %v3643 = vld [vmem:[%s3641 + $0x8] sm:$0xff]
    %v3644 = vld [vmem:[%s3641 + $0x10] sm:$0xff]
    %v3645 = vld [vmem:[%s3641 + $0x18] sm:$0xff]
    %s3646 = scalar_lea.vmem %s15, 1
    %v3647 = vld [vmem:[%s3646] sm:$0x1]
    %v3649 = vperm.slane %v3647, 0
    %v3652 = vsel %vm158, %v3639, 0
    %v3655 = vsel %vm158, %v3640, 0
    %3657 = vmatpush.msra.mxu0 0.0
    %3658 = vmatpush.msra.mxu0 0.0
    %3659 = vmatpush.msra.mxu0 0.0
    %3660 = vmatpush.msra.mxu0 0.0
    %3661 = vmatpush.msra.mxu0 0.0
    %3662 = vmatpush.msra.mxu0 0.0
    %3663 = vmatpush.msra.mxu0 0.0
    %3664 = vmatpush.msra.mxu0 0.0
    %3665 = vmatpush.msra.mxu0 0.0
    %3666 = vmatpush.msra.mxu0 0.0
    %3667 = vmatpush.msra.mxu0 0.0
    %3668 = vmatpush.msra.mxu0 0.0
    %3669 = vmatpush.msra.mxu0 %v3645
    %3670 = vmatpush.msra.mxu0 %v3644
    %3671 = vmatpush.msra.mxu0 %v3643
    %3672 = vmatpush.msra.mxu0 %v3642
    %3673 = vmatmul.f32.gmra.mxu0 %v3652
    %v3674 = vpop.f32.mrf.mxu0
    %v3675 = vadd.f32 %v3649, %v3674
    %3676 = vmatmul.f32.gmra.mxu0 %v3655
    %v3677 = vpop.f32.mrf.mxu0
    %v3678 = vadd.f32 %v3649, %v3677
    %3679 = vdwg.mxu0
    %v3680 = vmax.f32 %v3675, 0.0
    %v3681 = vmax.f32 %v3678, 0.0
    %s3682 = scalar_lea.vmem %s16, 64
    %v3683 = vld [vmem:[%s3682] sm:$0xff]
    %v3684 = vld [vmem:[%s3682 + $0x8] sm:$0xff]
    %v3685 = vld [vmem:[%s3682 + $0x10] sm:$0xff]
    %v3686 = vld [vmem:[%s3682 + $0x18] sm:$0xff]
    %v3687 = vld [vmem:[%s3682 + $0x20] sm:$0xff]
    %v3688 = vld [vmem:[%s3682 + $0x28] sm:$0xff]
    %v3689 = vld [vmem:[%s3682 + $0x30] sm:$0xff]
    %v3690 = vld [vmem:[%s3682 + $0x38] sm:$0xff]
    %v3692 = vsel %vm1908, %v3680, 0
    %v3695 = vsel %vm1908, %v3681, 0
    %3697 = vmatpush.msra.mxu0 0.0
    %3698 = vmatpush.msra.mxu0 0.0
    %3699 = vmatpush.msra.mxu0 0.0
    %3700 = vmatpush.msra.mxu0 0.0
    %3701 = vmatpush.msra.mxu0 0.0
    %3702 = vmatpush.msra.mxu0 0.0
    %3703 = vmatpush.msra.mxu0 0.0
    %3704 = vmatpush.msra.mxu0 0.0
    %3705 = vmatpush.msra.mxu0 %v3690
    %3706 = vmatpush.msra.mxu0 %v3689
    %3707 = vmatpush.msra.mxu0 %v3688
    %3708 = vmatpush.msra.mxu0 %v3687
    %3709 = vmatpush.msra.mxu0 %v3686
    %3710 = vmatpush.msra.mxu0 %v3685
    %3711 = vmatpush.msra.mxu0 %v3684
    %3712 = vmatpush.msra.mxu0 %v3683
    %3713 = vmatmul.f32.gmra.mxu0 %v3692
    %v3714 = vpop.f32.mrf.mxu0
    %v3715 = vadd.f32 0.0, %v3714
    %3716 = vmatmul.f32.gmra.mxu0 %v3695
    %v3717 = vpop.f32.mrf.mxu0
    %v3718 = vadd.f32 0.0, %v3717
    %3719 = vdwg.mxu0
    %v3720 = vadd.f32 %v3557, %v3715
    %v3721 = vadd.f32 %v3558, %v3718
    %s3722 = scalar_lea.vmem [#allocation8], 1
    %v3723 = vld [vmem:[%s3722] sm:$0x1]
    %v3725 = vperm.slane %v3723, 0
    %v3727 = vadd.f32 %v3720, %v3725
    %v3728 = vadd.f32 %v3721, %v3725
    %v3729 = vld [vmem:[%s20] sm:$0x1]
    %v3730 = vld [vmem:[#allocation10] sm:$0x1]
    %v3731 = vsel %vm158, %v3727, 0.0
    %3732 = vadd.xlane.f32.xlu0 %v3731
    %v3733 = vpop.xlane.xlu0 %3732
    %v3734 = vsel %vm158, %v3728, 0.0
    %3735 = vadd.xlane.f32.xlu0 %v3734
    %v3736 = vpop.xlane.xlu0 %3735
    %v3737 = vmul.f32 %v3733, %v171
    %v3738 = vmul.f32 %v3736, %v171
    %v3739 = vsub.f32 %v3727, %v3737
    %v3740 = vsub.f32 %v3728, %v3738
    %v3741 = vmul.f32 %v3739, %v3739
    %v3742 = vmul.f32 %v3740, %v3740
    %v3743 = vsel %vm158, %v3741, 0.0
    %3744 = vadd.xlane.f32.xlu0 %v3743
    %v3745 = vpop.xlane.xlu0 %3744
    %v3746 = vsel %vm158, %v3742, 0.0
    %3747 = vadd.xlane.f32.xlu0 %v3746
    %v3748 = vpop.xlane.xlu0 %3747
    %v3749 = vmul.f32 %v3745, %v190
    %v3750 = vmul.f32 %v3748, %v190
    %v3752 = vperm.slane %v3729, 0
    %v3754 = vmul.f32 %v3752, %v3739
    %v3755 = vmul.f32 %v3752, %v3740
    %v3756 = vrsqrt.pop %v3749
    %v3757 = vmul.f32 %v3756, %v3749
    %v3758 = vmul.f32 %v3757, %v3756
    %v3759 = vmul.f32 0.5, %v3758
    %v3760 = vsub.f32 1.5, %v3759
    %v3761 = vmul.f32 %v3756, %v3760
    %v3762 = vmul.f32 %v3749, %v3761
    %vm3763 = vcmp.eq.f32.partialorder %v3749, inf
    %v3764 = vsel %vm3763, %v3749, %v3762
    %vm3765 = vcmp.eq.f32.partialorder %v3749, 0.0
    %v3766 = vand.u32 %v3749, 2147483648
    %v3767 = vsel %vm3765, %v3766, %v3764
    %v3768 = vrsqrt.pop %v3750
    %v3769 = vmul.f32 %v3768, %v3750
    %v3770 = vmul.f32 %v3769, %v3768
    %v3771 = vmul.f32 0.5, %v3770
    %v3772 = vsub.f32 1.5, %v3771
    %v3773 = vmul.f32 %v3768, %v3772
    %v3774 = vmul.f32 %v3750, %v3773
    %vm3775 = vcmp.eq.f32.partialorder %v3750, inf
    %v3776 = vsel %vm3775, %v3750, %v3774
    %vm3777 = vcmp.eq.f32.partialorder %v3750, 0.0
    %v3778 = vand.u32 %v3750, 2147483648
    %v3779 = vsel %vm3777, %v3778, %v3776
    %v3780 = vadd.f32 %v3767, 1e-06
    %v3781 = vadd.f32 %v3779, 1e-06
    %v3782 = vrcp.pop %v3780
    %v3783 = vmul.f32 %v3780, %v3782
    %v3784 = vsub.f32 1.0, %v3783
    %v3785 = vmul.f32 %v3782, %v3784
    %v3786 = vadd.f32 %v3782, %v3785
    %vm3787 = vweird.f32 %v3780
    %vm3788 = vweird.f32 %v3782
    %vm3789 = vmor %vm3787, %vm3788
    %v3790 = vsel %vm3789, %v3782, %v3786
    %v3791 = vand.u32 2147483647, %v3780
    %vm3792 = vcmp.eq.f32.partialorder %v3791, 8.507059e+37
    %v3793 = vand.u32 %v3780, 2147483648
    %v3794 = vor.u32 1.1754944e-38, %v3793
    %v3795 = vsel %vm3792, %v3794, %v3790
    %v3796 = vmul.f32 %v3754, %v3795
    %v3797 = vrcp.pop %v3781
    %v3798 = vmul.f32 %v3781, %v3797
    %v3799 = vsub.f32 1.0, %v3798
    %v3800 = vmul.f32 %v3797, %v3799
    %v3801 = vadd.f32 %v3797, %v3800
    %vm3802 = vweird.f32 %v3781
    %vm3803 = vweird.f32 %v3797
    %vm3804 = vmor %vm3802, %vm3803
    %v3805 = vsel %vm3804, %v3797, %v3801
    %v3806 = vand.u32 2147483647, %v3781
    %vm3807 = vcmp.eq.f32.partialorder %v3806, 8.507059e+37
    %v3808 = vand.u32 %v3781, 2147483648
    %v3809 = vor.u32 1.1754944e-38, %v3808
    %v3810 = vsel %vm3807, %v3809, %v3805
    %v3811 = vmul.f32 %v3755, %v3810
    %v3813 = vperm.slane %v3730, 0
    %v3815 = vadd.f32 %v3796, %v3813
    %v3816 = vadd.f32 %v3811, %v3813
    %3817 = vst.msk [vmem:[#allocation11] sm:$0xff] %vm158, %v3815
    %3818 = vst.msk [vmem:[#allocation11 + $0x8] sm:$0xff] %vm158, %v3816
    // Predicated region
    $region110: #{decoder_forward.1} parent=1 // pred_check
      _
    $region111: #{decoder_forward.1} parent=1 // pred_check_branch
      %3820 = sbr.rel (0) target = $region113
    $region112: #{decoder_forward.1} parent=1 // pred_region
      %3822 = vsyncadd [#allocation4], 0
      %s3823 = sshll.u32 [#allocation11], 4
      %s3824 = int_to_ptr.vmem [resolvable:$true] %s3823
      %s3825 = sshll.u32 %s22, 4
      %s3826 = int_to_ptr.hbm [resolvable:$true] %s3825
      %3831 = dma.vmem_to_hbm [thread:$0]  %s3824, 256, %s3826, [#allocation4], 128, 128, 8
    $region113: #{decoder_forward.1} parent=1 // pred_fallthru
      _
    // Predicated region
    $region114: #{decoder_forward.1} parent=1 // pred_check
      _
    $region115: #{decoder_forward.1} parent=1 // pred_check_branch
      %3833 = sbr.rel (0) target = $region117
    $region116: #{decoder_forward.1} parent=1 // pred_region
      %3835 = dma.done [#allocation4], 256
    $region117: #{decoder_forward.1} parent=1 // pred_fallthru
      _
    %3836 = vsyncpa [#allocation3], 1
    %3837 = vsyncpa [#allocation6], 1
    %3838 = vsyncpa [#allocation9], 1
    %3839 = vsyncpa [#allocation4], 1

</llo_original>
